<compile_context>
chip_gen: v6e
topology: v6e:2x2x1
jax: 0.10.0
libtpu: 0.0.40
codegen_flags: <defaults>
</compile_context>

<pallas_src>
import jax
import jax.numpy as jnp
from jax import lax
from jax.experimental import pallas as pl
from jax.experimental.pallas import tpu as pltpu

SEQ = 28              # timesteps (image rows)
IN = 28               # LSTM input_size (image cols)
IN_PAD = 64           # x lanes padded to 64 so [h | x | 1 | 0] is exactly 128 lanes
HID = 64              # LSTM hidden_size
K_CAT = HID + IN_PAD  # 128: fused recurrence contraction dim (one MXU pass)
BIAS_LANE = HID + IN  # hx lane that is constant 1.0 (drives the bias row of W_cat)
FC1 = 32
NCLS = 10
NCLS_PAD = 128        # lane-dense padded class dim
BN_EPS = 1e-5
B_TILE_MAX = 128      # per-step f32 gates (BT,4H) = 32 vregs; 256 would need
                      # bf16 gate math or a two-half split to avoid spills


def net_kernel(x_ref,      # (SEQ, BT, IN_PAD) bf16; lane IN is 1.0, lanes IN+1.. zero
               w_cat_ref,  # (K_CAT, 4*HID)    bf16; rows [W_hh^T; W_ih^T; b; 0], gates [i,f,o,g]
               w1_ref,     # (HID, FC1)        bf16, eval BN folded in
               b1_ref,     # (1, FC1)          f32,  eval BN folded in
               w2_ref,     # (FC1, NCLS_PAD)   bf16, zero-padded columns
               b2_ref,     # (1, NCLS_PAD)     f32, -1e30 in padded columns
               out_ref,    # (BT, NCLS_PAD)    f32 log-probs (padded)
               hx_ref):    # (BT, K_CAT)       bf16 staging buffer [h | x_t | 1 | 0]
    bt = x_ref.shape[1]
    w_cat = w_cat_ref[...]

    # h0 = 0 (the x / bias lanes are rewritten every step).
    hx_ref[:, :HID] = jnp.zeros((bt, HID), jnp.bfloat16)

    def lstm_step(t, c):
        # Stage [h_{t-1} | x_t | 1 | 0] and run ONE fused K=128 matmul
        # (bias comes out of the matmul via the constant 1.0 lane).
        hx_ref[:, HID:] = x_ref[t]
        gates = jnp.dot(hx_ref[...], w_cat,
                        preferred_element_type=jnp.float32)
        # gate order [i, f, o, g]: one tanh-based sigmoid over a contiguous
        # 3*HID slice (1 EUP op instead of exp + divide), one tanh for g.
        sig = 0.5 * jnp.tanh(0.5 * gates[:, :3 * HID]) + 0.5
        g_g = jnp.tanh(gates[:, 3 * HID:])
        i_g = sig[:, 0 * HID:1 * HID]
        f_g = sig[:, 1 * HID:2 * HID]
        o_g = sig[:, 2 * HID:3 * HID]
        c_new = f_g * c + i_g * g_g
        h_new = o_g * jnp.tanh(c_new)
        hx_ref[:, :HID] = h_new.astype(jnp.bfloat16)
        return c_new

    c0 = jnp.zeros((bt, HID), jnp.float32)
    _ = lax.fori_loop(0, SEQ, lstm_step, c0, unroll=True)

    h_last = hx_ref[:, :HID]                       # bf16, final hidden state

    # ---- Head: BN (eval) folded into fc1; dropout = identity (eval). -------
    z1 = jnp.dot(h_last, w1_ref[...],
                 preferred_element_type=jnp.float32) + b1_ref[...]
    z1 = jnp.maximum(z1, 0.0)
    z2 = jnp.dot(z1.astype(jnp.bfloat16), w2_ref[...],
                 preferred_element_type=jnp.float32) + b2_ref[...]

    # log_softmax over the padded 128-lane class dim (padded logits = -1e30,
    # so exp underflows to 0 and the real 10 classes are exact).
    m = jnp.max(z2, axis=-1, keepdims=True)
    s = z2 - m
    lse = jnp.log(jnp.sum(jnp.exp(s), axis=-1, keepdims=True))
    out_ref[...] = s - lse


def _choose_tile(batch):
    """(padded_batch, batch_tile): tiles are 16-aligned; once the padded batch
    reaches 128 rows there are >= 2 tiles so v7x's two TensorCores both get
    work via the 'parallel' grid axis."""
    b_pad = max(16, ((batch + 15) // 16) * 16)
    if b_pad < 128:
        return b_pad, b_pad
    half = ((b_pad // 2 + 15) // 16) * 16
    b_tile = min(B_TILE_MAX, half)
    n_tiles = max(2, (b_pad + b_tile - 1) // b_tile)
    return n_tiles * b_tile, b_tile


def net_forward(x, kparams):
    """x: (B, 1, 28, 28) float32 (NCHW like the PyTorch module)."""
    x_seq = x.reshape(-1, SEQ, IN).astype(jnp.float32)   # input.reshape(-1,28,28)
    B = x_seq.shape[0]
    b_pad, b_tile = _choose_tile(B)

    x_t = jnp.transpose(x_seq, (1, 0, 2))                 # time-major (SEQ, B, IN)
    x_t = jnp.pad(x_t, ((0, 0), (0, b_pad - B), (0, IN_PAD - IN)))
    x_t = x_t.at[:, :, IN].set(1.0)                        # constant lane -> bias row
    x_t = x_t.astype(jnp.bfloat16)

    n_tiles = b_pad // b_tile
    grid_spec = pltpu.PrefetchScalarGridSpec(
        num_scalar_prefetch=0,
        grid=(n_tiles,),
        in_specs=[
            pl.BlockSpec((SEQ, b_tile, IN_PAD), lambda i: (0, i, 0)),   # x tile
            pl.BlockSpec((K_CAT, 4 * HID), lambda i: (0, 0)),           # weights stay
            pl.BlockSpec((HID, FC1), lambda i: (0, 0)),                 # resident across
            pl.BlockSpec((1, FC1), lambda i: (0, 0)),                   # the batch grid
            pl.BlockSpec((FC1, NCLS_PAD), lambda i: (0, 0)),
            pl.BlockSpec((1, NCLS_PAD), lambda i: (0, 0)),
        ],
        out_specs=pl.BlockSpec((b_tile, NCLS_PAD), lambda i: (i, 0)),
        scratch_shapes=[pltpu.VMEM((b_tile, K_CAT), jnp.bfloat16)],
    )
    out_pad = pl.pallas_call(
        net_kernel,
        out_shape=jax.ShapeDtypeStruct((b_pad, NCLS_PAD), jnp.float32),
        grid_spec=grid_spec,
        compiler_params=pltpu.CompilerParams(
            dimension_semantics=("parallel",)),
    )(x_t, kparams["w_cat"], kparams["w1_T"], kparams["b1"],
      kparams["w2_T"], kparams["b2"])
    return out_pad[:B, :NCLS]


# ----------------------------- parameters ---------------------------------

def init_raw_params(key):
    """Raw parameters in PyTorch layouts (gate order [i, f, g, o])."""
    ks = jax.random.split(key, 12)
    sc = 1.0 / jnp.sqrt(HID)
    sc1 = 1.0 / jnp.sqrt(HID)
    sc2 = 1.0 / jnp.sqrt(FC1)
    return {
        "w_ih": jax.random.uniform(ks[0], (4 * HID, IN), jnp.float32, -sc, sc),
        "w_hh": jax.random.uniform(ks[1], (4 * HID, HID), jnp.float32, -sc, sc),
        "b_ih": jax.random.uniform(ks[2], (4 * HID,), jnp.float32, -sc, sc),
        "b_hh": jax.random.uniform(ks[3], (4 * HID,), jnp.float32, -sc, sc),
        # non-trivial eval BN statistics to exercise the BN->fc1 fold
        "bn_gamma": jax.random.uniform(ks[4], (HID,), jnp.float32, 0.5, 1.5),
        "bn_beta": jax.random.uniform(ks[5], (HID,), jnp.float32, -0.5, 0.5),
        "bn_mean": jax.random.uniform(ks[6], (HID,), jnp.float32, -0.5, 0.5),
        "bn_var": jax.random.uniform(ks[7], (HID,), jnp.float32, 0.5, 1.5),
        "w1": jax.random.uniform(ks[8], (FC1, HID), jnp.float32, -sc1, sc1),
        "b1": jax.random.uniform(ks[9], (FC1,), jnp.float32, -sc1, sc1),
        "w2": jax.random.uniform(ks[10], (NCLS, FC1), jnp.float32, -sc2, sc2),
        "b2": jax.random.uniform(ks[11], (NCLS,), jnp.float32, -sc2, sc2),
    }


def prepare_kernel_params(raw):
    """Permute gates [i,f,g,o]->[i,f,o,g], fuse W_hh/W_ih/bias into one K=128
    recurrence weight, fold eval BN into fc1, pad fc2 to 128 lanes, cast
    matmul operands to bf16 (standalone biases stay f32)."""
    def reorder(a):                       # acts on the 4*HID leading axis
        i, f, g, o = jnp.split(a, 4, axis=0)
        return jnp.concatenate([i, f, o, g], axis=0)

    w_ih = reorder(raw["w_ih"])           # (4H, IN)
    w_hh = reorder(raw["w_hh"])           # (4H, HID)
    b_lstm = reorder(raw["b_ih"] + raw["b_hh"])                   # (4H,)

    # Fused recurrence weight for gates = [h | x_t | 1 | 0] @ W_cat:
    #   rows 0:HID            -> W_hh^T
    #   rows HID:HID+IN       -> W_ih^T
    #   row  HID+IN           -> LSTM bias (hit by the constant 1.0 input lane)
    #   rows HID+IN+1:K_CAT   -> 0
    w_cat = jnp.zeros((K_CAT, 4 * HID), jnp.float32)
    w_cat = w_cat.at[:HID, :].set(w_hh.T)
    w_cat = w_cat.at[HID:HID + IN, :].set(w_ih.T)
    w_cat = w_cat.at[BIAS_LANE, :].set(b_lstm)

    s = raw["bn_gamma"] * lax.rsqrt(raw["bn_var"] + BN_EPS)       # (HID,)
    w1_T = raw["w1"].T * s[:, None]                               # (HID, FC1)
    b1 = raw["b1"] + (raw["bn_beta"] - raw["bn_mean"] * s) @ raw["w1"].T

    w2_T_pad = jnp.zeros((FC1, NCLS_PAD), jnp.float32).at[:, :NCLS].set(raw["w2"].T)
    b2_pad = jnp.full((NCLS_PAD,), -1e30, jnp.float32).at[:NCLS].set(raw["b2"])

    return {
        "w_cat": w_cat.astype(jnp.bfloat16),                      # (128, 4H)
        "w1_T": w1_T.astype(jnp.bfloat16),                        # (HID, FC1)
        "b1": b1.reshape(1, FC1).astype(jnp.float32),
        "w2_T": w2_T_pad.astype(jnp.bfloat16),                    # (FC1, 128)
        "b2": b2_pad.reshape(1, NCLS_PAD),
    }


# ----------------------------- reference -----------------------------------

def net_forward_ref(x, raw):
    """Pure-JAX f32 reference with PyTorch semantics (eval mode)."""
    x_seq = x.reshape(-1, SEQ, IN).astype(jnp.float32)
    B = x_seq.shape[0]
    h = jnp.zeros((B, HID), jnp.float32)
    c = jnp.zeros((B, HID), jnp.float32)
    w_ih_T, w_hh_T = raw["w_ih"].T, raw["w_hh"].T
    b = raw["b_ih"] + raw["b_hh"]
    for t in range(SEQ):
        gates = x_seq[:, t, :] @ w_ih_T + h @ w_hh_T + b
        i_g = jax.nn.sigmoid(gates[:, 0 * HID:1 * HID])
        f_g = jax.nn.sigmoid(gates[:, 1 * HID:2 * HID])
        g_g = jnp.tanh(gates[:, 2 * HID:3 * HID])
        o_g = jax.nn.sigmoid(gates[:, 3 * HID:4 * HID])
        c = f_g * c + i_g * g_g
        h = o_g * jnp.tanh(c)
    y = (h - raw["bn_mean"]) / jnp.sqrt(raw["bn_var"] + BN_EPS) * raw["bn_gamma"] + raw["bn_beta"]
    z1 = jnp.maximum(y @ raw["w1"].T + raw["b1"], 0.0)
    z2 = z1 @ raw["w2"].T + raw["b2"]
    return jax.nn.log_softmax(z2, axis=1)


if __name__ == "__main__":
    key = jax.random.PRNGKey(0)
    k_x, k_p = jax.random.split(key)
    B = 2
    x = jax.random.normal(k_x, (B, 1, SEQ, IN), dtype=jnp.float32)  # NCHW MNIST-like

    raw = init_raw_params(k_p)
    kparams = prepare_kernel_params(raw)

    out = jax.block_until_ready(net_forward(x, kparams))
    ref = jax.block_until_ready(net_forward_ref(x, raw))

    assert out.shape == (B, NCLS)
    max_err = float(jnp.max(jnp.abs(out - ref)))
    # bf16 matmul operands (f32 accumulation) -> small numerical drift vs f32 ref.
    assert max_err < 5e-2, f"Pallas output mismatch vs JAX reference (max err {max_err})"
    print("KERNEL_OK")
</pallas_src>

<mosaic_0001>
module attributes {stable_mosaic.version = 11 : i64} {
  func.func @net_kernel(%arg0: i32, %arg1: memref<28x16x64xbf16, #tpu.memory_space<vmem>>, %arg2: memref<128x256xbf16, #tpu.memory_space<vmem>>, %arg3: memref<64x32xbf16, #tpu.memory_space<vmem>>, %arg4: memref<1x32xf32, #tpu.memory_space<vmem>>, %arg5: memref<32x128xbf16, #tpu.memory_space<vmem>>, %arg6: memref<1x128xf32, #tpu.memory_space<vmem>>, %arg7: memref<16x128xf32, #tpu.memory_space<vmem>>, %arg8: memref<16x128xbf16, #tpu.memory_space<vmem>>) attributes {dimension_semantics = [#tpu.dimension_semantics<parallel>], iteration_bounds = array<i64: 1>, scalar_prefetch = 0 : i64, scratch_operands = 1 : i64, tpu.core_type = #tpu.core_type<tc>, window_params = [{transform_indices = @transform_0, window_bounds = array<i64: 28, 16, 64>}, {pipeline_mode = #tpu.pipeline_mode<synchronous>, transform_indices = @transform_1, window_bounds = array<i64: 128, 256>}, {pipeline_mode = #tpu.pipeline_mode<synchronous>, transform_indices = @transform_2, window_bounds = array<i64: 64, 32>}, {pipeline_mode = #tpu.pipeline_mode<synchronous>, transform_indices = @transform_3, window_bounds = array<i64: 1, 32>}, {pipeline_mode = #tpu.pipeline_mode<synchronous>, transform_indices = @transform_4, window_bounds = array<i64: 32, 128>}, {pipeline_mode = #tpu.pipeline_mode<synchronous>, transform_indices = @transform_5, window_bounds = array<i64: 1, 128>}, {transform_indices = @transform_6, window_bounds = array<i64: 16, 128>}]} {
    %c0 = arith.constant 0 : index
    %c0_0 = arith.constant 0 : index
    %0 = vector.load %arg2[%c0, %c0_0] : memref<128x256xbf16, #tpu.memory_space<vmem>>, vector<128x256xbf16>
    %cst = arith.constant 0.000000e+00 : bf16
    %1 = vector.broadcast %cst : bf16 to vector<16x64xbf16>
    %c0_1 = arith.constant 0 : index
    %c0_2 = arith.constant 0 : index
    %2 = vector.load %arg8[%c0_1, %c0_2] : memref<16x128xbf16, #tpu.memory_space<vmem>>, vector<16x64xbf16>
    tpu.vector_store %arg8[%c0_1, %c0_2], %1 {strides = array<i32>} : memref<16x128xbf16, #tpu.memory_space<vmem>>, vector<16x64xbf16>,
    %cst_3 = arith.constant 0.000000e+00 : f32
    %3 = vector.broadcast %cst_3 : f32 to vector<16x64xf32>
    %c0_i32 = arith.constant 0 : i32
    %4 = arith.index_cast %c0_i32 : i32 to index
    %c0_4 = arith.constant 0 : index
    %c0_5 = arith.constant 0 : index
    %5 = vector.load %arg1[%4, %c0_4, %c0_5] : memref<28x16x64xbf16, #tpu.memory_space<vmem>>, vector<1x16x64xbf16>
    %6 = vector.shape_cast %5 : vector<1x16x64xbf16> to vector<16x64xbf16>
    %c0_6 = arith.constant 0 : index
    %c64 = arith.constant 64 : index
    %7 = vector.load %arg8[%c0_6, %c64] : memref<16x128xbf16, #tpu.memory_space<vmem>>, vector<16x64xbf16>
    tpu.vector_store %arg8[%c0_6, %c64], %6 {strides = array<i32>} : memref<16x128xbf16, #tpu.memory_space<vmem>>, vector<16x64xbf16>,
    %c0_7 = arith.constant 0 : index
    %c0_8 = arith.constant 0 : index
    %8 = vector.load %arg8[%c0_7, %c0_8] : memref<16x128xbf16, #tpu.memory_space<vmem>>, vector<16x128xbf16>
    %cst_9 = arith.constant dense<0.000000e+00> : vector<16x256xf32>
    %9 = tpu.matmul %8, %0, %cst_9 {dimension_numbers = #tpu.dot_dimension_numbers<[1], [0], [0], [1], [0, 0, 1, 1], [], []>} : vector<16x128xbf16>, vector<128x256xbf16>, vector<16x256xf32> -> vector<16x256xf32>
    %10 = vector.extract_strided_slice %9 {offsets = [0, 0], sizes = [16, 192], strides = [1, 1]} : vector<16x256xf32> to vector<16x192xf32>
    %cst_10 = arith.constant 5.000000e-01 : f32
    %11 = vector.broadcast %cst_10 : f32 to vector<16x192xf32>
    %12 = arith.mulf %11, %10 : vector<16x192xf32>
    %13 = math.tanh %12 : vector<16x192xf32>
    %cst_11 = arith.constant 5.000000e-01 : f32
    %14 = vector.broadcast %cst_11 : f32 to vector<16x192xf32>
    %15 = arith.mulf %14, %13 : vector<16x192xf32>
    %cst_12 = arith.constant 5.000000e-01 : f32
    %16 = vector.broadcast %cst_12 : f32 to vector<16x192xf32>
    %17 = arith.addf %15, %16 : vector<16x192xf32>
    %18 = vector.extract_strided_slice %9 {offsets = [0, 192], sizes = [16, 64], strides = [1, 1]} : vector<16x256xf32> to vector<16x64xf32>
    %19 = math.tanh %18 : vector<16x64xf32>
    %20 = vector.extract_strided_slice %17 {offsets = [0, 0], sizes = [16, 64], strides = [1, 1]} : vector<16x192xf32> to vector<16x64xf32>
    %21 = vector.extract_strided_slice %17 {offsets = [0, 64], sizes = [16, 64], strides = [1, 1]} : vector<16x192xf32> to vector<16x64xf32>
    %22 = vector.extract_strided_slice %17 {offsets = [0, 128], sizes = [16, 64], strides = [1, 1]} : vector<16x192xf32> to vector<16x64xf32>
    %23 = arith.mulf %21, %3 : vector<16x64xf32>
    %24 = arith.mulf %20, %19 : vector<16x64xf32>
    %25 = arith.addf %23, %24 : vector<16x64xf32>
    %26 = math.tanh %25 : vector<16x64xf32>
    %27 = arith.mulf %22, %26 : vector<16x64xf32>
    %28 = arith.truncf %27 : vector<16x64xf32> to vector<16x64xbf16>
    %c0_13 = arith.constant 0 : index
    %c0_14 = arith.constant 0 : index
    %29 = vector.load %arg8[%c0_13, %c0_14] : memref<16x128xbf16, #tpu.memory_space<vmem>>, vector<16x64xbf16>
    tpu.vector_store %arg8[%c0_13, %c0_14], %28 {strides = array<i32>} : memref<16x128xbf16, #tpu.memory_space<vmem>>, vector<16x64xbf16>,
    %c1_i32 = arith.constant 1 : i32
    %30 = arith.index_cast %c1_i32 : i32 to index
    %c0_15 = arith.constant 0 : index
    %c0_16 = arith.constant 0 : index
    %31 = vector.load %arg1[%30, %c0_15, %c0_16] : memref<28x16x64xbf16, #tpu.memory_space<vmem>>, vector<1x16x64xbf16>
    %32 = vector.shape_cast %31 : vector<1x16x64xbf16> to vector<16x64xbf16>
    %c0_17 = arith.constant 0 : index
    %c64_18 = arith.constant 64 : index
    %33 = vector.load %arg8[%c0_17, %c64_18] : memref<16x128xbf16, #tpu.memory_space<vmem>>, vector<16x64xbf16>
    tpu.vector_store %arg8[%c0_17, %c64_18], %32 {strides = array<i32>} : memref<16x128xbf16, #tpu.memory_space<vmem>>, vector<16x64xbf16>,
    %c0_19 = arith.constant 0 : index
    %c0_20 = arith.constant 0 : index
    %34 = vector.load %arg8[%c0_19, %c0_20] : memref<16x128xbf16, #tpu.memory_space<vmem>>, vector<16x128xbf16>
    %cst_21 = arith.constant dense<0.000000e+00> : vector<16x256xf32>
    %35 = tpu.matmul %34, %0, %cst_21 {dimension_numbers = #tpu.dot_dimension_numbers<[1], [0], [0], [1], [0, 0, 1, 1], [], []>} : vector<16x128xbf16>, vector<128x256xbf16>, vector<16x256xf32> -> vector<16x256xf32>
    %36 = vector.extract_strided_slice %35 {offsets = [0, 0], sizes = [16, 192], strides = [1, 1]} : vector<16x256xf32> to vector<16x192xf32>
    %cst_22 = arith.constant 5.000000e-01 : f32
    %37 = vector.broadcast %cst_22 : f32 to vector<16x192xf32>
    %38 = arith.mulf %37, %36 : vector<16x192xf32>
    %39 = math.tanh %38 : vector<16x192xf32>
    %cst_23 = arith.constant 5.000000e-01 : f32
    %40 = vector.broadcast %cst_23 : f32 to vector<16x192xf32>
    %41 = arith.mulf %40, %39 : vector<16x192xf32>
    %cst_24 = arith.constant 5.000000e-01 : f32
    %42 = vector.broadcast %cst_24 : f32 to vector<16x192xf32>
    %43 = arith.addf %41, %42 : vector<16x192xf32>
    %44 = vector.extract_strided_slice %35 {offsets = [0, 192], sizes = [16, 64], strides = [1, 1]} : vector<16x256xf32> to vector<16x64xf32>
    %45 = math.tanh %44 : vector<16x64xf32>
    %46 = vector.extract_strided_slice %43 {offsets = [0, 0], sizes = [16, 64], strides = [1, 1]} : vector<16x192xf32> to vector<16x64xf32>
    %47 = vector.extract_strided_slice %43 {offsets = [0, 64], sizes = [16, 64], strides = [1, 1]} : vector<16x192xf32> to vector<16x64xf32>
    %48 = vector.extract_strided_slice %43 {offsets = [0, 128], sizes = [16, 64], strides = [1, 1]} : vector<16x192xf32> to vector<16x64xf32>
    %49 = arith.mulf %47, %25 : vector<16x64xf32>
    %50 = arith.mulf %46, %45 : vector<16x64xf32>
    %51 = arith.addf %49, %50 : vector<16x64xf32>
    %52 = math.tanh %51 : vector<16x64xf32>
    %53 = arith.mulf %48, %52 : vector<16x64xf32>
    %54 = arith.truncf %53 : vector<16x64xf32> to vector<16x64xbf16>
    %c0_25 = arith.constant 0 : index
    %c0_26 = arith.constant 0 : index
    %55 = vector.load %arg8[%c0_25, %c0_26] : memref<16x128xbf16, #tpu.memory_space<vmem>>, vector<16x64xbf16>
    tpu.vector_store %arg8[%c0_25, %c0_26], %54 {strides = array<i32>} : memref<16x128xbf16, #tpu.memory_space<vmem>>, vector<16x64xbf16>,
    %c2_i32 = arith.constant 2 : i32
    %56 = arith.index_cast %c2_i32 : i32 to index
    %c0_27 = arith.constant 0 : index
    %c0_28 = arith.constant 0 : index
    %57 = vector.load %arg1[%56, %c0_27, %c0_28] : memref<28x16x64xbf16, #tpu.memory_space<vmem>>, vector<1x16x64xbf16>
    %58 = vector.shape_cast %57 : vector<1x16x64xbf16> to vector<16x64xbf16>
    %c0_29 = arith.constant 0 : index
    %c64_30 = arith.constant 64 : index
    %59 = vector.load %arg8[%c0_29, %c64_30] : memref<16x128xbf16, #tpu.memory_space<vmem>>, vector<16x64xbf16>
    tpu.vector_store %arg8[%c0_29, %c64_30], %58 {strides = array<i32>} : memref<16x128xbf16, #tpu.memory_space<vmem>>, vector<16x64xbf16>,
    %c0_31 = arith.constant 0 : index
    %c0_32 = arith.constant 0 : index
    %60 = vector.load %arg8[%c0_31, %c0_32] : memref<16x128xbf16, #tpu.memory_space<vmem>>, vector<16x128xbf16>
    %cst_33 = arith.constant dense<0.000000e+00> : vector<16x256xf32>
    %61 = tpu.matmul %60, %0, %cst_33 {dimension_numbers = #tpu.dot_dimension_numbers<[1], [0], [0], [1], [0, 0, 1, 1], [], []>} : vector<16x128xbf16>, vector<128x256xbf16>, vector<16x256xf32> -> vector<16x256xf32>
    %62 = vector.extract_strided_slice %61 {offsets = [0, 0], sizes = [16, 192], strides = [1, 1]} : vector<16x256xf32> to vector<16x192xf32>
    %cst_34 = arith.constant 5.000000e-01 : f32
    %63 = vector.broadcast %cst_34 : f32 to vector<16x192xf32>
    %64 = arith.mulf %63, %62 : vector<16x192xf32>
    %65 = math.tanh %64 : vector<16x192xf32>
    %cst_35 = arith.constant 5.000000e-01 : f32
    %66 = vector.broadcast %cst_35 : f32 to vector<16x192xf32>
    %67 = arith.mulf %66, %65 : vector<16x192xf32>
    %cst_36 = arith.constant 5.000000e-01 : f32
    %68 = vector.broadcast %cst_36 : f32 to vector<16x192xf32>
    %69 = arith.addf %67, %68 : vector<16x192xf32>
    %70 = vector.extract_strided_slice %61 {offsets = [0, 192], sizes = [16, 64], strides = [1, 1]} : vector<16x256xf32> to vector<16x64xf32>
    %71 = math.tanh %70 : vector<16x64xf32>
    %72 = vector.extract_strided_slice %69 {offsets = [0, 0], sizes = [16, 64], strides = [1, 1]} : vector<16x192xf32> to vector<16x64xf32>
    %73 = vector.extract_strided_slice %69 {offsets = [0, 64], sizes = [16, 64], strides = [1, 1]} : vector<16x192xf32> to vector<16x64xf32>
    %74 = vector.extract_strided_slice %69 {offsets = [0, 128], sizes = [16, 64], strides = [1, 1]} : vector<16x192xf32> to vector<16x64xf32>
    %75 = arith.mulf %73, %51 : vector<16x64xf32>
    %76 = arith.mulf %72, %71 : vector<16x64xf32>
    %77 = arith.addf %75, %76 : vector<16x64xf32>
    %78 = math.tanh %77 : vector<16x64xf32>
    %79 = arith.mulf %74, %78 : vector<16x64xf32>
    %80 = arith.truncf %79 : vector<16x64xf32> to vector<16x64xbf16>
    %c0_37 = arith.constant 0 : index
    %c0_38 = arith.constant 0 : index
    %81 = vector.load %arg8[%c0_37, %c0_38] : memref<16x128xbf16, #tpu.memory_space<vmem>>, vector<16x64xbf16>
    tpu.vector_store %arg8[%c0_37, %c0_38], %80 {strides = array<i32>} : memref<16x128xbf16, #tpu.memory_space<vmem>>, vector<16x64xbf16>,
    %c3_i32 = arith.constant 3 : i32
    %82 = arith.index_cast %c3_i32 : i32 to index
    %c0_39 = arith.constant 0 : index
    %c0_40 = arith.constant 0 : index
    %83 = vector.load %arg1[%82, %c0_39, %c0_40] : memref<28x16x64xbf16, #tpu.memory_space<vmem>>, vector<1x16x64xbf16>
    %84 = vector.shape_cast %83 : vector<1x16x64xbf16> to vector<16x64xbf16>
    %c0_41 = arith.constant 0 : index
    %c64_42 = arith.constant 64 : index
    %85 = vector.load %arg8[%c0_41, %c64_42] : memref<16x128xbf16, #tpu.memory_space<vmem>>, vector<16x64xbf16>
    tpu.vector_store %arg8[%c0_41, %c64_42], %84 {strides = array<i32>} : memref<16x128xbf16, #tpu.memory_space<vmem>>, vector<16x64xbf16>,
    %c0_43 = arith.constant 0 : index
    %c0_44 = arith.constant 0 : index
    %86 = vector.load %arg8[%c0_43, %c0_44] : memref<16x128xbf16, #tpu.memory_space<vmem>>, vector<16x128xbf16>
    %cst_45 = arith.constant dense<0.000000e+00> : vector<16x256xf32>
    %87 = tpu.matmul %86, %0, %cst_45 {dimension_numbers = #tpu.dot_dimension_numbers<[1], [0], [0], [1], [0, 0, 1, 1], [], []>} : vector<16x128xbf16>, vector<128x256xbf16>, vector<16x256xf32> -> vector<16x256xf32>
    %88 = vector.extract_strided_slice %87 {offsets = [0, 0], sizes = [16, 192], strides = [1, 1]} : vector<16x256xf32> to vector<16x192xf32>
    %cst_46 = arith.constant 5.000000e-01 : f32
    %89 = vector.broadcast %cst_46 : f32 to vector<16x192xf32>
    %90 = arith.mulf %89, %88 : vector<16x192xf32>
    %91 = math.tanh %90 : vector<16x192xf32>
    %cst_47 = arith.constant 5.000000e-01 : f32
    %92 = vector.broadcast %cst_47 : f32 to vector<16x192xf32>
    %93 = arith.mulf %92, %91 : vector<16x192xf32>
    %cst_48 = arith.constant 5.000000e-01 : f32
    %94 = vector.broadcast %cst_48 : f32 to vector<16x192xf32>
    %95 = arith.addf %93, %94 : vector<16x192xf32>
    %96 = vector.extract_strided_slice %87 {offsets = [0, 192], sizes = [16, 64], strides = [1, 1]} : vector<16x256xf32> to vector<16x64xf32>
    %97 = math.tanh %96 : vector<16x64xf32>
    %98 = vector.extract_strided_slice %95 {offsets = [0, 0], sizes = [16, 64], strides = [1, 1]} : vector<16x192xf32> to vector<16x64xf32>
    %99 = vector.extract_strided_slice %95 {offsets = [0, 64], sizes = [16, 64], strides = [1, 1]} : vector<16x192xf32> to vector<16x64xf32>
    %100 = vector.extract_strided_slice %95 {offsets = [0, 128], sizes = [16, 64], strides = [1, 1]} : vector<16x192xf32> to vector<16x64xf32>
    %101 = arith.mulf %99, %77 : vector<16x64xf32>
    %102 = arith.mulf %98, %97 : vector<16x64xf32>
    %103 = arith.addf %101, %102 : vector<16x64xf32>
    %104 = math.tanh %103 : vector<16x64xf32>
    %105 = arith.mulf %100, %104 : vector<16x64xf32>
    %106 = arith.truncf %105 : vector<16x64xf32> to vector<16x64xbf16>
    %c0_49 = arith.constant 0 : index
    %c0_50 = arith.constant 0 : index
    %107 = vector.load %arg8[%c0_49, %c0_50] : memref<16x128xbf16, #tpu.memory_space<vmem>>, vector<16x64xbf16>
    tpu.vector_store %arg8[%c0_49, %c0_50], %106 {strides = array<i32>} : memref<16x128xbf16, #tpu.memory_space<vmem>>, vector<16x64xbf16>,
    %c4_i32 = arith.constant 4 : i32
    %108 = arith.index_cast %c4_i32 : i32 to index
    %c0_51 = arith.constant 0 : index
    %c0_52 = arith.constant 0 : index
    %109 = vector.load %arg1[%108, %c0_51, %c0_52] : memref<28x16x64xbf16, #tpu.memory_space<vmem>>, vector<1x16x64xbf16>
    %110 = vector.shape_cast %109 : vector<1x16x64xbf16> to vector<16x64xbf16>
    %c0_53 = arith.constant 0 : index
    %c64_54 = arith.constant 64 : index
    %111 = vector.load %arg8[%c0_53, %c64_54] : memref<16x128xbf16, #tpu.memory_space<vmem>>, vector<16x64xbf16>
    tpu.vector_store %arg8[%c0_53, %c64_54], %110 {strides = array<i32>} : memref<16x128xbf16, #tpu.memory_space<vmem>>, vector<16x64xbf16>,
    %c0_55 = arith.constant 0 : index
    %c0_56 = arith.constant 0 : index
    %112 = vector.load %arg8[%c0_55, %c0_56] : memref<16x128xbf16, #tpu.memory_space<vmem>>, vector<16x128xbf16>
    %cst_57 = arith.constant dense<0.000000e+00> : vector<16x256xf32>
    %113 = tpu.matmul %112, %0, %cst_57 {dimension_numbers = #tpu.dot_dimension_numbers<[1], [0], [0], [1], [0, 0, 1, 1], [], []>} : vector<16x128xbf16>, vector<128x256xbf16>, vector<16x256xf32> -> vector<16x256xf32>
    %114 = vector.extract_strided_slice %113 {offsets = [0, 0], sizes = [16, 192], strides = [1, 1]} : vector<16x256xf32> to vector<16x192xf32>
    %cst_58 = arith.constant 5.000000e-01 : f32
    %115 = vector.broadcast %cst_58 : f32 to vector<16x192xf32>
    %116 = arith.mulf %115, %114 : vector<16x192xf32>
    %117 = math.tanh %116 : vector<16x192xf32>
    %cst_59 = arith.constant 5.000000e-01 : f32
    %118 = vector.broadcast %cst_59 : f32 to vector<16x192xf32>
    %119 = arith.mulf %118, %117 : vector<16x192xf32>
    %cst_60 = arith.constant 5.000000e-01 : f32
    %120 = vector.broadcast %cst_60 : f32 to vector<16x192xf32>
    %121 = arith.addf %119, %120 : vector<16x192xf32>
    %122 = vector.extract_strided_slice %113 {offsets = [0, 192], sizes = [16, 64], strides = [1, 1]} : vector<16x256xf32> to vector<16x64xf32>
    %123 = math.tanh %122 : vector<16x64xf32>
    %124 = vector.extract_strided_slice %121 {offsets = [0, 0], sizes = [16, 64], strides = [1, 1]} : vector<16x192xf32> to vector<16x64xf32>
    %125 = vector.extract_strided_slice %121 {offsets = [0, 64], sizes = [16, 64], strides = [1, 1]} : vector<16x192xf32> to vector<16x64xf32>
    %126 = vector.extract_strided_slice %121 {offsets = [0, 128], sizes = [16, 64], strides = [1, 1]} : vector<16x192xf32> to vector<16x64xf32>
    %127 = arith.mulf %125, %103 : vector<16x64xf32>
    %128 = arith.mulf %124, %123 : vector<16x64xf32>
    %129 = arith.addf %127, %128 : vector<16x64xf32>
    %130 = math.tanh %129 : vector<16x64xf32>
    %131 = arith.mulf %126, %130 : vector<16x64xf32>
    %132 = arith.truncf %131 : vector<16x64xf32> to vector<16x64xbf16>
    %c0_61 = arith.constant 0 : index
    %c0_62 = arith.constant 0 : index
    %133 = vector.load %arg8[%c0_61, %c0_62] : memref<16x128xbf16, #tpu.memory_space<vmem>>, vector<16x64xbf16>
    tpu.vector_store %arg8[%c0_61, %c0_62], %132 {strides = array<i32>} : memref<16x128xbf16, #tpu.memory_space<vmem>>, vector<16x64xbf16>,
    %c5_i32 = arith.constant 5 : i32
    %134 = arith.index_cast %c5_i32 : i32 to index
    %c0_63 = arith.constant 0 : index
    %c0_64 = arith.constant 0 : index
    %135 = vector.load %arg1[%134, %c0_63, %c0_64] : memref<28x16x64xbf16, #tpu.memory_space<vmem>>, vector<1x16x64xbf16>
    %136 = vector.shape_cast %135 : vector<1x16x64xbf16> to vector<16x64xbf16>
    %c0_65 = arith.constant 0 : index
    %c64_66 = arith.constant 64 : index
    %137 = vector.load %arg8[%c0_65, %c64_66] : memref<16x128xbf16, #tpu.memory_space<vmem>>, vector<16x64xbf16>
    tpu.vector_store %arg8[%c0_65, %c64_66], %136 {strides = array<i32>} : memref<16x128xbf16, #tpu.memory_space<vmem>>, vector<16x64xbf16>,
    %c0_67 = arith.constant 0 : index
    %c0_68 = arith.constant 0 : index
    %138 = vector.load %arg8[%c0_67, %c0_68] : memref<16x128xbf16, #tpu.memory_space<vmem>>, vector<16x128xbf16>
    %cst_69 = arith.constant dense<0.000000e+00> : vector<16x256xf32>
    %139 = tpu.matmul %138, %0, %cst_69 {dimension_numbers = #tpu.dot_dimension_numbers<[1], [0], [0], [1], [0, 0, 1, 1], [], []>} : vector<16x128xbf16>, vector<128x256xbf16>, vector<16x256xf32> -> vector<16x256xf32>
    %140 = vector.extract_strided_slice %139 {offsets = [0, 0], sizes = [16, 192], strides = [1, 1]} : vector<16x256xf32> to vector<16x192xf32>
    %cst_70 = arith.constant 5.000000e-01 : f32
    %141 = vector.broadcast %cst_70 : f32 to vector<16x192xf32>
    %142 = arith.mulf %141, %140 : vector<16x192xf32>
    %143 = math.tanh %142 : vector<16x192xf32>
    %cst_71 = arith.constant 5.000000e-01 : f32
    %144 = vector.broadcast %cst_71 : f32 to vector<16x192xf32>
    %145 = arith.mulf %144, %143 : vector<16x192xf32>
    %cst_72 = arith.constant 5.000000e-01 : f32
    %146 = vector.broadcast %cst_72 : f32 to vector<16x192xf32>
    %147 = arith.addf %145, %146 : vector<16x192xf32>
    %148 = vector.extract_strided_slice %139 {offsets = [0, 192], sizes = [16, 64], strides = [1, 1]} : vector<16x256xf32> to vector<16x64xf32>
    %149 = math.tanh %148 : vector<16x64xf32>
    %150 = vector.extract_strided_slice %147 {offsets = [0, 0], sizes = [16, 64], strides = [1, 1]} : vector<16x192xf32> to vector<16x64xf32>
    %151 = vector.extract_strided_slice %147 {offsets = [0, 64], sizes = [16, 64], strides = [1, 1]} : vector<16x192xf32> to vector<16x64xf32>
    %152 = vector.extract_strided_slice %147 {offsets = [0, 128], sizes = [16, 64], strides = [1, 1]} : vector<16x192xf32> to vector<16x64xf32>
    %153 = arith.mulf %151, %129 : vector<16x64xf32>
    %154 = arith.mulf %150, %149 : vector<16x64xf32>
    %155 = arith.addf %153, %154 : vector<16x64xf32>
    %156 = math.tanh %155 : vector<16x64xf32>
    %157 = arith.mulf %152, %156 : vector<16x64xf32>
    %158 = arith.truncf %157 : vector<16x64xf32> to vector<16x64xbf16>
    %c0_73 = arith.constant 0 : index
    %c0_74 = arith.constant 0 : index
    %159 = vector.load %arg8[%c0_73, %c0_74] : memref<16x128xbf16, #tpu.memory_space<vmem>>, vector<16x64xbf16>
    tpu.vector_store %arg8[%c0_73, %c0_74], %158 {strides = array<i32>} : memref<16x128xbf16, #tpu.memory_space<vmem>>, vector<16x64xbf16>,
    %c6_i32 = arith.constant 6 : i32
    %160 = arith.index_cast %c6_i32 : i32 to index
    %c0_75 = arith.constant 0 : index
    %c0_76 = arith.constant 0 : index
    %161 = vector.load %arg1[%160, %c0_75, %c0_76] : memref<28x16x64xbf16, #tpu.memory_space<vmem>>, vector<1x16x64xbf16>
    %162 = vector.shape_cast %161 : vector<1x16x64xbf16> to vector<16x64xbf16>
    %c0_77 = arith.constant 0 : index
    %c64_78 = arith.constant 64 : index
    %163 = vector.load %arg8[%c0_77, %c64_78] : memref<16x128xbf16, #tpu.memory_space<vmem>>, vector<16x64xbf16>
    tpu.vector_store %arg8[%c0_77, %c64_78], %162 {strides = array<i32>} : memref<16x128xbf16, #tpu.memory_space<vmem>>, vector<16x64xbf16>,
    %c0_79 = arith.constant 0 : index
    %c0_80 = arith.constant 0 : index
    %164 = vector.load %arg8[%c0_79, %c0_80] : memref<16x128xbf16, #tpu.memory_space<vmem>>, vector<16x128xbf16>
    %cst_81 = arith.constant dense<0.000000e+00> : vector<16x256xf32>
    %165 = tpu.matmul %164, %0, %cst_81 {dimension_numbers = #tpu.dot_dimension_numbers<[1], [0], [0], [1], [0, 0, 1, 1], [], []>} : vector<16x128xbf16>, vector<128x256xbf16>, vector<16x256xf32> -> vector<16x256xf32>
    %166 = vector.extract_strided_slice %165 {offsets = [0, 0], sizes = [16, 192], strides = [1, 1]} : vector<16x256xf32> to vector<16x192xf32>
    %cst_82 = arith.constant 5.000000e-01 : f32
    %167 = vector.broadcast %cst_82 : f32 to vector<16x192xf32>
    %168 = arith.mulf %167, %166 : vector<16x192xf32>
    %169 = math.tanh %168 : vector<16x192xf32>
    %cst_83 = arith.constant 5.000000e-01 : f32
    %170 = vector.broadcast %cst_83 : f32 to vector<16x192xf32>
    %171 = arith.mulf %170, %169 : vector<16x192xf32>
    %cst_84 = arith.constant 5.000000e-01 : f32
    %172 = vector.broadcast %cst_84 : f32 to vector<16x192xf32>
    %173 = arith.addf %171, %172 : vector<16x192xf32>
    %174 = vector.extract_strided_slice %165 {offsets = [0, 192], sizes = [16, 64], strides = [1, 1]} : vector<16x256xf32> to vector<16x64xf32>
    %175 = math.tanh %174 : vector<16x64xf32>
    %176 = vector.extract_strided_slice %173 {offsets = [0, 0], sizes = [16, 64], strides = [1, 1]} : vector<16x192xf32> to vector<16x64xf32>
    %177 = vector.extract_strided_slice %173 {offsets = [0, 64], sizes = [16, 64], strides = [1, 1]} : vector<16x192xf32> to vector<16x64xf32>
    %178 = vector.extract_strided_slice %173 {offsets = [0, 128], sizes = [16, 64], strides = [1, 1]} : vector<16x192xf32> to vector<16x64xf32>
    %179 = arith.mulf %177, %155 : vector<16x64xf32>
    %180 = arith.mulf %176, %175 : vector<16x64xf32>
    %181 = arith.addf %179, %180 : vector<16x64xf32>
    %182 = math.tanh %181 : vector<16x64xf32>
    %183 = arith.mulf %178, %182 : vector<16x64xf32>
    %184 = arith.truncf %183 : vector<16x64xf32> to vector<16x64xbf16>
    %c0_85 = arith.constant 0 : index
    %c0_86 = arith.constant 0 : index
    %185 = vector.load %arg8[%c0_85, %c0_86] : memref<16x128xbf16, #tpu.memory_space<vmem>>, vector<16x64xbf16>
    tpu.vector_store %arg8[%c0_85, %c0_86], %184 {strides = array<i32>} : memref<16x128xbf16, #tpu.memory_space<vmem>>, vector<16x64xbf16>,
    %c7_i32 = arith.constant 7 : i32
    %186 = arith.index_cast %c7_i32 : i32 to index
    %c0_87 = arith.constant 0 : index
    %c0_88 = arith.constant 0 : index
    %187 = vector.load %arg1[%186, %c0_87, %c0_88] : memref<28x16x64xbf16, #tpu.memory_space<vmem>>, vector<1x16x64xbf16>
    %188 = vector.shape_cast %187 : vector<1x16x64xbf16> to vector<16x64xbf16>
    %c0_89 = arith.constant 0 : index
    %c64_90 = arith.constant 64 : index
    %189 = vector.load %arg8[%c0_89, %c64_90] : memref<16x128xbf16, #tpu.memory_space<vmem>>, vector<16x64xbf16>
    tpu.vector_store %arg8[%c0_89, %c64_90], %188 {strides = array<i32>} : memref<16x128xbf16, #tpu.memory_space<vmem>>, vector<16x64xbf16>,
    %c0_91 = arith.constant 0 : index
    %c0_92 = arith.constant 0 : index
    %190 = vector.load %arg8[%c0_91, %c0_92] : memref<16x128xbf16, #tpu.memory_space<vmem>>, vector<16x128xbf16>
    %cst_93 = arith.constant dense<0.000000e+00> : vector<16x256xf32>
    %191 = tpu.matmul %190, %0, %cst_93 {dimension_numbers = #tpu.dot_dimension_numbers<[1], [0], [0], [1], [0, 0, 1, 1], [], []>} : vector<16x128xbf16>, vector<128x256xbf16>, vector<16x256xf32> -> vector<16x256xf32>
    %192 = vector.extract_strided_slice %191 {offsets = [0, 0], sizes = [16, 192], strides = [1, 1]} : vector<16x256xf32> to vector<16x192xf32>
    %cst_94 = arith.constant 5.000000e-01 : f32
    %193 = vector.broadcast %cst_94 : f32 to vector<16x192xf32>
    %194 = arith.mulf %193, %192 : vector<16x192xf32>
    %195 = math.tanh %194 : vector<16x192xf32>
    %cst_95 = arith.constant 5.000000e-01 : f32
    %196 = vector.broadcast %cst_95 : f32 to vector<16x192xf32>
    %197 = arith.mulf %196, %195 : vector<16x192xf32>
    %cst_96 = arith.constant 5.000000e-01 : f32
    %198 = vector.broadcast %cst_96 : f32 to vector<16x192xf32>
    %199 = arith.addf %197, %198 : vector<16x192xf32>
    %200 = vector.extract_strided_slice %191 {offsets = [0, 192], sizes = [16, 64], strides = [1, 1]} : vector<16x256xf32> to vector<16x64xf32>
    %201 = math.tanh %200 : vector<16x64xf32>
    %202 = vector.extract_strided_slice %199 {offsets = [0, 0], sizes = [16, 64], strides = [1, 1]} : vector<16x192xf32> to vector<16x64xf32>
    %203 = vector.extract_strided_slice %199 {offsets = [0, 64], sizes = [16, 64], strides = [1, 1]} : vector<16x192xf32> to vector<16x64xf32>
    %204 = vector.extract_strided_slice %199 {offsets = [0, 128], sizes = [16, 64], strides = [1, 1]} : vector<16x192xf32> to vector<16x64xf32>
    %205 = arith.mulf %203, %181 : vector<16x64xf32>
    %206 = arith.mulf %202, %201 : vector<16x64xf32>
    %207 = arith.addf %205, %206 : vector<16x64xf32>
    %208 = math.tanh %207 : vector<16x64xf32>
    %209 = arith.mulf %204, %208 : vector<16x64xf32>
    %210 = arith.truncf %209 : vector<16x64xf32> to vector<16x64xbf16>
    %c0_97 = arith.constant 0 : index
    %c0_98 = arith.constant 0 : index
    %211 = vector.load %arg8[%c0_97, %c0_98] : memref<16x128xbf16, #tpu.memory_space<vmem>>, vector<16x64xbf16>
    tpu.vector_store %arg8[%c0_97, %c0_98], %210 {strides = array<i32>} : memref<16x128xbf16, #tpu.memory_space<vmem>>, vector<16x64xbf16>,
    %c8_i32 = arith.constant 8 : i32
    %212 = arith.index_cast %c8_i32 : i32 to index
    %c0_99 = arith.constant 0 : index
    %c0_100 = arith.constant 0 : index
    %213 = vector.load %arg1[%212, %c0_99, %c0_100] : memref<28x16x64xbf16, #tpu.memory_space<vmem>>, vector<1x16x64xbf16>
    %214 = vector.shape_cast %213 : vector<1x16x64xbf16> to vector<16x64xbf16>
    %c0_101 = arith.constant 0 : index
    %c64_102 = arith.constant 64 : index
    %215 = vector.load %arg8[%c0_101, %c64_102] : memref<16x128xbf16, #tpu.memory_space<vmem>>, vector<16x64xbf16>
    tpu.vector_store %arg8[%c0_101, %c64_102], %214 {strides = array<i32>} : memref<16x128xbf16, #tpu.memory_space<vmem>>, vector<16x64xbf16>,
    %c0_103 = arith.constant 0 : index
    %c0_104 = arith.constant 0 : index
    %216 = vector.load %arg8[%c0_103, %c0_104] : memref<16x128xbf16, #tpu.memory_space<vmem>>, vector<16x128xbf16>
    %cst_105 = arith.constant dense<0.000000e+00> : vector<16x256xf32>
    %217 = tpu.matmul %216, %0, %cst_105 {dimension_numbers = #tpu.dot_dimension_numbers<[1], [0], [0], [1], [0, 0, 1, 1], [], []>} : vector<16x128xbf16>, vector<128x256xbf16>, vector<16x256xf32> -> vector<16x256xf32>
    %218 = vector.extract_strided_slice %217 {offsets = [0, 0], sizes = [16, 192], strides = [1, 1]} : vector<16x256xf32> to vector<16x192xf32>
    %cst_106 = arith.constant 5.000000e-01 : f32
    %219 = vector.broadcast %cst_106 : f32 to vector<16x192xf32>
    %220 = arith.mulf %219, %218 : vector<16x192xf32>
    %221 = math.tanh %220 : vector<16x192xf32>
    %cst_107 = arith.constant 5.000000e-01 : f32
    %222 = vector.broadcast %cst_107 : f32 to vector<16x192xf32>
    %223 = arith.mulf %222, %221 : vector<16x192xf32>
    %cst_108 = arith.constant 5.000000e-01 : f32
    %224 = vector.broadcast %cst_108 : f32 to vector<16x192xf32>
    %225 = arith.addf %223, %224 : vector<16x192xf32>
    %226 = vector.extract_strided_slice %217 {offsets = [0, 192], sizes = [16, 64], strides = [1, 1]} : vector<16x256xf32> to vector<16x64xf32>
    %227 = math.tanh %226 : vector<16x64xf32>
    %228 = vector.extract_strided_slice %225 {offsets = [0, 0], sizes = [16, 64], strides = [1, 1]} : vector<16x192xf32> to vector<16x64xf32>
    %229 = vector.extract_strided_slice %225 {offsets = [0, 64], sizes = [16, 64], strides = [1, 1]} : vector<16x192xf32> to vector<16x64xf32>
    %230 = vector.extract_strided_slice %225 {offsets = [0, 128], sizes = [16, 64], strides = [1, 1]} : vector<16x192xf32> to vector<16x64xf32>
    %231 = arith.mulf %229, %207 : vector<16x64xf32>
    %232 = arith.mulf %228, %227 : vector<16x64xf32>
    %233 = arith.addf %231, %232 : vector<16x64xf32>
    %234 = math.tanh %233 : vector<16x64xf32>
    %235 = arith.mulf %230, %234 : vector<16x64xf32>
    %236 = arith.truncf %235 : vector<16x64xf32> to vector<16x64xbf16>
    %c0_109 = arith.constant 0 : index
    %c0_110 = arith.constant 0 : index
    %237 = vector.load %arg8[%c0_109, %c0_110] : memref<16x128xbf16, #tpu.memory_space<vmem>>, vector<16x64xbf16>
    tpu.vector_store %arg8[%c0_109, %c0_110], %236 {strides = array<i32>} : memref<16x128xbf16, #tpu.memory_space<vmem>>, vector<16x64xbf16>,
    %c9_i32 = arith.constant 9 : i32
    %238 = arith.index_cast %c9_i32 : i32 to index
    %c0_111 = arith.constant 0 : index
    %c0_112 = arith.constant 0 : index
    %239 = vector.load %arg1[%238, %c0_111, %c0_112] : memref<28x16x64xbf16, #tpu.memory_space<vmem>>, vector<1x16x64xbf16>
    %240 = vector.shape_cast %239 : vector<1x16x64xbf16> to vector<16x64xbf16>
    %c0_113 = arith.constant 0 : index
    %c64_114 = arith.constant 64 : index
    %241 = vector.load %arg8[%c0_113, %c64_114] : memref<16x128xbf16, #tpu.memory_space<vmem>>, vector<16x64xbf16>
    tpu.vector_store %arg8[%c0_113, %c64_114], %240 {strides = array<i32>} : memref<16x128xbf16, #tpu.memory_space<vmem>>, vector<16x64xbf16>,
    %c0_115 = arith.constant 0 : index
    %c0_116 = arith.constant 0 : index
    %242 = vector.load %arg8[%c0_115, %c0_116] : memref<16x128xbf16, #tpu.memory_space<vmem>>, vector<16x128xbf16>
    %cst_117 = arith.constant dense<0.000000e+00> : vector<16x256xf32>
    %243 = tpu.matmul %242, %0, %cst_117 {dimension_numbers = #tpu.dot_dimension_numbers<[1], [0], [0], [1], [0, 0, 1, 1], [], []>} : vector<16x128xbf16>, vector<128x256xbf16>, vector<16x256xf32> -> vector<16x256xf32>
    %244 = vector.extract_strided_slice %243 {offsets = [0, 0], sizes = [16, 192], strides = [1, 1]} : vector<16x256xf32> to vector<16x192xf32>
    %cst_118 = arith.constant 5.000000e-01 : f32
    %245 = vector.broadcast %cst_118 : f32 to vector<16x192xf32>
    %246 = arith.mulf %245, %244 : vector<16x192xf32>
    %247 = math.tanh %246 : vector<16x192xf32>
    %cst_119 = arith.constant 5.000000e-01 : f32
    %248 = vector.broadcast %cst_119 : f32 to vector<16x192xf32>
    %249 = arith.mulf %248, %247 : vector<16x192xf32>
    %cst_120 = arith.constant 5.000000e-01 : f32
    %250 = vector.broadcast %cst_120 : f32 to vector<16x192xf32>
    %251 = arith.addf %249, %250 : vector<16x192xf32>
    %252 = vector.extract_strided_slice %243 {offsets = [0, 192], sizes = [16, 64], strides = [1, 1]} : vector<16x256xf32> to vector<16x64xf32>
    %253 = math.tanh %252 : vector<16x64xf32>
    %254 = vector.extract_strided_slice %251 {offsets = [0, 0], sizes = [16, 64], strides = [1, 1]} : vector<16x192xf32> to vector<16x64xf32>
    %255 = vector.extract_strided_slice %251 {offsets = [0, 64], sizes = [16, 64], strides = [1, 1]} : vector<16x192xf32> to vector<16x64xf32>
    %256 = vector.extract_strided_slice %251 {offsets = [0, 128], sizes = [16, 64], strides = [1, 1]} : vector<16x192xf32> to vector<16x64xf32>
    %257 = arith.mulf %255, %233 : vector<16x64xf32>
    %258 = arith.mulf %254, %253 : vector<16x64xf32>
    %259 = arith.addf %257, %258 : vector<16x64xf32>
    %260 = math.tanh %259 : vector<16x64xf32>
    %261 = arith.mulf %256, %260 : vector<16x64xf32>
    %262 = arith.truncf %261 : vector<16x64xf32> to vector<16x64xbf16>
    %c0_121 = arith.constant 0 : index
    %c0_122 = arith.constant 0 : index
    %263 = vector.load %arg8[%c0_121, %c0_122] : memref<16x128xbf16, #tpu.memory_space<vmem>>, vector<16x64xbf16>
    tpu.vector_store %arg8[%c0_121, %c0_122], %262 {strides = array<i32>} : memref<16x128xbf16, #tpu.memory_space<vmem>>, vector<16x64xbf16>,
    %c10_i32 = arith.constant 10 : i32
    %264 = arith.index_cast %c10_i32 : i32 to index
    %c0_123 = arith.constant 0 : index
    %c0_124 = arith.constant 0 : index
    %265 = vector.load %arg1[%264, %c0_123, %c0_124] : memref<28x16x64xbf16, #tpu.memory_space<vmem>>, vector<1x16x64xbf16>
    %266 = vector.shape_cast %265 : vector<1x16x64xbf16> to vector<16x64xbf16>
    %c0_125 = arith.constant 0 : index
    %c64_126 = arith.constant 64 : index
    %267 = vector.load %arg8[%c0_125, %c64_126] : memref<16x128xbf16, #tpu.memory_space<vmem>>, vector<16x64xbf16>
    tpu.vector_store %arg8[%c0_125, %c64_126], %266 {strides = array<i32>} : memref<16x128xbf16, #tpu.memory_space<vmem>>, vector<16x64xbf16>,
    %c0_127 = arith.constant 0 : index
    %c0_128 = arith.constant 0 : index
    %268 = vector.load %arg8[%c0_127, %c0_128] : memref<16x128xbf16, #tpu.memory_space<vmem>>, vector<16x128xbf16>
    %cst_129 = arith.constant dense<0.000000e+00> : vector<16x256xf32>
    %269 = tpu.matmul %268, %0, %cst_129 {dimension_numbers = #tpu.dot_dimension_numbers<[1], [0], [0], [1], [0, 0, 1, 1], [], []>} : vector<16x128xbf16>, vector<128x256xbf16>, vector<16x256xf32> -> vector<16x256xf32>
    %270 = vector.extract_strided_slice %269 {offsets = [0, 0], sizes = [16, 192], strides = [1, 1]} : vector<16x256xf32> to vector<16x192xf32>
    %cst_130 = arith.constant 5.000000e-01 : f32
    %271 = vector.broadcast %cst_130 : f32 to vector<16x192xf32>
    %272 = arith.mulf %271, %270 : vector<16x192xf32>
    %273 = math.tanh %272 : vector<16x192xf32>
    %cst_131 = arith.constant 5.000000e-01 : f32
    %274 = vector.broadcast %cst_131 : f32 to vector<16x192xf32>
    %275 = arith.mulf %274, %273 : vector<16x192xf32>
    %cst_132 = arith.constant 5.000000e-01 : f32
    %276 = vector.broadcast %cst_132 : f32 to vector<16x192xf32>
    %277 = arith.addf %275, %276 : vector<16x192xf32>
    %278 = vector.extract_strided_slice %269 {offsets = [0, 192], sizes = [16, 64], strides = [1, 1]} : vector<16x256xf32> to vector<16x64xf32>
    %279 = math.tanh %278 : vector<16x64xf32>
    %280 = vector.extract_strided_slice %277 {offsets = [0, 0], sizes = [16, 64], strides = [1, 1]} : vector<16x192xf32> to vector<16x64xf32>
    %281 = vector.extract_strided_slice %277 {offsets = [0, 64], sizes = [16, 64], strides = [1, 1]} : vector<16x192xf32> to vector<16x64xf32>
    %282 = vector.extract_strided_slice %277 {offsets = [0, 128], sizes = [16, 64], strides = [1, 1]} : vector<16x192xf32> to vector<16x64xf32>
    %283 = arith.mulf %281, %259 : vector<16x64xf32>
    %284 = arith.mulf %280, %279 : vector<16x64xf32>
    %285 = arith.addf %283, %284 : vector<16x64xf32>
    %286 = math.tanh %285 : vector<16x64xf32>
    %287 = arith.mulf %282, %286 : vector<16x64xf32>
    %288 = arith.truncf %287 : vector<16x64xf32> to vector<16x64xbf16>
    %c0_133 = arith.constant 0 : index
    %c0_134 = arith.constant 0 : index
    %289 = vector.load %arg8[%c0_133, %c0_134] : memref<16x128xbf16, #tpu.memory_space<vmem>>, vector<16x64xbf16>
    tpu.vector_store %arg8[%c0_133, %c0_134], %288 {strides = array<i32>} : memref<16x128xbf16, #tpu.memory_space<vmem>>, vector<16x64xbf16>,
    %c11_i32 = arith.constant 11 : i32
    %290 = arith.index_cast %c11_i32 : i32 to index
    %c0_135 = arith.constant 0 : index
    %c0_136 = arith.constant 0 : index
    %291 = vector.load %arg1[%290, %c0_135, %c0_136] : memref<28x16x64xbf16, #tpu.memory_space<vmem>>, vector<1x16x64xbf16>
    %292 = vector.shape_cast %291 : vector<1x16x64xbf16> to vector<16x64xbf16>
    %c0_137 = arith.constant 0 : index
    %c64_138 = arith.constant 64 : index
    %293 = vector.load %arg8[%c0_137, %c64_138] : memref<16x128xbf16, #tpu.memory_space<vmem>>, vector<16x64xbf16>
    tpu.vector_store %arg8[%c0_137, %c64_138], %292 {strides = array<i32>} : memref<16x128xbf16, #tpu.memory_space<vmem>>, vector<16x64xbf16>,
    %c0_139 = arith.constant 0 : index
    %c0_140 = arith.constant 0 : index
    %294 = vector.load %arg8[%c0_139, %c0_140] : memref<16x128xbf16, #tpu.memory_space<vmem>>, vector<16x128xbf16>
    %cst_141 = arith.constant dense<0.000000e+00> : vector<16x256xf32>
    %295 = tpu.matmul %294, %0, %cst_141 {dimension_numbers = #tpu.dot_dimension_numbers<[1], [0], [0], [1], [0, 0, 1, 1], [], []>} : vector<16x128xbf16>, vector<128x256xbf16>, vector<16x256xf32> -> vector<16x256xf32>
    %296 = vector.extract_strided_slice %295 {offsets = [0, 0], sizes = [16, 192], strides = [1, 1]} : vector<16x256xf32> to vector<16x192xf32>
    %cst_142 = arith.constant 5.000000e-01 : f32
    %297 = vector.broadcast %cst_142 : f32 to vector<16x192xf32>
    %298 = arith.mulf %297, %296 : vector<16x192xf32>
    %299 = math.tanh %298 : vector<16x192xf32>
    %cst_143 = arith.constant 5.000000e-01 : f32
    %300 = vector.broadcast %cst_143 : f32 to vector<16x192xf32>
    %301 = arith.mulf %300, %299 : vector<16x192xf32>
    %cst_144 = arith.constant 5.000000e-01 : f32
    %302 = vector.broadcast %cst_144 : f32 to vector<16x192xf32>
    %303 = arith.addf %301, %302 : vector<16x192xf32>
    %304 = vector.extract_strided_slice %295 {offsets = [0, 192], sizes = [16, 64], strides = [1, 1]} : vector<16x256xf32> to vector<16x64xf32>
    %305 = math.tanh %304 : vector<16x64xf32>
    %306 = vector.extract_strided_slice %303 {offsets = [0, 0], sizes = [16, 64], strides = [1, 1]} : vector<16x192xf32> to vector<16x64xf32>
    %307 = vector.extract_strided_slice %303 {offsets = [0, 64], sizes = [16, 64], strides = [1, 1]} : vector<16x192xf32> to vector<16x64xf32>
    %308 = vector.extract_strided_slice %303 {offsets = [0, 128], sizes = [16, 64], strides = [1, 1]} : vector<16x192xf32> to vector<16x64xf32>
    %309 = arith.mulf %307, %285 : vector<16x64xf32>
    %310 = arith.mulf %306, %305 : vector<16x64xf32>
    %311 = arith.addf %309, %310 : vector<16x64xf32>
    %312 = math.tanh %311 : vector<16x64xf32>
    %313 = arith.mulf %308, %312 : vector<16x64xf32>
    %314 = arith.truncf %313 : vector<16x64xf32> to vector<16x64xbf16>
    %c0_145 = arith.constant 0 : index
    %c0_146 = arith.constant 0 : index
    %315 = vector.load %arg8[%c0_145, %c0_146] : memref<16x128xbf16, #tpu.memory_space<vmem>>, vector<16x64xbf16>
    tpu.vector_store %arg8[%c0_145, %c0_146], %314 {strides = array<i32>} : memref<16x128xbf16, #tpu.memory_space<vmem>>, vector<16x64xbf16>,
    %c12_i32 = arith.constant 12 : i32
    %316 = arith.index_cast %c12_i32 : i32 to index
    %c0_147 = arith.constant 0 : index
    %c0_148 = arith.constant 0 : index
    %317 = vector.load %arg1[%316, %c0_147, %c0_148] : memref<28x16x64xbf16, #tpu.memory_space<vmem>>, vector<1x16x64xbf16>
    %318 = vector.shape_cast %317 : vector<1x16x64xbf16> to vector<16x64xbf16>
    %c0_149 = arith.constant 0 : index
    %c64_150 = arith.constant 64 : index
    %319 = vector.load %arg8[%c0_149, %c64_150] : memref<16x128xbf16, #tpu.memory_space<vmem>>, vector<16x64xbf16>
    tpu.vector_store %arg8[%c0_149, %c64_150], %318 {strides = array<i32>} : memref<16x128xbf16, #tpu.memory_space<vmem>>, vector<16x64xbf16>,
    %c0_151 = arith.constant 0 : index
    %c0_152 = arith.constant 0 : index
    %320 = vector.load %arg8[%c0_151, %c0_152] : memref<16x128xbf16, #tpu.memory_space<vmem>>, vector<16x128xbf16>
    %cst_153 = arith.constant dense<0.000000e+00> : vector<16x256xf32>
    %321 = tpu.matmul %320, %0, %cst_153 {dimension_numbers = #tpu.dot_dimension_numbers<[1], [0], [0], [1], [0, 0, 1, 1], [], []>} : vector<16x128xbf16>, vector<128x256xbf16>, vector<16x256xf32> -> vector<16x256xf32>
    %322 = vector.extract_strided_slice %321 {offsets = [0, 0], sizes = [16, 192], strides = [1, 1]} : vector<16x256xf32> to vector<16x192xf32>
    %cst_154 = arith.constant 5.000000e-01 : f32
    %323 = vector.broadcast %cst_154 : f32 to vector<16x192xf32>
    %324 = arith.mulf %323, %322 : vector<16x192xf32>
    %325 = math.tanh %324 : vector<16x192xf32>
    %cst_155 = arith.constant 5.000000e-01 : f32
    %326 = vector.broadcast %cst_155 : f32 to vector<16x192xf32>
    %327 = arith.mulf %326, %325 : vector<16x192xf32>
    %cst_156 = arith.constant 5.000000e-01 : f32
    %328 = vector.broadcast %cst_156 : f32 to vector<16x192xf32>
    %329 = arith.addf %327, %328 : vector<16x192xf32>
    %330 = vector.extract_strided_slice %321 {offsets = [0, 192], sizes = [16, 64], strides = [1, 1]} : vector<16x256xf32> to vector<16x64xf32>
    %331 = math.tanh %330 : vector<16x64xf32>
    %332 = vector.extract_strided_slice %329 {offsets = [0, 0], sizes = [16, 64], strides = [1, 1]} : vector<16x192xf32> to vector<16x64xf32>
    %333 = vector.extract_strided_slice %329 {offsets = [0, 64], sizes = [16, 64], strides = [1, 1]} : vector<16x192xf32> to vector<16x64xf32>
    %334 = vector.extract_strided_slice %329 {offsets = [0, 128], sizes = [16, 64], strides = [1, 1]} : vector<16x192xf32> to vector<16x64xf32>
    %335 = arith.mulf %333, %311 : vector<16x64xf32>
    %336 = arith.mulf %332, %331 : vector<16x64xf32>
    %337 = arith.addf %335, %336 : vector<16x64xf32>
    %338 = math.tanh %337 : vector<16x64xf32>
    %339 = arith.mulf %334, %338 : vector<16x64xf32>
    %340 = arith.truncf %339 : vector<16x64xf32> to vector<16x64xbf16>
    %c0_157 = arith.constant 0 : index
    %c0_158 = arith.constant 0 : index
    %341 = vector.load %arg8[%c0_157, %c0_158] : memref<16x128xbf16, #tpu.memory_space<vmem>>, vector<16x64xbf16>
    tpu.vector_store %arg8[%c0_157, %c0_158], %340 {strides = array<i32>} : memref<16x128xbf16, #tpu.memory_space<vmem>>, vector<16x64xbf16>,
    %c13_i32 = arith.constant 13 : i32
    %342 = arith.index_cast %c13_i32 : i32 to index
    %c0_159 = arith.constant 0 : index
    %c0_160 = arith.constant 0 : index
    %343 = vector.load %arg1[%342, %c0_159, %c0_160] : memref<28x16x64xbf16, #tpu.memory_space<vmem>>, vector<1x16x64xbf16>
    %344 = vector.shape_cast %343 : vector<1x16x64xbf16> to vector<16x64xbf16>
    %c0_161 = arith.constant 0 : index
    %c64_162 = arith.constant 64 : index
    %345 = vector.load %arg8[%c0_161, %c64_162] : memref<16x128xbf16, #tpu.memory_space<vmem>>, vector<16x64xbf16>
    tpu.vector_store %arg8[%c0_161, %c64_162], %344 {strides = array<i32>} : memref<16x128xbf16, #tpu.memory_space<vmem>>, vector<16x64xbf16>,
    %c0_163 = arith.constant 0 : index
    %c0_164 = arith.constant 0 : index
    %346 = vector.load %arg8[%c0_163, %c0_164] : memref<16x128xbf16, #tpu.memory_space<vmem>>, vector<16x128xbf16>
    %cst_165 = arith.constant dense<0.000000e+00> : vector<16x256xf32>
    %347 = tpu.matmul %346, %0, %cst_165 {dimension_numbers = #tpu.dot_dimension_numbers<[1], [0], [0], [1], [0, 0, 1, 1], [], []>} : vector<16x128xbf16>, vector<128x256xbf16>, vector<16x256xf32> -> vector<16x256xf32>
    %348 = vector.extract_strided_slice %347 {offsets = [0, 0], sizes = [16, 192], strides = [1, 1]} : vector<16x256xf32> to vector<16x192xf32>
    %cst_166 = arith.constant 5.000000e-01 : f32
    %349 = vector.broadcast %cst_166 : f32 to vector<16x192xf32>
    %350 = arith.mulf %349, %348 : vector<16x192xf32>
    %351 = math.tanh %350 : vector<16x192xf32>
    %cst_167 = arith.constant 5.000000e-01 : f32
    %352 = vector.broadcast %cst_167 : f32 to vector<16x192xf32>
    %353 = arith.mulf %352, %351 : vector<16x192xf32>
    %cst_168 = arith.constant 5.000000e-01 : f32
    %354 = vector.broadcast %cst_168 : f32 to vector<16x192xf32>
    %355 = arith.addf %353, %354 : vector<16x192xf32>
    %356 = vector.extract_strided_slice %347 {offsets = [0, 192], sizes = [16, 64], strides = [1, 1]} : vector<16x256xf32> to vector<16x64xf32>
    %357 = math.tanh %356 : vector<16x64xf32>
    %358 = vector.extract_strided_slice %355 {offsets = [0, 0], sizes = [16, 64], strides = [1, 1]} : vector<16x192xf32> to vector<16x64xf32>
    %359 = vector.extract_strided_slice %355 {offsets = [0, 64], sizes = [16, 64], strides = [1, 1]} : vector<16x192xf32> to vector<16x64xf32>
    %360 = vector.extract_strided_slice %355 {offsets = [0, 128], sizes = [16, 64], strides = [1, 1]} : vector<16x192xf32> to vector<16x64xf32>
    %361 = arith.mulf %359, %337 : vector<16x64xf32>
    %362 = arith.mulf %358, %357 : vector<16x64xf32>
    %363 = arith.addf %361, %362 : vector<16x64xf32>
    %364 = math.tanh %363 : vector<16x64xf32>
    %365 = arith.mulf %360, %364 : vector<16x64xf32>
    %366 = arith.truncf %365 : vector<16x64xf32> to vector<16x64xbf16>
    %c0_169 = arith.constant 0 : index
    %c0_170 = arith.constant 0 : index
    %367 = vector.load %arg8[%c0_169, %c0_170] : memref<16x128xbf16, #tpu.memory_space<vmem>>, vector<16x64xbf16>
    tpu.vector_store %arg8[%c0_169, %c0_170], %366 {strides = array<i32>} : memref<16x128xbf16, #tpu.memory_space<vmem>>, vector<16x64xbf16>,
    %c14_i32 = arith.constant 14 : i32
    %368 = arith.index_cast %c14_i32 : i32 to index
    %c0_171 = arith.constant 0 : index
    %c0_172 = arith.constant 0 : index
    %369 = vector.load %arg1[%368, %c0_171, %c0_172] : memref<28x16x64xbf16, #tpu.memory_space<vmem>>, vector<1x16x64xbf16>
    %370 = vector.shape_cast %369 : vector<1x16x64xbf16> to vector<16x64xbf16>
    %c0_173 = arith.constant 0 : index
    %c64_174 = arith.constant 64 : index
    %371 = vector.load %arg8[%c0_173, %c64_174] : memref<16x128xbf16, #tpu.memory_space<vmem>>, vector<16x64xbf16>
    tpu.vector_store %arg8[%c0_173, %c64_174], %370 {strides = array<i32>} : memref<16x128xbf16, #tpu.memory_space<vmem>>, vector<16x64xbf16>,
    %c0_175 = arith.constant 0 : index
    %c0_176 = arith.constant 0 : index
    %372 = vector.load %arg8[%c0_175, %c0_176] : memref<16x128xbf16, #tpu.memory_space<vmem>>, vector<16x128xbf16>
    %cst_177 = arith.constant dense<0.000000e+00> : vector<16x256xf32>
    %373 = tpu.matmul %372, %0, %cst_177 {dimension_numbers = #tpu.dot_dimension_numbers<[1], [0], [0], [1], [0, 0, 1, 1], [], []>} : vector<16x128xbf16>, vector<128x256xbf16>, vector<16x256xf32> -> vector<16x256xf32>
    %374 = vector.extract_strided_slice %373 {offsets = [0, 0], sizes = [16, 192], strides = [1, 1]} : vector<16x256xf32> to vector<16x192xf32>
    %cst_178 = arith.constant 5.000000e-01 : f32
    %375 = vector.broadcast %cst_178 : f32 to vector<16x192xf32>
    %376 = arith.mulf %375, %374 : vector<16x192xf32>
    %377 = math.tanh %376 : vector<16x192xf32>
    %cst_179 = arith.constant 5.000000e-01 : f32
    %378 = vector.broadcast %cst_179 : f32 to vector<16x192xf32>
    %379 = arith.mulf %378, %377 : vector<16x192xf32>
    %cst_180 = arith.constant 5.000000e-01 : f32
    %380 = vector.broadcast %cst_180 : f32 to vector<16x192xf32>
    %381 = arith.addf %379, %380 : vector<16x192xf32>
    %382 = vector.extract_strided_slice %373 {offsets = [0, 192], sizes = [16, 64], strides = [1, 1]} : vector<16x256xf32> to vector<16x64xf32>
    %383 = math.tanh %382 : vector<16x64xf32>
    %384 = vector.extract_strided_slice %381 {offsets = [0, 0], sizes = [16, 64], strides = [1, 1]} : vector<16x192xf32> to vector<16x64xf32>
    %385 = vector.extract_strided_slice %381 {offsets = [0, 64], sizes = [16, 64], strides = [1, 1]} : vector<16x192xf32> to vector<16x64xf32>
    %386 = vector.extract_strided_slice %381 {offsets = [0, 128], sizes = [16, 64], strides = [1, 1]} : vector<16x192xf32> to vector<16x64xf32>
    %387 = arith.mulf %385, %363 : vector<16x64xf32>
    %388 = arith.mulf %384, %383 : vector<16x64xf32>
    %389 = arith.addf %387, %388 : vector<16x64xf32>
    %390 = math.tanh %389 : vector<16x64xf32>
    %391 = arith.mulf %386, %390 : vector<16x64xf32>
    %392 = arith.truncf %391 : vector<16x64xf32> to vector<16x64xbf16>
    %c0_181 = arith.constant 0 : index
    %c0_182 = arith.constant 0 : index
    %393 = vector.load %arg8[%c0_181, %c0_182] : memref<16x128xbf16, #tpu.memory_space<vmem>>, vector<16x64xbf16>
    tpu.vector_store %arg8[%c0_181, %c0_182], %392 {strides = array<i32>} : memref<16x128xbf16, #tpu.memory_space<vmem>>, vector<16x64xbf16>,
    %c15_i32 = arith.constant 15 : i32
    %394 = arith.index_cast %c15_i32 : i32 to index
    %c0_183 = arith.constant 0 : index
    %c0_184 = arith.constant 0 : index
    %395 = vector.load %arg1[%394, %c0_183, %c0_184] : memref<28x16x64xbf16, #tpu.memory_space<vmem>>, vector<1x16x64xbf16>
    %396 = vector.shape_cast %395 : vector<1x16x64xbf16> to vector<16x64xbf16>
    %c0_185 = arith.constant 0 : index
    %c64_186 = arith.constant 64 : index
    %397 = vector.load %arg8[%c0_185, %c64_186] : memref<16x128xbf16, #tpu.memory_space<vmem>>, vector<16x64xbf16>
    tpu.vector_store %arg8[%c0_185, %c64_186], %396 {strides = array<i32>} : memref<16x128xbf16, #tpu.memory_space<vmem>>, vector<16x64xbf16>,
    %c0_187 = arith.constant 0 : index
    %c0_188 = arith.constant 0 : index
    %398 = vector.load %arg8[%c0_187, %c0_188] : memref<16x128xbf16, #tpu.memory_space<vmem>>, vector<16x128xbf16>
    %cst_189 = arith.constant dense<0.000000e+00> : vector<16x256xf32>
    %399 = tpu.matmul %398, %0, %cst_189 {dimension_numbers = #tpu.dot_dimension_numbers<[1], [0], [0], [1], [0, 0, 1, 1], [], []>} : vector<16x128xbf16>, vector<128x256xbf16>, vector<16x256xf32> -> vector<16x256xf32>
    %400 = vector.extract_strided_slice %399 {offsets = [0, 0], sizes = [16, 192], strides = [1, 1]} : vector<16x256xf32> to vector<16x192xf32>
    %cst_190 = arith.constant 5.000000e-01 : f32
    %401 = vector.broadcast %cst_190 : f32 to vector<16x192xf32>
    %402 = arith.mulf %401, %400 : vector<16x192xf32>
    %403 = math.tanh %402 : vector<16x192xf32>
    %cst_191 = arith.constant 5.000000e-01 : f32
    %404 = vector.broadcast %cst_191 : f32 to vector<16x192xf32>
    %405 = arith.mulf %404, %403 : vector<16x192xf32>
    %cst_192 = arith.constant 5.000000e-01 : f32
    %406 = vector.broadcast %cst_192 : f32 to vector<16x192xf32>
    %407 = arith.addf %405, %406 : vector<16x192xf32>
    %408 = vector.extract_strided_slice %399 {offsets = [0, 192], sizes = [16, 64], strides = [1, 1]} : vector<16x256xf32> to vector<16x64xf32>
    %409 = math.tanh %408 : vector<16x64xf32>
    %410 = vector.extract_strided_slice %407 {offsets = [0, 0], sizes = [16, 64], strides = [1, 1]} : vector<16x192xf32> to vector<16x64xf32>
    %411 = vector.extract_strided_slice %407 {offsets = [0, 64], sizes = [16, 64], strides = [1, 1]} : vector<16x192xf32> to vector<16x64xf32>
    %412 = vector.extract_strided_slice %407 {offsets = [0, 128], sizes = [16, 64], strides = [1, 1]} : vector<16x192xf32> to vector<16x64xf32>
    %413 = arith.mulf %411, %389 : vector<16x64xf32>
    %414 = arith.mulf %410, %409 : vector<16x64xf32>
    %415 = arith.addf %413, %414 : vector<16x64xf32>
    %416 = math.tanh %415 : vector<16x64xf32>
    %417 = arith.mulf %412, %416 : vector<16x64xf32>
    %418 = arith.truncf %417 : vector<16x64xf32> to vector<16x64xbf16>
    %c0_193 = arith.constant 0 : index
    %c0_194 = arith.constant 0 : index
    %419 = vector.load %arg8[%c0_193, %c0_194] : memref<16x128xbf16, #tpu.memory_space<vmem>>, vector<16x64xbf16>
    tpu.vector_store %arg8[%c0_193, %c0_194], %418 {strides = array<i32>} : memref<16x128xbf16, #tpu.memory_space<vmem>>, vector<16x64xbf16>,
    %c16_i32 = arith.constant 16 : i32
    %420 = arith.index_cast %c16_i32 : i32 to index
    %c0_195 = arith.constant 0 : index
    %c0_196 = arith.constant 0 : index
    %421 = vector.load %arg1[%420, %c0_195, %c0_196] : memref<28x16x64xbf16, #tpu.memory_space<vmem>>, vector<1x16x64xbf16>
    %422 = vector.shape_cast %421 : vector<1x16x64xbf16> to vector<16x64xbf16>
    %c0_197 = arith.constant 0 : index
    %c64_198 = arith.constant 64 : index
    %423 = vector.load %arg8[%c0_197, %c64_198] : memref<16x128xbf16, #tpu.memory_space<vmem>>, vector<16x64xbf16>
    tpu.vector_store %arg8[%c0_197, %c64_198], %422 {strides = array<i32>} : memref<16x128xbf16, #tpu.memory_space<vmem>>, vector<16x64xbf16>,
    %c0_199 = arith.constant 0 : index
    %c0_200 = arith.constant 0 : index
    %424 = vector.load %arg8[%c0_199, %c0_200] : memref<16x128xbf16, #tpu.memory_space<vmem>>, vector<16x128xbf16>
    %cst_201 = arith.constant dense<0.000000e+00> : vector<16x256xf32>
    %425 = tpu.matmul %424, %0, %cst_201 {dimension_numbers = #tpu.dot_dimension_numbers<[1], [0], [0], [1], [0, 0, 1, 1], [], []>} : vector<16x128xbf16>, vector<128x256xbf16>, vector<16x256xf32> -> vector<16x256xf32>
    %426 = vector.extract_strided_slice %425 {offsets = [0, 0], sizes = [16, 192], strides = [1, 1]} : vector<16x256xf32> to vector<16x192xf32>
    %cst_202 = arith.constant 5.000000e-01 : f32
    %427 = vector.broadcast %cst_202 : f32 to vector<16x192xf32>
    %428 = arith.mulf %427, %426 : vector<16x192xf32>
    %429 = math.tanh %428 : vector<16x192xf32>
    %cst_203 = arith.constant 5.000000e-01 : f32
    %430 = vector.broadcast %cst_203 : f32 to vector<16x192xf32>
    %431 = arith.mulf %430, %429 : vector<16x192xf32>
    %cst_204 = arith.constant 5.000000e-01 : f32
    %432 = vector.broadcast %cst_204 : f32 to vector<16x192xf32>
    %433 = arith.addf %431, %432 : vector<16x192xf32>
    %434 = vector.extract_strided_slice %425 {offsets = [0, 192], sizes = [16, 64], strides = [1, 1]} : vector<16x256xf32> to vector<16x64xf32>
    %435 = math.tanh %434 : vector<16x64xf32>
    %436 = vector.extract_strided_slice %433 {offsets = [0, 0], sizes = [16, 64], strides = [1, 1]} : vector<16x192xf32> to vector<16x64xf32>
    %437 = vector.extract_strided_slice %433 {offsets = [0, 64], sizes = [16, 64], strides = [1, 1]} : vector<16x192xf32> to vector<16x64xf32>
    %438 = vector.extract_strided_slice %433 {offsets = [0, 128], sizes = [16, 64], strides = [1, 1]} : vector<16x192xf32> to vector<16x64xf32>
    %439 = arith.mulf %437, %415 : vector<16x64xf32>
    %440 = arith.mulf %436, %435 : vector<16x64xf32>
    %441 = arith.addf %439, %440 : vector<16x64xf32>
    %442 = math.tanh %441 : vector<16x64xf32>
    %443 = arith.mulf %438, %442 : vector<16x64xf32>
    %444 = arith.truncf %443 : vector<16x64xf32> to vector<16x64xbf16>
    %c0_205 = arith.constant 0 : index
    %c0_206 = arith.constant 0 : index
    %445 = vector.load %arg8[%c0_205, %c0_206] : memref<16x128xbf16, #tpu.memory_space<vmem>>, vector<16x64xbf16>
    tpu.vector_store %arg8[%c0_205, %c0_206], %444 {strides = array<i32>} : memref<16x128xbf16, #tpu.memory_space<vmem>>, vector<16x64xbf16>,
    %c17_i32 = arith.constant 17 : i32
    %446 = arith.index_cast %c17_i32 : i32 to index
    %c0_207 = arith.constant 0 : index
    %c0_208 = arith.constant 0 : index
    %447 = vector.load %arg1[%446, %c0_207, %c0_208] : memref<28x16x64xbf16, #tpu.memory_space<vmem>>, vector<1x16x64xbf16>
    %448 = vector.shape_cast %447 : vector<1x16x64xbf16> to vector<16x64xbf16>
    %c0_209 = arith.constant 0 : index
    %c64_210 = arith.constant 64 : index
    %449 = vector.load %arg8[%c0_209, %c64_210] : memref<16x128xbf16, #tpu.memory_space<vmem>>, vector<16x64xbf16>
    tpu.vector_store %arg8[%c0_209, %c64_210], %448 {strides = array<i32>} : memref<16x128xbf16, #tpu.memory_space<vmem>>, vector<16x64xbf16>,
    %c0_211 = arith.constant 0 : index
    %c0_212 = arith.constant 0 : index
    %450 = vector.load %arg8[%c0_211, %c0_212] : memref<16x128xbf16, #tpu.memory_space<vmem>>, vector<16x128xbf16>
    %cst_213 = arith.constant dense<0.000000e+00> : vector<16x256xf32>
    %451 = tpu.matmul %450, %0, %cst_213 {dimension_numbers = #tpu.dot_dimension_numbers<[1], [0], [0], [1], [0, 0, 1, 1], [], []>} : vector<16x128xbf16>, vector<128x256xbf16>, vector<16x256xf32> -> vector<16x256xf32>
    %452 = vector.extract_strided_slice %451 {offsets = [0, 0], sizes = [16, 192], strides = [1, 1]} : vector<16x256xf32> to vector<16x192xf32>
    %cst_214 = arith.constant 5.000000e-01 : f32
    %453 = vector.broadcast %cst_214 : f32 to vector<16x192xf32>
    %454 = arith.mulf %453, %452 : vector<16x192xf32>
    %455 = math.tanh %454 : vector<16x192xf32>
    %cst_215 = arith.constant 5.000000e-01 : f32
    %456 = vector.broadcast %cst_215 : f32 to vector<16x192xf32>
    %457 = arith.mulf %456, %455 : vector<16x192xf32>
    %cst_216 = arith.constant 5.000000e-01 : f32
    %458 = vector.broadcast %cst_216 : f32 to vector<16x192xf32>
    %459 = arith.addf %457, %458 : vector<16x192xf32>
    %460 = vector.extract_strided_slice %451 {offsets = [0, 192], sizes = [16, 64], strides = [1, 1]} : vector<16x256xf32> to vector<16x64xf32>
    %461 = math.tanh %460 : vector<16x64xf32>
    %462 = vector.extract_strided_slice %459 {offsets = [0, 0], sizes = [16, 64], strides = [1, 1]} : vector<16x192xf32> to vector<16x64xf32>
    %463 = vector.extract_strided_slice %459 {offsets = [0, 64], sizes = [16, 64], strides = [1, 1]} : vector<16x192xf32> to vector<16x64xf32>
    %464 = vector.extract_strided_slice %459 {offsets = [0, 128], sizes = [16, 64], strides = [1, 1]} : vector<16x192xf32> to vector<16x64xf32>
    %465 = arith.mulf %463, %441 : vector<16x64xf32>
    %466 = arith.mulf %462, %461 : vector<16x64xf32>
    %467 = arith.addf %465, %466 : vector<16x64xf32>
    %468 = math.tanh %467 : vector<16x64xf32>
    %469 = arith.mulf %464, %468 : vector<16x64xf32>
    %470 = arith.truncf %469 : vector<16x64xf32> to vector<16x64xbf16>
    %c0_217 = arith.constant 0 : index
    %c0_218 = arith.constant 0 : index
    %471 = vector.load %arg8[%c0_217, %c0_218] : memref<16x128xbf16, #tpu.memory_space<vmem>>, vector<16x64xbf16>
    tpu.vector_store %arg8[%c0_217, %c0_218], %470 {strides = array<i32>} : memref<16x128xbf16, #tpu.memory_space<vmem>>, vector<16x64xbf16>,
    %c18_i32 = arith.constant 18 : i32
    %472 = arith.index_cast %c18_i32 : i32 to index
    %c0_219 = arith.constant 0 : index
    %c0_220 = arith.constant 0 : index
    %473 = vector.load %arg1[%472, %c0_219, %c0_220] : memref<28x16x64xbf16, #tpu.memory_space<vmem>>, vector<1x16x64xbf16>
    %474 = vector.shape_cast %473 : vector<1x16x64xbf16> to vector<16x64xbf16>
    %c0_221 = arith.constant 0 : index
    %c64_222 = arith.constant 64 : index
    %475 = vector.load %arg8[%c0_221, %c64_222] : memref<16x128xbf16, #tpu.memory_space<vmem>>, vector<16x64xbf16>
    tpu.vector_store %arg8[%c0_221, %c64_222], %474 {strides = array<i32>} : memref<16x128xbf16, #tpu.memory_space<vmem>>, vector<16x64xbf16>,
    %c0_223 = arith.constant 0 : index
    %c0_224 = arith.constant 0 : index
    %476 = vector.load %arg8[%c0_223, %c0_224] : memref<16x128xbf16, #tpu.memory_space<vmem>>, vector<16x128xbf16>
    %cst_225 = arith.constant dense<0.000000e+00> : vector<16x256xf32>
    %477 = tpu.matmul %476, %0, %cst_225 {dimension_numbers = #tpu.dot_dimension_numbers<[1], [0], [0], [1], [0, 0, 1, 1], [], []>} : vector<16x128xbf16>, vector<128x256xbf16>, vector<16x256xf32> -> vector<16x256xf32>
    %478 = vector.extract_strided_slice %477 {offsets = [0, 0], sizes = [16, 192], strides = [1, 1]} : vector<16x256xf32> to vector<16x192xf32>
    %cst_226 = arith.constant 5.000000e-01 : f32
    %479 = vector.broadcast %cst_226 : f32 to vector<16x192xf32>
    %480 = arith.mulf %479, %478 : vector<16x192xf32>
    %481 = math.tanh %480 : vector<16x192xf32>
    %cst_227 = arith.constant 5.000000e-01 : f32
    %482 = vector.broadcast %cst_227 : f32 to vector<16x192xf32>
    %483 = arith.mulf %482, %481 : vector<16x192xf32>
    %cst_228 = arith.constant 5.000000e-01 : f32
    %484 = vector.broadcast %cst_228 : f32 to vector<16x192xf32>
    %485 = arith.addf %483, %484 : vector<16x192xf32>
    %486 = vector.extract_strided_slice %477 {offsets = [0, 192], sizes = [16, 64], strides = [1, 1]} : vector<16x256xf32> to vector<16x64xf32>
    %487 = math.tanh %486 : vector<16x64xf32>
    %488 = vector.extract_strided_slice %485 {offsets = [0, 0], sizes = [16, 64], strides = [1, 1]} : vector<16x192xf32> to vector<16x64xf32>
    %489 = vector.extract_strided_slice %485 {offsets = [0, 64], sizes = [16, 64], strides = [1, 1]} : vector<16x192xf32> to vector<16x64xf32>
    %490 = vector.extract_strided_slice %485 {offsets = [0, 128], sizes = [16, 64], strides = [1, 1]} : vector<16x192xf32> to vector<16x64xf32>
    %491 = arith.mulf %489, %467 : vector<16x64xf32>
    %492 = arith.mulf %488, %487 : vector<16x64xf32>
    %493 = arith.addf %491, %492 : vector<16x64xf32>
    %494 = math.tanh %493 : vector<16x64xf32>
    %495 = arith.mulf %490, %494 : vector<16x64xf32>
    %496 = arith.truncf %495 : vector<16x64xf32> to vector<16x64xbf16>
    %c0_229 = arith.constant 0 : index
    %c0_230 = arith.constant 0 : index
    %497 = vector.load %arg8[%c0_229, %c0_230] : memref<16x128xbf16, #tpu.memory_space<vmem>>, vector<16x64xbf16>
    tpu.vector_store %arg8[%c0_229, %c0_230], %496 {strides = array<i32>} : memref<16x128xbf16, #tpu.memory_space<vmem>>, vector<16x64xbf16>,
    %c19_i32 = arith.constant 19 : i32
    %498 = arith.index_cast %c19_i32 : i32 to index
    %c0_231 = arith.constant 0 : index
    %c0_232 = arith.constant 0 : index
    %499 = vector.load %arg1[%498, %c0_231, %c0_232] : memref<28x16x64xbf16, #tpu.memory_space<vmem>>, vector<1x16x64xbf16>
    %500 = vector.shape_cast %499 : vector<1x16x64xbf16> to vector<16x64xbf16>
    %c0_233 = arith.constant 0 : index
    %c64_234 = arith.constant 64 : index
    %501 = vector.load %arg8[%c0_233, %c64_234] : memref<16x128xbf16, #tpu.memory_space<vmem>>, vector<16x64xbf16>
    tpu.vector_store %arg8[%c0_233, %c64_234], %500 {strides = array<i32>} : memref<16x128xbf16, #tpu.memory_space<vmem>>, vector<16x64xbf16>,
    %c0_235 = arith.constant 0 : index
    %c0_236 = arith.constant 0 : index
    %502 = vector.load %arg8[%c0_235, %c0_236] : memref<16x128xbf16, #tpu.memory_space<vmem>>, vector<16x128xbf16>
    %cst_237 = arith.constant dense<0.000000e+00> : vector<16x256xf32>
    %503 = tpu.matmul %502, %0, %cst_237 {dimension_numbers = #tpu.dot_dimension_numbers<[1], [0], [0], [1], [0, 0, 1, 1], [], []>} : vector<16x128xbf16>, vector<128x256xbf16>, vector<16x256xf32> -> vector<16x256xf32>
    %504 = vector.extract_strided_slice %503 {offsets = [0, 0], sizes = [16, 192], strides = [1, 1]} : vector<16x256xf32> to vector<16x192xf32>
    %cst_238 = arith.constant 5.000000e-01 : f32
    %505 = vector.broadcast %cst_238 : f32 to vector<16x192xf32>
    %506 = arith.mulf %505, %504 : vector<16x192xf32>
    %507 = math.tanh %506 : vector<16x192xf32>
    %cst_239 = arith.constant 5.000000e-01 : f32
    %508 = vector.broadcast %cst_239 : f32 to vector<16x192xf32>
    %509 = arith.mulf %508, %507 : vector<16x192xf32>
    %cst_240 = arith.constant 5.000000e-01 : f32
    %510 = vector.broadcast %cst_240 : f32 to vector<16x192xf32>
    %511 = arith.addf %509, %510 : vector<16x192xf32>
    %512 = vector.extract_strided_slice %503 {offsets = [0, 192], sizes = [16, 64], strides = [1, 1]} : vector<16x256xf32> to vector<16x64xf32>
    %513 = math.tanh %512 : vector<16x64xf32>
    %514 = vector.extract_strided_slice %511 {offsets = [0, 0], sizes = [16, 64], strides = [1, 1]} : vector<16x192xf32> to vector<16x64xf32>
    %515 = vector.extract_strided_slice %511 {offsets = [0, 64], sizes = [16, 64], strides = [1, 1]} : vector<16x192xf32> to vector<16x64xf32>
    %516 = vector.extract_strided_slice %511 {offsets = [0, 128], sizes = [16, 64], strides = [1, 1]} : vector<16x192xf32> to vector<16x64xf32>
    %517 = arith.mulf %515, %493 : vector<16x64xf32>
    %518 = arith.mulf %514, %513 : vector<16x64xf32>
    %519 = arith.addf %517, %518 : vector<16x64xf32>
    %520 = math.tanh %519 : vector<16x64xf32>
    %521 = arith.mulf %516, %520 : vector<16x64xf32>
    %522 = arith.truncf %521 : vector<16x64xf32> to vector<16x64xbf16>
    %c0_241 = arith.constant 0 : index
    %c0_242 = arith.constant 0 : index
    %523 = vector.load %arg8[%c0_241, %c0_242] : memref<16x128xbf16, #tpu.memory_space<vmem>>, vector<16x64xbf16>
    tpu.vector_store %arg8[%c0_241, %c0_242], %522 {strides = array<i32>} : memref<16x128xbf16, #tpu.memory_space<vmem>>, vector<16x64xbf16>,
    %c20_i32 = arith.constant 20 : i32
    %524 = arith.index_cast %c20_i32 : i32 to index
    %c0_243 = arith.constant 0 : index
    %c0_244 = arith.constant 0 : index
    %525 = vector.load %arg1[%524, %c0_243, %c0_244] : memref<28x16x64xbf16, #tpu.memory_space<vmem>>, vector<1x16x64xbf16>
    %526 = vector.shape_cast %525 : vector<1x16x64xbf16> to vector<16x64xbf16>
    %c0_245 = arith.constant 0 : index
    %c64_246 = arith.constant 64 : index
    %527 = vector.load %arg8[%c0_245, %c64_246] : memref<16x128xbf16, #tpu.memory_space<vmem>>, vector<16x64xbf16>
    tpu.vector_store %arg8[%c0_245, %c64_246], %526 {strides = array<i32>} : memref<16x128xbf16, #tpu.memory_space<vmem>>, vector<16x64xbf16>,
    %c0_247 = arith.constant 0 : index
    %c0_248 = arith.constant 0 : index
    %528 = vector.load %arg8[%c0_247, %c0_248] : memref<16x128xbf16, #tpu.memory_space<vmem>>, vector<16x128xbf16>
    %cst_249 = arith.constant dense<0.000000e+00> : vector<16x256xf32>
    %529 = tpu.matmul %528, %0, %cst_249 {dimension_numbers = #tpu.dot_dimension_numbers<[1], [0], [0], [1], [0, 0, 1, 1], [], []>} : vector<16x128xbf16>, vector<128x256xbf16>, vector<16x256xf32> -> vector<16x256xf32>
    %530 = vector.extract_strided_slice %529 {offsets = [0, 0], sizes = [16, 192], strides = [1, 1]} : vector<16x256xf32> to vector<16x192xf32>
    %cst_250 = arith.constant 5.000000e-01 : f32
    %531 = vector.broadcast %cst_250 : f32 to vector<16x192xf32>
    %532 = arith.mulf %531, %530 : vector<16x192xf32>
    %533 = math.tanh %532 : vector<16x192xf32>
    %cst_251 = arith.constant 5.000000e-01 : f32
    %534 = vector.broadcast %cst_251 : f32 to vector<16x192xf32>
    %535 = arith.mulf %534, %533 : vector<16x192xf32>
    %cst_252 = arith.constant 5.000000e-01 : f32
    %536 = vector.broadcast %cst_252 : f32 to vector<16x192xf32>
    %537 = arith.addf %535, %536 : vector<16x192xf32>
    %538 = vector.extract_strided_slice %529 {offsets = [0, 192], sizes = [16, 64], strides = [1, 1]} : vector<16x256xf32> to vector<16x64xf32>
    %539 = math.tanh %538 : vector<16x64xf32>
    %540 = vector.extract_strided_slice %537 {offsets = [0, 0], sizes = [16, 64], strides = [1, 1]} : vector<16x192xf32> to vector<16x64xf32>
    %541 = vector.extract_strided_slice %537 {offsets = [0, 64], sizes = [16, 64], strides = [1, 1]} : vector<16x192xf32> to vector<16x64xf32>
    %542 = vector.extract_strided_slice %537 {offsets = [0, 128], sizes = [16, 64], strides = [1, 1]} : vector<16x192xf32> to vector<16x64xf32>
    %543 = arith.mulf %541, %519 : vector<16x64xf32>
    %544 = arith.mulf %540, %539 : vector<16x64xf32>
    %545 = arith.addf %543, %544 : vector<16x64xf32>
    %546 = math.tanh %545 : vector<16x64xf32>
    %547 = arith.mulf %542, %546 : vector<16x64xf32>
    %548 = arith.truncf %547 : vector<16x64xf32> to vector<16x64xbf16>
    %c0_253 = arith.constant 0 : index
    %c0_254 = arith.constant 0 : index
    %549 = vector.load %arg8[%c0_253, %c0_254] : memref<16x128xbf16, #tpu.memory_space<vmem>>, vector<16x64xbf16>
    tpu.vector_store %arg8[%c0_253, %c0_254], %548 {strides = array<i32>} : memref<16x128xbf16, #tpu.memory_space<vmem>>, vector<16x64xbf16>,
    %c21_i32 = arith.constant 21 : i32
    %550 = arith.index_cast %c21_i32 : i32 to index
    %c0_255 = arith.constant 0 : index
    %c0_256 = arith.constant 0 : index
    %551 = vector.load %arg1[%550, %c0_255, %c0_256] : memref<28x16x64xbf16, #tpu.memory_space<vmem>>, vector<1x16x64xbf16>
    %552 = vector.shape_cast %551 : vector<1x16x64xbf16> to vector<16x64xbf16>
    %c0_257 = arith.constant 0 : index
    %c64_258 = arith.constant 64 : index
    %553 = vector.load %arg8[%c0_257, %c64_258] : memref<16x128xbf16, #tpu.memory_space<vmem>>, vector<16x64xbf16>
    tpu.vector_store %arg8[%c0_257, %c64_258], %552 {strides = array<i32>} : memref<16x128xbf16, #tpu.memory_space<vmem>>, vector<16x64xbf16>,
    %c0_259 = arith.constant 0 : index
    %c0_260 = arith.constant 0 : index
    %554 = vector.load %arg8[%c0_259, %c0_260] : memref<16x128xbf16, #tpu.memory_space<vmem>>, vector<16x128xbf16>
    %cst_261 = arith.constant dense<0.000000e+00> : vector<16x256xf32>
    %555 = tpu.matmul %554, %0, %cst_261 {dimension_numbers = #tpu.dot_dimension_numbers<[1], [0], [0], [1], [0, 0, 1, 1], [], []>} : vector<16x128xbf16>, vector<128x256xbf16>, vector<16x256xf32> -> vector<16x256xf32>
    %556 = vector.extract_strided_slice %555 {offsets = [0, 0], sizes = [16, 192], strides = [1, 1]} : vector<16x256xf32> to vector<16x192xf32>
    %cst_262 = arith.constant 5.000000e-01 : f32
    %557 = vector.broadcast %cst_262 : f32 to vector<16x192xf32>
    %558 = arith.mulf %557, %556 : vector<16x192xf32>
    %559 = math.tanh %558 : vector<16x192xf32>
    %cst_263 = arith.constant 5.000000e-01 : f32
    %560 = vector.broadcast %cst_263 : f32 to vector<16x192xf32>
    %561 = arith.mulf %560, %559 : vector<16x192xf32>
    %cst_264 = arith.constant 5.000000e-01 : f32
    %562 = vector.broadcast %cst_264 : f32 to vector<16x192xf32>
    %563 = arith.addf %561, %562 : vector<16x192xf32>
    %564 = vector.extract_strided_slice %555 {offsets = [0, 192], sizes = [16, 64], strides = [1, 1]} : vector<16x256xf32> to vector<16x64xf32>
    %565 = math.tanh %564 : vector<16x64xf32>
    %566 = vector.extract_strided_slice %563 {offsets = [0, 0], sizes = [16, 64], strides = [1, 1]} : vector<16x192xf32> to vector<16x64xf32>
    %567 = vector.extract_strided_slice %563 {offsets = [0, 64], sizes = [16, 64], strides = [1, 1]} : vector<16x192xf32> to vector<16x64xf32>
    %568 = vector.extract_strided_slice %563 {offsets = [0, 128], sizes = [16, 64], strides = [1, 1]} : vector<16x192xf32> to vector<16x64xf32>
    %569 = arith.mulf %567, %545 : vector<16x64xf32>
    %570 = arith.mulf %566, %565 : vector<16x64xf32>
    %571 = arith.addf %569, %570 : vector<16x64xf32>
    %572 = math.tanh %571 : vector<16x64xf32>
    %573 = arith.mulf %568, %572 : vector<16x64xf32>
    %574 = arith.truncf %573 : vector<16x64xf32> to vector<16x64xbf16>
    %c0_265 = arith.constant 0 : index
    %c0_266 = arith.constant 0 : index
    %575 = vector.load %arg8[%c0_265, %c0_266] : memref<16x128xbf16, #tpu.memory_space<vmem>>, vector<16x64xbf16>
    tpu.vector_store %arg8[%c0_265, %c0_266], %574 {strides = array<i32>} : memref<16x128xbf16, #tpu.memory_space<vmem>>, vector<16x64xbf16>,
    %c22_i32 = arith.constant 22 : i32
    %576 = arith.index_cast %c22_i32 : i32 to index
    %c0_267 = arith.constant 0 : index
    %c0_268 = arith.constant 0 : index
    %577 = vector.load %arg1[%576, %c0_267, %c0_268] : memref<28x16x64xbf16, #tpu.memory_space<vmem>>, vector<1x16x64xbf16>
    %578 = vector.shape_cast %577 : vector<1x16x64xbf16> to vector<16x64xbf16>
    %c0_269 = arith.constant 0 : index
    %c64_270 = arith.constant 64 : index
    %579 = vector.load %arg8[%c0_269, %c64_270] : memref<16x128xbf16, #tpu.memory_space<vmem>>, vector<16x64xbf16>
    tpu.vector_store %arg8[%c0_269, %c64_270], %578 {strides = array<i32>} : memref<16x128xbf16, #tpu.memory_space<vmem>>, vector<16x64xbf16>,
    %c0_271 = arith.constant 0 : index
    %c0_272 = arith.constant 0 : index
    %580 = vector.load %arg8[%c0_271, %c0_272] : memref<16x128xbf16, #tpu.memory_space<vmem>>, vector<16x128xbf16>
    %cst_273 = arith.constant dense<0.000000e+00> : vector<16x256xf32>
    %581 = tpu.matmul %580, %0, %cst_273 {dimension_numbers = #tpu.dot_dimension_numbers<[1], [0], [0], [1], [0, 0, 1, 1], [], []>} : vector<16x128xbf16>, vector<128x256xbf16>, vector<16x256xf32> -> vector<16x256xf32>
    %582 = vector.extract_strided_slice %581 {offsets = [0, 0], sizes = [16, 192], strides = [1, 1]} : vector<16x256xf32> to vector<16x192xf32>
    %cst_274 = arith.constant 5.000000e-01 : f32
    %583 = vector.broadcast %cst_274 : f32 to vector<16x192xf32>
    %584 = arith.mulf %583, %582 : vector<16x192xf32>
    %585 = math.tanh %584 : vector<16x192xf32>
    %cst_275 = arith.constant 5.000000e-01 : f32
    %586 = vector.broadcast %cst_275 : f32 to vector<16x192xf32>
    %587 = arith.mulf %586, %585 : vector<16x192xf32>
    %cst_276 = arith.constant 5.000000e-01 : f32
    %588 = vector.broadcast %cst_276 : f32 to vector<16x192xf32>
    %589 = arith.addf %587, %588 : vector<16x192xf32>
    %590 = vector.extract_strided_slice %581 {offsets = [0, 192], sizes = [16, 64], strides = [1, 1]} : vector<16x256xf32> to vector<16x64xf32>
    %591 = math.tanh %590 : vector<16x64xf32>
    %592 = vector.extract_strided_slice %589 {offsets = [0, 0], sizes = [16, 64], strides = [1, 1]} : vector<16x192xf32> to vector<16x64xf32>
    %593 = vector.extract_strided_slice %589 {offsets = [0, 64], sizes = [16, 64], strides = [1, 1]} : vector<16x192xf32> to vector<16x64xf32>
    %594 = vector.extract_strided_slice %589 {offsets = [0, 128], sizes = [16, 64], strides = [1, 1]} : vector<16x192xf32> to vector<16x64xf32>
    %595 = arith.mulf %593, %571 : vector<16x64xf32>
    %596 = arith.mulf %592, %591 : vector<16x64xf32>
    %597 = arith.addf %595, %596 : vector<16x64xf32>
    %598 = math.tanh %597 : vector<16x64xf32>
    %599 = arith.mulf %594, %598 : vector<16x64xf32>
    %600 = arith.truncf %599 : vector<16x64xf32> to vector<16x64xbf16>
    %c0_277 = arith.constant 0 : index
    %c0_278 = arith.constant 0 : index
    %601 = vector.load %arg8[%c0_277, %c0_278] : memref<16x128xbf16, #tpu.memory_space<vmem>>, vector<16x64xbf16>
    tpu.vector_store %arg8[%c0_277, %c0_278], %600 {strides = array<i32>} : memref<16x128xbf16, #tpu.memory_space<vmem>>, vector<16x64xbf16>,
    %c23_i32 = arith.constant 23 : i32
    %602 = arith.index_cast %c23_i32 : i32 to index
    %c0_279 = arith.constant 0 : index
    %c0_280 = arith.constant 0 : index
    %603 = vector.load %arg1[%602, %c0_279, %c0_280] : memref<28x16x64xbf16, #tpu.memory_space<vmem>>, vector<1x16x64xbf16>
    %604 = vector.shape_cast %603 : vector<1x16x64xbf16> to vector<16x64xbf16>
    %c0_281 = arith.constant 0 : index
    %c64_282 = arith.constant 64 : index
    %605 = vector.load %arg8[%c0_281, %c64_282] : memref<16x128xbf16, #tpu.memory_space<vmem>>, vector<16x64xbf16>
    tpu.vector_store %arg8[%c0_281, %c64_282], %604 {strides = array<i32>} : memref<16x128xbf16, #tpu.memory_space<vmem>>, vector<16x64xbf16>,
    %c0_283 = arith.constant 0 : index
    %c0_284 = arith.constant 0 : index
    %606 = vector.load %arg8[%c0_283, %c0_284] : memref<16x128xbf16, #tpu.memory_space<vmem>>, vector<16x128xbf16>
    %cst_285 = arith.constant dense<0.000000e+00> : vector<16x256xf32>
    %607 = tpu.matmul %606, %0, %cst_285 {dimension_numbers = #tpu.dot_dimension_numbers<[1], [0], [0], [1], [0, 0, 1, 1], [], []>} : vector<16x128xbf16>, vector<128x256xbf16>, vector<16x256xf32> -> vector<16x256xf32>
    %608 = vector.extract_strided_slice %607 {offsets = [0, 0], sizes = [16, 192], strides = [1, 1]} : vector<16x256xf32> to vector<16x192xf32>
    %cst_286 = arith.constant 5.000000e-01 : f32
    %609 = vector.broadcast %cst_286 : f32 to vector<16x192xf32>
    %610 = arith.mulf %609, %608 : vector<16x192xf32>
    %611 = math.tanh %610 : vector<16x192xf32>
    %cst_287 = arith.constant 5.000000e-01 : f32
    %612 = vector.broadcast %cst_287 : f32 to vector<16x192xf32>
    %613 = arith.mulf %612, %611 : vector<16x192xf32>
    %cst_288 = arith.constant 5.000000e-01 : f32
    %614 = vector.broadcast %cst_288 : f32 to vector<16x192xf32>
    %615 = arith.addf %613, %614 : vector<16x192xf32>
    %616 = vector.extract_strided_slice %607 {offsets = [0, 192], sizes = [16, 64], strides = [1, 1]} : vector<16x256xf32> to vector<16x64xf32>
    %617 = math.tanh %616 : vector<16x64xf32>
    %618 = vector.extract_strided_slice %615 {offsets = [0, 0], sizes = [16, 64], strides = [1, 1]} : vector<16x192xf32> to vector<16x64xf32>
    %619 = vector.extract_strided_slice %615 {offsets = [0, 64], sizes = [16, 64], strides = [1, 1]} : vector<16x192xf32> to vector<16x64xf32>
    %620 = vector.extract_strided_slice %615 {offsets = [0, 128], sizes = [16, 64], strides = [1, 1]} : vector<16x192xf32> to vector<16x64xf32>
    %621 = arith.mulf %619, %597 : vector<16x64xf32>
    %622 = arith.mulf %618, %617 : vector<16x64xf32>
    %623 = arith.addf %621, %622 : vector<16x64xf32>
    %624 = math.tanh %623 : vector<16x64xf32>
    %625 = arith.mulf %620, %624 : vector<16x64xf32>
    %626 = arith.truncf %625 : vector<16x64xf32> to vector<16x64xbf16>
    %c0_289 = arith.constant 0 : index
    %c0_290 = arith.constant 0 : index
    %627 = vector.load %arg8[%c0_289, %c0_290] : memref<16x128xbf16, #tpu.memory_space<vmem>>, vector<16x64xbf16>
    tpu.vector_store %arg8[%c0_289, %c0_290], %626 {strides = array<i32>} : memref<16x128xbf16, #tpu.memory_space<vmem>>, vector<16x64xbf16>,
    %c24_i32 = arith.constant 24 : i32
    %628 = arith.index_cast %c24_i32 : i32 to index
    %c0_291 = arith.constant 0 : index
    %c0_292 = arith.constant 0 : index
    %629 = vector.load %arg1[%628, %c0_291, %c0_292] : memref<28x16x64xbf16, #tpu.memory_space<vmem>>, vector<1x16x64xbf16>
    %630 = vector.shape_cast %629 : vector<1x16x64xbf16> to vector<16x64xbf16>
    %c0_293 = arith.constant 0 : index
    %c64_294 = arith.constant 64 : index
    %631 = vector.load %arg8[%c0_293, %c64_294] : memref<16x128xbf16, #tpu.memory_space<vmem>>, vector<16x64xbf16>
    tpu.vector_store %arg8[%c0_293, %c64_294], %630 {strides = array<i32>} : memref<16x128xbf16, #tpu.memory_space<vmem>>, vector<16x64xbf16>,
    %c0_295 = arith.constant 0 : index
    %c0_296 = arith.constant 0 : index
    %632 = vector.load %arg8[%c0_295, %c0_296] : memref<16x128xbf16, #tpu.memory_space<vmem>>, vector<16x128xbf16>
    %cst_297 = arith.constant dense<0.000000e+00> : vector<16x256xf32>
    %633 = tpu.matmul %632, %0, %cst_297 {dimension_numbers = #tpu.dot_dimension_numbers<[1], [0], [0], [1], [0, 0, 1, 1], [], []>} : vector<16x128xbf16>, vector<128x256xbf16>, vector<16x256xf32> -> vector<16x256xf32>
    %634 = vector.extract_strided_slice %633 {offsets = [0, 0], sizes = [16, 192], strides = [1, 1]} : vector<16x256xf32> to vector<16x192xf32>
    %cst_298 = arith.constant 5.000000e-01 : f32
    %635 = vector.broadcast %cst_298 : f32 to vector<16x192xf32>
    %636 = arith.mulf %635, %634 : vector<16x192xf32>
    %637 = math.tanh %636 : vector<16x192xf32>
    %cst_299 = arith.constant 5.000000e-01 : f32
    %638 = vector.broadcast %cst_299 : f32 to vector<16x192xf32>
    %639 = arith.mulf %638, %637 : vector<16x192xf32>
    %cst_300 = arith.constant 5.000000e-01 : f32
    %640 = vector.broadcast %cst_300 : f32 to vector<16x192xf32>
    %641 = arith.addf %639, %640 : vector<16x192xf32>
    %642 = vector.extract_strided_slice %633 {offsets = [0, 192], sizes = [16, 64], strides = [1, 1]} : vector<16x256xf32> to vector<16x64xf32>
    %643 = math.tanh %642 : vector<16x64xf32>
    %644 = vector.extract_strided_slice %641 {offsets = [0, 0], sizes = [16, 64], strides = [1, 1]} : vector<16x192xf32> to vector<16x64xf32>
    %645 = vector.extract_strided_slice %641 {offsets = [0, 64], sizes = [16, 64], strides = [1, 1]} : vector<16x192xf32> to vector<16x64xf32>
    %646 = vector.extract_strided_slice %641 {offsets = [0, 128], sizes = [16, 64], strides = [1, 1]} : vector<16x192xf32> to vector<16x64xf32>
    %647 = arith.mulf %645, %623 : vector<16x64xf32>
    %648 = arith.mulf %644, %643 : vector<16x64xf32>
    %649 = arith.addf %647, %648 : vector<16x64xf32>
    %650 = math.tanh %649 : vector<16x64xf32>
    %651 = arith.mulf %646, %650 : vector<16x64xf32>
    %652 = arith.truncf %651 : vector<16x64xf32> to vector<16x64xbf16>
    %c0_301 = arith.constant 0 : index
    %c0_302 = arith.constant 0 : index
    %653 = vector.load %arg8[%c0_301, %c0_302] : memref<16x128xbf16, #tpu.memory_space<vmem>>, vector<16x64xbf16>
    tpu.vector_store %arg8[%c0_301, %c0_302], %652 {strides = array<i32>} : memref<16x128xbf16, #tpu.memory_space<vmem>>, vector<16x64xbf16>,
    %c25_i32 = arith.constant 25 : i32
    %654 = arith.index_cast %c25_i32 : i32 to index
    %c0_303 = arith.constant 0 : index
    %c0_304 = arith.constant 0 : index
    %655 = vector.load %arg1[%654, %c0_303, %c0_304] : memref<28x16x64xbf16, #tpu.memory_space<vmem>>, vector<1x16x64xbf16>
    %656 = vector.shape_cast %655 : vector<1x16x64xbf16> to vector<16x64xbf16>
    %c0_305 = arith.constant 0 : index
    %c64_306 = arith.constant 64 : index
    %657 = vector.load %arg8[%c0_305, %c64_306] : memref<16x128xbf16, #tpu.memory_space<vmem>>, vector<16x64xbf16>
    tpu.vector_store %arg8[%c0_305, %c64_306], %656 {strides = array<i32>} : memref<16x128xbf16, #tpu.memory_space<vmem>>, vector<16x64xbf16>,
    %c0_307 = arith.constant 0 : index
    %c0_308 = arith.constant 0 : index
    %658 = vector.load %arg8[%c0_307, %c0_308] : memref<16x128xbf16, #tpu.memory_space<vmem>>, vector<16x128xbf16>
    %cst_309 = arith.constant dense<0.000000e+00> : vector<16x256xf32>
    %659 = tpu.matmul %658, %0, %cst_309 {dimension_numbers = #tpu.dot_dimension_numbers<[1], [0], [0], [1], [0, 0, 1, 1], [], []>} : vector<16x128xbf16>, vector<128x256xbf16>, vector<16x256xf32> -> vector<16x256xf32>
    %660 = vector.extract_strided_slice %659 {offsets = [0, 0], sizes = [16, 192], strides = [1, 1]} : vector<16x256xf32> to vector<16x192xf32>
    %cst_310 = arith.constant 5.000000e-01 : f32
    %661 = vector.broadcast %cst_310 : f32 to vector<16x192xf32>
    %662 = arith.mulf %661, %660 : vector<16x192xf32>
    %663 = math.tanh %662 : vector<16x192xf32>
    %cst_311 = arith.constant 5.000000e-01 : f32
    %664 = vector.broadcast %cst_311 : f32 to vector<16x192xf32>
    %665 = arith.mulf %664, %663 : vector<16x192xf32>
    %cst_312 = arith.constant 5.000000e-01 : f32
    %666 = vector.broadcast %cst_312 : f32 to vector<16x192xf32>
    %667 = arith.addf %665, %666 : vector<16x192xf32>
    %668 = vector.extract_strided_slice %659 {offsets = [0, 192], sizes = [16, 64], strides = [1, 1]} : vector<16x256xf32> to vector<16x64xf32>
    %669 = math.tanh %668 : vector<16x64xf32>
    %670 = vector.extract_strided_slice %667 {offsets = [0, 0], sizes = [16, 64], strides = [1, 1]} : vector<16x192xf32> to vector<16x64xf32>
    %671 = vector.extract_strided_slice %667 {offsets = [0, 64], sizes = [16, 64], strides = [1, 1]} : vector<16x192xf32> to vector<16x64xf32>
    %672 = vector.extract_strided_slice %667 {offsets = [0, 128], sizes = [16, 64], strides = [1, 1]} : vector<16x192xf32> to vector<16x64xf32>
    %673 = arith.mulf %671, %649 : vector<16x64xf32>
    %674 = arith.mulf %670, %669 : vector<16x64xf32>
    %675 = arith.addf %673, %674 : vector<16x64xf32>
    %676 = math.tanh %675 : vector<16x64xf32>
    %677 = arith.mulf %672, %676 : vector<16x64xf32>
    %678 = arith.truncf %677 : vector<16x64xf32> to vector<16x64xbf16>
    %c0_313 = arith.constant 0 : index
    %c0_314 = arith.constant 0 : index
    %679 = vector.load %arg8[%c0_313, %c0_314] : memref<16x128xbf16, #tpu.memory_space<vmem>>, vector<16x64xbf16>
    tpu.vector_store %arg8[%c0_313, %c0_314], %678 {strides = array<i32>} : memref<16x128xbf16, #tpu.memory_space<vmem>>, vector<16x64xbf16>,
    %c26_i32 = arith.constant 26 : i32
    %680 = arith.index_cast %c26_i32 : i32 to index
    %c0_315 = arith.constant 0 : index
    %c0_316 = arith.constant 0 : index
    %681 = vector.load %arg1[%680, %c0_315, %c0_316] : memref<28x16x64xbf16, #tpu.memory_space<vmem>>, vector<1x16x64xbf16>
    %682 = vector.shape_cast %681 : vector<1x16x64xbf16> to vector<16x64xbf16>
    %c0_317 = arith.constant 0 : index
    %c64_318 = arith.constant 64 : index
    %683 = vector.load %arg8[%c0_317, %c64_318] : memref<16x128xbf16, #tpu.memory_space<vmem>>, vector<16x64xbf16>
    tpu.vector_store %arg8[%c0_317, %c64_318], %682 {strides = array<i32>} : memref<16x128xbf16, #tpu.memory_space<vmem>>, vector<16x64xbf16>,
    %c0_319 = arith.constant 0 : index
    %c0_320 = arith.constant 0 : index
    %684 = vector.load %arg8[%c0_319, %c0_320] : memref<16x128xbf16, #tpu.memory_space<vmem>>, vector<16x128xbf16>
    %cst_321 = arith.constant dense<0.000000e+00> : vector<16x256xf32>
    %685 = tpu.matmul %684, %0, %cst_321 {dimension_numbers = #tpu.dot_dimension_numbers<[1], [0], [0], [1], [0, 0, 1, 1], [], []>} : vector<16x128xbf16>, vector<128x256xbf16>, vector<16x256xf32> -> vector<16x256xf32>
    %686 = vector.extract_strided_slice %685 {offsets = [0, 0], sizes = [16, 192], strides = [1, 1]} : vector<16x256xf32> to vector<16x192xf32>
    %cst_322 = arith.constant 5.000000e-01 : f32
    %687 = vector.broadcast %cst_322 : f32 to vector<16x192xf32>
    %688 = arith.mulf %687, %686 : vector<16x192xf32>
    %689 = math.tanh %688 : vector<16x192xf32>
    %cst_323 = arith.constant 5.000000e-01 : f32
    %690 = vector.broadcast %cst_323 : f32 to vector<16x192xf32>
    %691 = arith.mulf %690, %689 : vector<16x192xf32>
    %cst_324 = arith.constant 5.000000e-01 : f32
    %692 = vector.broadcast %cst_324 : f32 to vector<16x192xf32>
    %693 = arith.addf %691, %692 : vector<16x192xf32>
    %694 = vector.extract_strided_slice %685 {offsets = [0, 192], sizes = [16, 64], strides = [1, 1]} : vector<16x256xf32> to vector<16x64xf32>
    %695 = math.tanh %694 : vector<16x64xf32>
    %696 = vector.extract_strided_slice %693 {offsets = [0, 0], sizes = [16, 64], strides = [1, 1]} : vector<16x192xf32> to vector<16x64xf32>
    %697 = vector.extract_strided_slice %693 {offsets = [0, 64], sizes = [16, 64], strides = [1, 1]} : vector<16x192xf32> to vector<16x64xf32>
    %698 = vector.extract_strided_slice %693 {offsets = [0, 128], sizes = [16, 64], strides = [1, 1]} : vector<16x192xf32> to vector<16x64xf32>
    %699 = arith.mulf %697, %675 : vector<16x64xf32>
    %700 = arith.mulf %696, %695 : vector<16x64xf32>
    %701 = arith.addf %699, %700 : vector<16x64xf32>
    %702 = math.tanh %701 : vector<16x64xf32>
    %703 = arith.mulf %698, %702 : vector<16x64xf32>
    %704 = arith.truncf %703 : vector<16x64xf32> to vector<16x64xbf16>
    %c0_325 = arith.constant 0 : index
    %c0_326 = arith.constant 0 : index
    %705 = vector.load %arg8[%c0_325, %c0_326] : memref<16x128xbf16, #tpu.memory_space<vmem>>, vector<16x64xbf16>
    tpu.vector_store %arg8[%c0_325, %c0_326], %704 {strides = array<i32>} : memref<16x128xbf16, #tpu.memory_space<vmem>>, vector<16x64xbf16>,
    %c27_i32 = arith.constant 27 : i32
    %706 = arith.index_cast %c27_i32 : i32 to index
    %c0_327 = arith.constant 0 : index
    %c0_328 = arith.constant 0 : index
    %707 = vector.load %arg1[%706, %c0_327, %c0_328] : memref<28x16x64xbf16, #tpu.memory_space<vmem>>, vector<1x16x64xbf16>
    %708 = vector.shape_cast %707 : vector<1x16x64xbf16> to vector<16x64xbf16>
    %c0_329 = arith.constant 0 : index
    %c64_330 = arith.constant 64 : index
    %709 = vector.load %arg8[%c0_329, %c64_330] : memref<16x128xbf16, #tpu.memory_space<vmem>>, vector<16x64xbf16>
    tpu.vector_store %arg8[%c0_329, %c64_330], %708 {strides = array<i32>} : memref<16x128xbf16, #tpu.memory_space<vmem>>, vector<16x64xbf16>,
    %c0_331 = arith.constant 0 : index
    %c0_332 = arith.constant 0 : index
    %710 = vector.load %arg8[%c0_331, %c0_332] : memref<16x128xbf16, #tpu.memory_space<vmem>>, vector<16x128xbf16>
    %cst_333 = arith.constant dense<0.000000e+00> : vector<16x256xf32>
    %711 = tpu.matmul %710, %0, %cst_333 {dimension_numbers = #tpu.dot_dimension_numbers<[1], [0], [0], [1], [0, 0, 1, 1], [], []>} : vector<16x128xbf16>, vector<128x256xbf16>, vector<16x256xf32> -> vector<16x256xf32>
    %712 = vector.extract_strided_slice %711 {offsets = [0, 0], sizes = [16, 192], strides = [1, 1]} : vector<16x256xf32> to vector<16x192xf32>
    %cst_334 = arith.constant 5.000000e-01 : f32
    %713 = vector.broadcast %cst_334 : f32 to vector<16x192xf32>
    %714 = arith.mulf %713, %712 : vector<16x192xf32>
    %715 = math.tanh %714 : vector<16x192xf32>
    %cst_335 = arith.constant 5.000000e-01 : f32
    %716 = vector.broadcast %cst_335 : f32 to vector<16x192xf32>
    %717 = arith.mulf %716, %715 : vector<16x192xf32>
    %cst_336 = arith.constant 5.000000e-01 : f32
    %718 = vector.broadcast %cst_336 : f32 to vector<16x192xf32>
    %719 = arith.addf %717, %718 : vector<16x192xf32>
    %720 = vector.extract_strided_slice %711 {offsets = [0, 192], sizes = [16, 64], strides = [1, 1]} : vector<16x256xf32> to vector<16x64xf32>
    %721 = math.tanh %720 : vector<16x64xf32>
    %722 = vector.extract_strided_slice %719 {offsets = [0, 0], sizes = [16, 64], strides = [1, 1]} : vector<16x192xf32> to vector<16x64xf32>
    %723 = vector.extract_strided_slice %719 {offsets = [0, 64], sizes = [16, 64], strides = [1, 1]} : vector<16x192xf32> to vector<16x64xf32>
    %724 = vector.extract_strided_slice %719 {offsets = [0, 128], sizes = [16, 64], strides = [1, 1]} : vector<16x192xf32> to vector<16x64xf32>
    %725 = arith.mulf %723, %701 : vector<16x64xf32>
    %726 = arith.mulf %722, %721 : vector<16x64xf32>
    %727 = arith.addf %725, %726 : vector<16x64xf32>
    %728 = math.tanh %727 : vector<16x64xf32>
    %729 = arith.mulf %724, %728 : vector<16x64xf32>
    %730 = arith.truncf %729 : vector<16x64xf32> to vector<16x64xbf16>
    %c0_337 = arith.constant 0 : index
    %c0_338 = arith.constant 0 : index
    %731 = vector.load %arg8[%c0_337, %c0_338] : memref<16x128xbf16, #tpu.memory_space<vmem>>, vector<16x64xbf16>
    tpu.vector_store %arg8[%c0_337, %c0_338], %730 {strides = array<i32>} : memref<16x128xbf16, #tpu.memory_space<vmem>>, vector<16x64xbf16>,
    %c28_i32 = arith.constant 28 : i32
    %c0_339 = arith.constant 0 : index
    %c0_340 = arith.constant 0 : index
    %732 = vector.load %arg8[%c0_339, %c0_340] : memref<16x128xbf16, #tpu.memory_space<vmem>>, vector<16x64xbf16>
    %c0_341 = arith.constant 0 : index
    %c0_342 = arith.constant 0 : index
    %733 = vector.load %arg3[%c0_341, %c0_342] : memref<64x32xbf16, #tpu.memory_space<vmem>>, vector<64x32xbf16>
    %cst_343 = arith.constant dense<0.000000e+00> : vector<16x32xf32>
    %734 = tpu.matmul %732, %733, %cst_343 {dimension_numbers = #tpu.dot_dimension_numbers<[1], [0], [0], [1], [0, 0, 1, 1], [], []>} : vector<16x64xbf16>, vector<64x32xbf16>, vector<16x32xf32> -> vector<16x32xf32>
    %c0_344 = arith.constant 0 : index
    %c0_345 = arith.constant 0 : index
    %735 = vector.load %arg4[%c0_344, %c0_345] : memref<1x32xf32, #tpu.memory_space<vmem>>, vector<1x32xf32>
    %736 = vector.broadcast %735 : vector<1x32xf32> to vector<16x32xf32>
    %737 = arith.addf %734, %736 : vector<16x32xf32>
    %cst_346 = arith.constant 0.000000e+00 : f32
    %738 = vector.broadcast %cst_346 : f32 to vector<16x32xf32>
    %739 = arith.maximumf %737, %738 : vector<16x32xf32>
    %740 = arith.truncf %739 : vector<16x32xf32> to vector<16x32xbf16>
    %c0_347 = arith.constant 0 : index
    %c0_348 = arith.constant 0 : index
    %741 = vector.load %arg5[%c0_347, %c0_348] : memref<32x128xbf16, #tpu.memory_space<vmem>>, vector<32x128xbf16>
    %cst_349 = arith.constant dense<0.000000e+00> : vector<16x128xf32>
    %742 = tpu.matmul %740, %741, %cst_349 {dimension_numbers = #tpu.dot_dimension_numbers<[1], [0], [0], [1], [0, 0, 1, 1], [], []>} : vector<16x32xbf16>, vector<32x128xbf16>, vector<16x128xf32> -> vector<16x128xf32>
    %c0_350 = arith.constant 0 : index
    %c0_351 = arith.constant 0 : index
    %743 = vector.load %arg6[%c0_350, %c0_351] : memref<1x128xf32, #tpu.memory_space<vmem>>, vector<1x128xf32>
    %744 = vector.broadcast %743 : vector<1x128xf32> to vector<16x128xf32>
    %745 = arith.addf %742, %744 : vector<16x128xf32>
    %cst_352 = arith.constant dense<0xFF800000> : vector<16xf32>
    %746 = vector.multi_reduction <maximumf>, %745, %cst_352 [1] : vector<16x128xf32> to vector<16xf32>
    %747 = vector.shape_cast %746 : vector<16xf32> to vector<16x1xf32>
    %748 = vector.broadcast %747 : vector<16x1xf32> to vector<16x128xf32>
    %749 = arith.subf %745, %748 : vector<16x128xf32>
    %750 = math.exp %749 : vector<16x128xf32>
    %cst_353 = arith.constant dense<0.000000e+00> : vector<16xf32>
    %751 = vector.multi_reduction <add>, %750, %cst_353 [1] : vector<16x128xf32> to vector<16xf32>
    %752 = vector.shape_cast %751 : vector<16xf32> to vector<16x1xf32>
    %753 = math.log %752 : vector<16x1xf32>
    %754 = vector.broadcast %753 : vector<16x1xf32> to vector<16x128xf32>
    %755 = arith.subf %749, %754 : vector<16x128xf32>
    %c0_354 = arith.constant 0 : index
    %c0_355 = arith.constant 0 : index
    %756 = vector.load %arg7[%c0_354, %c0_355] : memref<16x128xf32, #tpu.memory_space<vmem>>, vector<16x128xf32>
    tpu.vector_store %arg7[%c0_354, %c0_355], %755 {strides = array<i32>} : memref<16x128xf32, #tpu.memory_space<vmem>>, vector<16x128xf32>,
    return
  }
  func.func @transform_0(%arg0: i32) -> (i32, i32, i32) {
    %c0_i32 = arith.constant 0 : i32
    %c0_i32_0 = arith.constant 0 : i32
    %c0_i32_1 = arith.constant 0 : i32
    return %c0_i32, %arg0, %c0_i32_0 : i32, i32, i32
  }
  func.func @transform_1(%arg0: i32) -> (i32, i32) {
    %c0_i32 = arith.constant 0 : i32
    %c0_i32_0 = arith.constant 0 : i32
    %c0_i32_1 = arith.constant 0 : i32
    return %c0_i32, %c0_i32_0 : i32, i32
  }
  func.func @transform_2(%arg0: i32) -> (i32, i32) {
    %c0_i32 = arith.constant 0 : i32
    %c0_i32_0 = arith.constant 0 : i32
    %c0_i32_1 = arith.constant 0 : i32
    return %c0_i32, %c0_i32_0 : i32, i32
  }
  func.func @transform_3(%arg0: i32) -> (i32, i32) {
    %c0_i32 = arith.constant 0 : i32
    %c0_i32_0 = arith.constant 0 : i32
    %c0_i32_1 = arith.constant 0 : i32
    return %c0_i32, %c0_i32_0 : i32, i32
  }
  func.func @transform_4(%arg0: i32) -> (i32, i32) {
    %c0_i32 = arith.constant 0 : i32
    %c0_i32_0 = arith.constant 0 : i32
    %c0_i32_1 = arith.constant 0 : i32
    return %c0_i32, %c0_i32_0 : i32, i32
  }
  func.func @transform_5(%arg0: i32) -> (i32, i32) {
    %c0_i32 = arith.constant 0 : i32
    %c0_i32_0 = arith.constant 0 : i32
    %c0_i32_1 = arith.constant 0 : i32
    return %c0_i32, %c0_i32_0 : i32, i32
  }
  func.func @transform_6(%arg0: i32) -> (i32, i32) {
    %c0_i32 = arith.constant 0 : i32
    %c0_i32_0 = arith.constant 0 : i32
    return %arg0, %c0_i32 : i32, i32
  }
}

</mosaic_0001>

<llo_original>
// kernel: tpu_custom_call.1
$region0: #{tpu_custom_call.1}
  #allocation0 [shape = 'u32[]', space=smem, size = 0x4, offset = 0x4, fixed_abs, tag = 'smem constant byte address 0x4 - core index']
  #allocation1 [shape = 'u32[144,128]{1,0:T(1,128)}', space=vmem, size = 0x12000, scoped, tag = 'internal scratch']
  #allocation2 [shape = 'bf16[16,128]{1,0:T(8,128)(2,1)}', space=vmem, size = 0x1000, scoped, tag = 'scratch operand']
  %s0 = inlined_call_operand.hbm [shape: bf16[28,16,64], index: 0, kind: input, shape index: {}]
  %s1 = inlined_call_operand.hbm [shape: bf16[128,256], index: 1, kind: input, shape index: {}]
  %s2 = inlined_call_operand.vmem [shape: bf16[64,32], index: 2, kind: input, shape index: {}]
  %s3 = inlined_call_operand.vmem [shape: f32[1,32], index: 3, kind: input, shape index: {}]
  %s4 = inlined_call_operand.vmem [shape: bf16[32,128], index: 4, kind: input, shape index: {}]
  %s5 = inlined_call_operand.vmem [shape: f32[1,128], index: 5, kind: input, shape index: {}]
  %s6 = inlined_call_operand.hbm [shape: f32[16,128], index: 6, kind: output, shape index: {}]
  %s7 = sld [smem:[#allocation0]]
  $region42: #{tpu_custom_call.1} parent=0
    _
  %s9 = ssub.s32 1, %s7
  %s10 = scalar_select 0, %s9, %s7
  $region1: #{tpu_custom_call.1} parent=0
    #allocation3 [shape = 'u8[114688]{0}', space=vmem, size = 0x1c000, scoped, tag = 'input window, operand 0, single buffered']
    #allocation4 [shape = 's32[1]{0}', space=sflag, size = 0x4, scoped, tag = 'scoped memory for tpu_custom_call.1']
    #allocation5 [shape = 's32[1]{0}', space=sflag, size = 0x4, scoped, tag = 'scoped memory for tpu_custom_call.1']
    #allocation6 [shape = 'u8[65536]{0}', space=vmem, size = 0x10000, scoped, tag = 'input window, operand 1, single buffered']
    #allocation7 [shape = 's32[1]{0}', space=sflag, size = 0x4, scoped, tag = 'scoped memory for tpu_custom_call.1']
    #allocation8 [shape = 'u8[8192]{0}', space=vmem, size = 0x2000, scoped, tag = 'output window, operand 0, single buffered']
    %11 = vsyncpa [#allocation4], 0
    %12 = vsyncpa [#allocation7], 0
    %13 = vsyncpa [#allocation5], 0
    // Predicated region
    $region2: #{tpu_custom_call.1} parent=1 // pred_check
      _
    $region3: #{tpu_custom_call.1} parent=1 // pred_check_branch
      %15 = sbr.rel (0) target = $region5
    $region4: #{tpu_custom_call.1} parent=1 // pred_region
      %s17 = ssub.s32 3584, 3584
      %18 = vsyncadd [#allocation4], %s17
      %s19 = sshll.u32 [#allocation3], 4
      %s20 = int_to_ptr.vmem [resolvable:$true] %s19
      %25 = dma.hbm_to_vmem [thread:$0]  %s0, 3584, %s20, [#allocation4], 64, 64, 4
    $region5: #{tpu_custom_call.1} parent=1 // pred_fallthru
      _
    // Predicated region
    $region6: #{tpu_custom_call.1} parent=1 // pred_check
      _
    $region7: #{tpu_custom_call.1} parent=1 // pred_check_branch
      %27 = sbr.rel (0) target = $region9
    $region8: #{tpu_custom_call.1} parent=1 // pred_region
      %s29 = ssub.s32 2048, 2048
      %30 = vsyncadd [#allocation7], %s29
      %s31 = sshll.u32 [#allocation6], 4
      %s32 = int_to_ptr.vmem [resolvable:$true] %s31
      %37 = dma.hbm_to_vmem [thread:$0]  %s1, 2048, %s32, [#allocation7], 128, 128, 8
    $region9: #{tpu_custom_call.1} parent=1 // pred_fallthru
      _
    // Predicated region
    $region10: #{tpu_custom_call.1} parent=1 // pred_check
      _
    $region11: #{tpu_custom_call.1} parent=1 // pred_check_branch
      %39 = sbr.rel (0) target = $region13
    $region12: #{tpu_custom_call.1} parent=1 // pred_region
      _
    $region13: #{tpu_custom_call.1} parent=1 // pred_fallthru
      _
    // Predicated region
    $region14: #{tpu_custom_call.1} parent=1 // pred_check
      _
    $region15: #{tpu_custom_call.1} parent=1 // pred_check_branch
      %41 = sbr.rel (0) target = $region17
    $region16: #{tpu_custom_call.1} parent=1 // pred_region
      _
    $region17: #{tpu_custom_call.1} parent=1 // pred_fallthru
      _
    // Predicated region
    $region18: #{tpu_custom_call.1} parent=1 // pred_check
      _
    $region19: #{tpu_custom_call.1} parent=1 // pred_check_branch
      %43 = sbr.rel (0) target = $region21
    $region20: #{tpu_custom_call.1} parent=1 // pred_region
      _
    $region21: #{tpu_custom_call.1} parent=1 // pred_fallthru
      _
    // Predicated region
    $region22: #{tpu_custom_call.1} parent=1 // pred_check
      _
    $region23: #{tpu_custom_call.1} parent=1 // pred_check_branch
      %45 = sbr.rel (0) target = $region25
    $region24: #{tpu_custom_call.1} parent=1 // pred_region
      _
    $region25: #{tpu_custom_call.1} parent=1 // pred_fallthru
      _
    // Predicated region
    $region26: #{tpu_custom_call.1} parent=1 // pred_check
      _
    $region27: #{tpu_custom_call.1} parent=1 // pred_check_branch
      %47 = sbr.rel (0) target = $region29
    $region28: #{tpu_custom_call.1} parent=1 // pred_region
      %48 = dma.done [#allocation4], 3584
    $region29: #{tpu_custom_call.1} parent=1 // pred_fallthru
      _
    // Predicated region
    $region30: #{tpu_custom_call.1} parent=1 // pred_check
      _
    $region31: #{tpu_custom_call.1} parent=1 // pred_check_branch
      %50 = sbr.rel (0) target = $region33
    $region32: #{tpu_custom_call.1} parent=1 // pred_region
      %51 = dma.done [#allocation7], 2048
    $region33: #{tpu_custom_call.1} parent=1 // pred_fallthru
      _
    %v53 = vld [vmem:[#allocation6] sm:$0xff]
    %v54 = vld [vmem:[#allocation6 + $0x8] sm:$0xff]
    %v55 = vld [vmem:[#allocation6 + $0x10] sm:$0xff]
    %v56 = vld [vmem:[#allocation6 + $0x18] sm:$0xff]
    %v57 = vld [vmem:[#allocation6 + $0x20] sm:$0xff]
    %v58 = vld [vmem:[#allocation6 + $0x28] sm:$0xff]
    %v59 = vld [vmem:[#allocation6 + $0x30] sm:$0xff]
    %v60 = vld [vmem:[#allocation6 + $0x38] sm:$0xff]
    %v61 = vld [vmem:[#allocation6 + $0x40] sm:$0xff]
    %v62 = vld [vmem:[#allocation6 + $0x48] sm:$0xff]
    %v63 = vld [vmem:[#allocation6 + $0x50] sm:$0xff]
    %v64 = vld [vmem:[#allocation6 + $0x58] sm:$0xff]
    %v65 = vld [vmem:[#allocation6 + $0x60] sm:$0xff]
    %v66 = vld [vmem:[#allocation6 + $0x68] sm:$0xff]
    %v67 = vld [vmem:[#allocation6 + $0x70] sm:$0xff]
    %v68 = vld [vmem:[#allocation6 + $0x78] sm:$0xff]
    %vm69 = vcmask 519168
    %70 = vst.msk [vmem:[#allocation2] sm:$0xf] %vm69, 0
    %71 = vst.msk [vmem:[#allocation2 + $0x4] sm:$0xf] %vm69, 0
    %v72 = vld [vmem:[#allocation3] sm:$0xf]
    %v73 = vld [vmem:[#allocation3 + $0x4] sm:$0xf]
    %76 = vrot.lane.b32.xlu0 %v72, 64
    %v77 = vpop.permute.xlu0 %76
    %78 = vrot.lane.b32.xlu0 %v73, 64
    %v79 = vpop.permute.xlu0 %78
    %vm82 = vcmask 1043968
    %83 = vst.msk [vmem:[#allocation2] sm:$0xf] %vm82, %v77
    %84 = vst.msk [vmem:[#allocation2 + $0x4] sm:$0xf] %vm82, %v79
    %v85 = vld [vmem:[#allocation2] sm:$0xf]
    %v86 = vld [vmem:[#allocation2 + $0x4] sm:$0xf]
    %v89 = vunpack.c.l.b16 %v85
    %v90 = vunpack.c.l.b16 %v86
    %v91 = vpack.c.b16 %v90, %v89
    %v109 = vunpack.c.l.b16 %v53
    %v110 = vunpack.c.h.b16 %v53
    %v111 = vunpack.c.l.b16 %v54
    %v112 = vunpack.c.h.b16 %v54
    %v113 = vunpack.c.l.b16 %v55
    %v114 = vunpack.c.h.b16 %v55
    %v115 = vunpack.c.l.b16 %v56
    %v116 = vunpack.c.h.b16 %v56
    %v117 = vunpack.c.l.b16 %v57
    %v118 = vunpack.c.h.b16 %v57
    %v119 = vunpack.c.l.b16 %v58
    %v120 = vunpack.c.h.b16 %v58
    %v121 = vunpack.c.l.b16 %v59
    %v122 = vunpack.c.h.b16 %v59
    %v123 = vunpack.c.l.b16 %v60
    %v124 = vunpack.c.h.b16 %v60
    %v125 = vunpack.c.l.b16 %v61
    %v126 = vunpack.c.h.b16 %v61
    %v127 = vunpack.c.l.b16 %v62
    %v128 = vunpack.c.h.b16 %v62
    %v129 = vunpack.c.l.b16 %v63
    %v130 = vunpack.c.h.b16 %v63
    %v131 = vunpack.c.l.b16 %v64
    %v132 = vunpack.c.h.b16 %v64
    %v133 = vunpack.c.l.b16 %v65
    %v134 = vunpack.c.h.b16 %v65
    %v135 = vunpack.c.l.b16 %v66
    %v136 = vunpack.c.h.b16 %v66
    %v137 = vunpack.c.l.b16 %v67
    %v138 = vunpack.c.h.b16 %v67
    %v139 = vunpack.c.l.b16 %v68
    %v140 = vunpack.c.h.b16 %v68
    %v141 = vpack.c.b16 %v111, %v109
    %v142 = vpack.c.b16 %v112, %v110
    %v143 = vpack.c.b16 %v115, %v113
    %v144 = vpack.c.b16 %v116, %v114
    %v145 = vpack.c.b16 %v119, %v117
    %v146 = vpack.c.b16 %v120, %v118
    %v147 = vpack.c.b16 %v123, %v121
    %v148 = vpack.c.b16 %v124, %v122
    %v149 = vpack.c.b16 %v127, %v125
    %v150 = vpack.c.b16 %v128, %v126
    %v151 = vpack.c.b16 %v131, %v129
    %v152 = vpack.c.b16 %v132, %v130
    %v153 = vpack.c.b16 %v135, %v133
    %v154 = vpack.c.b16 %v136, %v134
    %v155 = vpack.c.b16 %v139, %v137
    %v156 = vpack.c.b16 %v140, %v138
    %173 = vmatprep.subr.bf16.mxu0 %v156
    %174 = vmatpush1.bf16.msra.mxu0 %v155
    %175 = vmatprep.subr.bf16.mxu0 %v154
    %176 = vmatpush1.bf16.msra.mxu0 %v153
    %177 = vmatprep.subr.bf16.mxu0 %v152
    %178 = vmatpush1.bf16.msra.mxu0 %v151
    %179 = vmatprep.subr.bf16.mxu0 %v150
    %180 = vmatpush1.bf16.msra.mxu0 %v149
    %181 = vmatprep.subr.bf16.mxu0 %v148
    %182 = vmatpush1.bf16.msra.mxu0 %v147
    %183 = vmatprep.subr.bf16.mxu0 %v146
    %184 = vmatpush1.bf16.msra.mxu0 %v145
    %185 = vmatprep.subr.bf16.mxu0 %v144
    %186 = vmatpush1.bf16.msra.mxu0 %v143
    %187 = vmatprep.subr.bf16.mxu0 %v142
    %188 = vmatpush1.bf16.msra.mxu0 %v141
    %189 = vmatprep.subr.bf16.mxu0 0
    %190 = vmatpush2.bf16.msra.mxu0 0
    %191 = vmatprep.subr.bf16.mxu0 0
    %192 = vmatpush2.bf16.msra.mxu0 0
    %193 = vmatprep.subr.bf16.mxu0 0
    %194 = vmatpush2.bf16.msra.mxu0 0
    %195 = vmatprep.subr.bf16.mxu0 0
    %196 = vmatpush2.bf16.msra.mxu0 0
    %197 = vmatprep.subr.bf16.mxu0 0
    %198 = vmatpush2.bf16.msra.mxu0 0
    %199 = vmatprep.subr.bf16.mxu0 0
    %200 = vmatpush2.bf16.msra.mxu0 0
    %201 = vmatprep.subr.bf16.mxu0 0
    %202 = vmatpush2.bf16.msra.mxu0 0
    %203 = vmatprep.subr.bf16.mxu0 0
    %204 = vmatpush2.bf16.msra.mxu0 0
    %205 = vmatprep.mubr.bf16.mxu0 0
    %206 = vmatmul.mubr.bf16.gmra.mxu0 %v91
    %v207 = vpop.f32.mrf.mxu0
    %v208 = vadd.f32 0.0, %v207
    %v209 = vpop.f32.mrf.mxu0
    %v210 = vadd.f32 0.0, %v209
    %v211 = vpop.f32.mrf.mxu0
    %v212 = vadd.f32 0.0, %v211
    %v213 = vpop.f32.mrf.mxu0
    %v214 = vadd.f32 0.0, %v213
    %215 = vdwg.mxu0
    %v216 = vmul.f32 %v208, 0.5
    %v217 = vmul.f32 %v210, 0.5
    %v218 = vmul.f32 %v212, 0.5
    %v219 = vmul.f32 %v214, 0.5
    %v220 = vtanh.pop %v216
    %v221 = vtanh.pop %v217
    %v222 = vtanh.pop %v218
    %v223 = vtanh.pop %v219
    %v224 = vmul.f32 %v220, 0.5
    %v225 = vmul.f32 %v221, 0.5
    %v226 = vmul.f32 %v222, 0.5
    %v227 = vmul.f32 %v223, 0.5
    %v228 = vadd.f32 %v224, 0.5
    %v229 = vadd.f32 %v225, 0.5
    %v230 = vadd.f32 %v226, 0.5
    %v231 = vadd.f32 %v227, 0.5
    %v232 = vtanh.pop %v210
    %v233 = vtanh.pop %v214
    %v234 = vmul.f32 %v228, 0.0
    %v235 = vmul.f32 %v230, 0.0
    %238 = vrot.lane.b32.xlu0 %v232, 64
    %v239 = vpop.permute.xlu0 %238
    %240 = vrot.lane.b32.xlu0 %v233, 64
    %v241 = vpop.permute.xlu0 %240
    %v244 = vmul.f32 %v228, %v239
    %v245 = vmul.f32 %v230, %v241
    %248 = vrot.lane.b32.xlu0 %v244, 64
    %v249 = vpop.permute.xlu0 %248
    %250 = vrot.lane.b32.xlu0 %v245, 64
    %v251 = vpop.permute.xlu0 %250
    %v254 = vadd.f32 %v234, %v249
    %v255 = vadd.f32 %v235, %v251
    %v256 = vtanh.pop %v254
    %v257 = vtanh.pop %v255
    %260 = vrot.lane.b32.xlu0 %v256, 64
    %v261 = vpop.permute.xlu0 %260
    %262 = vrot.lane.b32.xlu0 %v257, 64
    %v263 = vpop.permute.xlu0 %262
    %v266 = vmul.f32 %v229, %v261
    %v267 = vmul.f32 %v231, %v263
    %v268 = vpack.c.bf16 %v267, %v266
    %v270 = vunpack.c.l.b16 %v268
    %v271 = vunpack.c.h.b16 %v268
    %v272 = vpack.c.b16 %v270, %v270
    %v273 = vpack.c.b16 %v271, %v271
    %276 = vst.msk [vmem:[#allocation2] sm:$0xf] %vm69, %v272
    %277 = vst.msk [vmem:[#allocation2 + $0x4] sm:$0xf] %vm69, %v273
    %s278 = scalar_lea.vmem [#allocation3], 8
    %v279 = vld [vmem:[%s278] sm:$0xf]
    %v280 = vld [vmem:[%s278 + $0x4] sm:$0xf]
    %283 = vrot.lane.b32.xlu0 %v279, 64
    %v284 = vpop.permute.xlu0 %283
    %285 = vrot.lane.b32.xlu0 %v280, 64
    %v286 = vpop.permute.xlu0 %285
    %289 = vst.msk [vmem:[#allocation2] sm:$0xf] %vm82, %v284
    %290 = vst.msk [vmem:[#allocation2 + $0x4] sm:$0xf] %vm82, %v286
    %v291 = vld [vmem:[#allocation2] sm:$0xf]
    %v292 = vld [vmem:[#allocation2 + $0x4] sm:$0xf]
    %v295 = vunpack.c.l.b16 %v291
    %v296 = vunpack.c.l.b16 %v292
    %v297 = vpack.c.b16 %v296, %v295
    %299 = vmatprep.subr.bf16.mxu0 %v156
    %300 = vmatpush1.bf16.msra.mxu0 %v155
    %301 = vmatprep.subr.bf16.mxu0 %v154
    %302 = vmatpush1.bf16.msra.mxu0 %v153
    %303 = vmatprep.subr.bf16.mxu0 %v152
    %304 = vmatpush1.bf16.msra.mxu0 %v151
    %305 = vmatprep.subr.bf16.mxu0 %v150
    %306 = vmatpush1.bf16.msra.mxu0 %v149
    %307 = vmatprep.subr.bf16.mxu0 %v148
    %308 = vmatpush1.bf16.msra.mxu0 %v147
    %309 = vmatprep.subr.bf16.mxu0 %v146
    %310 = vmatpush1.bf16.msra.mxu0 %v145
    %311 = vmatprep.subr.bf16.mxu0 %v144
    %312 = vmatpush1.bf16.msra.mxu0 %v143
    %313 = vmatprep.subr.bf16.mxu0 %v142
    %314 = vmatpush1.bf16.msra.mxu0 %v141
    %315 = vmatprep.subr.bf16.mxu0 0
    %316 = vmatpush2.bf16.msra.mxu0 0
    %317 = vmatprep.subr.bf16.mxu0 0
    %318 = vmatpush2.bf16.msra.mxu0 0
    %319 = vmatprep.subr.bf16.mxu0 0
    %320 = vmatpush2.bf16.msra.mxu0 0
    %321 = vmatprep.subr.bf16.mxu0 0
    %322 = vmatpush2.bf16.msra.mxu0 0
    %323 = vmatprep.subr.bf16.mxu0 0
    %324 = vmatpush2.bf16.msra.mxu0 0
    %325 = vmatprep.subr.bf16.mxu0 0
    %326 = vmatpush2.bf16.msra.mxu0 0
    %327 = vmatprep.subr.bf16.mxu0 0
    %328 = vmatpush2.bf16.msra.mxu0 0
    %329 = vmatprep.subr.bf16.mxu0 0
    %330 = vmatpush2.bf16.msra.mxu0 0
    %331 = vmatprep.mubr.bf16.mxu0 0
    %332 = vmatmul.mubr.bf16.gmra.mxu0 %v297
    %v333 = vpop.f32.mrf.mxu0
    %v334 = vadd.f32 0.0, %v333
    %v335 = vpop.f32.mrf.mxu0
    %v336 = vadd.f32 0.0, %v335
    %v337 = vpop.f32.mrf.mxu0
    %v338 = vadd.f32 0.0, %v337
    %v339 = vpop.f32.mrf.mxu0
    %v340 = vadd.f32 0.0, %v339
    %341 = vdwg.mxu0
    %v342 = vmul.f32 %v334, 0.5
    %v343 = vmul.f32 %v336, 0.5
    %v344 = vmul.f32 %v338, 0.5
    %v345 = vmul.f32 %v340, 0.5
    %v346 = vtanh.pop %v342
    %v347 = vtanh.pop %v343
    %v348 = vtanh.pop %v344
    %v349 = vtanh.pop %v345
    %v350 = vmul.f32 %v346, 0.5
    %v351 = vmul.f32 %v347, 0.5
    %v352 = vmul.f32 %v348, 0.5
    %v353 = vmul.f32 %v349, 0.5
    %v354 = vadd.f32 %v350, 0.5
    %v355 = vadd.f32 %v351, 0.5
    %v356 = vadd.f32 %v352, 0.5
    %v357 = vadd.f32 %v353, 0.5
    %v358 = vtanh.pop %v336
    %v359 = vtanh.pop %v340
    %v360 = vmul.f32 %v354, %v254
    %v361 = vmul.f32 %v356, %v255
    %364 = vrot.lane.b32.xlu0 %v358, 64
    %v365 = vpop.permute.xlu0 %364
    %366 = vrot.lane.b32.xlu0 %v359, 64
    %v367 = vpop.permute.xlu0 %366
    %v370 = vmul.f32 %v354, %v365
    %v371 = vmul.f32 %v356, %v367
    %374 = vrot.lane.b32.xlu0 %v370, 64
    %v375 = vpop.permute.xlu0 %374
    %376 = vrot.lane.b32.xlu0 %v371, 64
    %v377 = vpop.permute.xlu0 %376
    %v380 = vadd.f32 %v360, %v375
    %v381 = vadd.f32 %v361, %v377
    %v382 = vtanh.pop %v380
    %v383 = vtanh.pop %v381
    %386 = vrot.lane.b32.xlu0 %v382, 64
    %v387 = vpop.permute.xlu0 %386
    %388 = vrot.lane.b32.xlu0 %v383, 64
    %v389 = vpop.permute.xlu0 %388
    %v392 = vmul.f32 %v355, %v387
    %v393 = vmul.f32 %v357, %v389
    %v394 = vpack.c.bf16 %v393, %v392
    %v396 = vunpack.c.l.b16 %v394
    %v397 = vunpack.c.h.b16 %v394
    %v398 = vpack.c.b16 %v396, %v396
    %v399 = vpack.c.b16 %v397, %v397
    %402 = vst.msk [vmem:[#allocation2] sm:$0xf] %vm69, %v398
    %403 = vst.msk [vmem:[#allocation2 + $0x4] sm:$0xf] %vm69, %v399
    %s404 = scalar_lea.vmem [#allocation3], 16
    %v405 = vld [vmem:[%s404] sm:$0xf]
    %v406 = vld [vmem:[%s404 + $0x4] sm:$0xf]
    %409 = vrot.lane.b32.xlu0 %v405, 64
    %v410 = vpop.permute.xlu0 %409
    %411 = vrot.lane.b32.xlu0 %v406, 64
    %v412 = vpop.permute.xlu0 %411
    %415 = vst.msk [vmem:[#allocation2] sm:$0xf] %vm82, %v410
    %416 = vst.msk [vmem:[#allocation2 + $0x4] sm:$0xf] %vm82, %v412
    %v417 = vld [vmem:[#allocation2] sm:$0xf]
    %v418 = vld [vmem:[#allocation2 + $0x4] sm:$0xf]
    %v421 = vunpack.c.l.b16 %v417
    %v422 = vunpack.c.l.b16 %v418
    %v423 = vpack.c.b16 %v422, %v421
    %425 = vmatprep.subr.bf16.mxu0 %v156
    %426 = vmatpush1.bf16.msra.mxu0 %v155
    %427 = vmatprep.subr.bf16.mxu0 %v154
    %428 = vmatpush1.bf16.msra.mxu0 %v153
    %429 = vmatprep.subr.bf16.mxu0 %v152
    %430 = vmatpush1.bf16.msra.mxu0 %v151
    %431 = vmatprep.subr.bf16.mxu0 %v150
    %432 = vmatpush1.bf16.msra.mxu0 %v149
    %433 = vmatprep.subr.bf16.mxu0 %v148
    %434 = vmatpush1.bf16.msra.mxu0 %v147
    %435 = vmatprep.subr.bf16.mxu0 %v146
    %436 = vmatpush1.bf16.msra.mxu0 %v145
    %437 = vmatprep.subr.bf16.mxu0 %v144
    %438 = vmatpush1.bf16.msra.mxu0 %v143
    %439 = vmatprep.subr.bf16.mxu0 %v142
    %440 = vmatpush1.bf16.msra.mxu0 %v141
    %441 = vmatprep.subr.bf16.mxu0 0
    %442 = vmatpush2.bf16.msra.mxu0 0
    %443 = vmatprep.subr.bf16.mxu0 0
    %444 = vmatpush2.bf16.msra.mxu0 0
    %445 = vmatprep.subr.bf16.mxu0 0
    %446 = vmatpush2.bf16.msra.mxu0 0
    %447 = vmatprep.subr.bf16.mxu0 0
    %448 = vmatpush2.bf16.msra.mxu0 0
    %449 = vmatprep.subr.bf16.mxu0 0
    %450 = vmatpush2.bf16.msra.mxu0 0
    %451 = vmatprep.subr.bf16.mxu0 0
    %452 = vmatpush2.bf16.msra.mxu0 0
    %453 = vmatprep.subr.bf16.mxu0 0
    %454 = vmatpush2.bf16.msra.mxu0 0
    %455 = vmatprep.subr.bf16.mxu0 0
    %456 = vmatpush2.bf16.msra.mxu0 0
    %457 = vmatprep.mubr.bf16.mxu0 0
    %458 = vmatmul.mubr.bf16.gmra.mxu0 %v423
    %v459 = vpop.f32.mrf.mxu0
    %v460 = vadd.f32 0.0, %v459
    %v461 = vpop.f32.mrf.mxu0
    %v462 = vadd.f32 0.0, %v461
    %v463 = vpop.f32.mrf.mxu0
    %v464 = vadd.f32 0.0, %v463
    %v465 = vpop.f32.mrf.mxu0
    %v466 = vadd.f32 0.0, %v465
    %467 = vdwg.mxu0
    %v468 = vmul.f32 %v460, 0.5
    %v469 = vmul.f32 %v462, 0.5
    %v470 = vmul.f32 %v464, 0.5
    %v471 = vmul.f32 %v466, 0.5
    %v472 = vtanh.pop %v468
    %v473 = vtanh.pop %v469
    %v474 = vtanh.pop %v470
    %v475 = vtanh.pop %v471
    %v476 = vmul.f32 %v472, 0.5
    %v477 = vmul.f32 %v473, 0.5
    %v478 = vmul.f32 %v474, 0.5
    %v479 = vmul.f32 %v475, 0.5
    %v480 = vadd.f32 %v476, 0.5
    %v481 = vadd.f32 %v477, 0.5
    %v482 = vadd.f32 %v478, 0.5
    %v483 = vadd.f32 %v479, 0.5
    %v484 = vtanh.pop %v462
    %v485 = vtanh.pop %v466
    %v486 = vmul.f32 %v480, %v380
    %v487 = vmul.f32 %v482, %v381
    %490 = vrot.lane.b32.xlu0 %v484, 64
    %v491 = vpop.permute.xlu0 %490
    %492 = vrot.lane.b32.xlu0 %v485, 64
    %v493 = vpop.permute.xlu0 %492
    %v496 = vmul.f32 %v480, %v491
    %v497 = vmul.f32 %v482, %v493
    %500 = vrot.lane.b32.xlu0 %v496, 64
    %v501 = vpop.permute.xlu0 %500
    %502 = vrot.lane.b32.xlu0 %v497, 64
    %v503 = vpop.permute.xlu0 %502
    %v506 = vadd.f32 %v486, %v501
    %v507 = vadd.f32 %v487, %v503
    %v508 = vtanh.pop %v506
    %v509 = vtanh.pop %v507
    %512 = vrot.lane.b32.xlu0 %v508, 64
    %v513 = vpop.permute.xlu0 %512
    %514 = vrot.lane.b32.xlu0 %v509, 64
    %v515 = vpop.permute.xlu0 %514
    %v518 = vmul.f32 %v481, %v513
    %v519 = vmul.f32 %v483, %v515
    %v520 = vpack.c.bf16 %v519, %v518
    %v522 = vunpack.c.l.b16 %v520
    %v523 = vunpack.c.h.b16 %v520
    %v524 = vpack.c.b16 %v522, %v522
    %v525 = vpack.c.b16 %v523, %v523
    %528 = vst.msk [vmem:[#allocation2] sm:$0xf] %vm69, %v524
    %529 = vst.msk [vmem:[#allocation2 + $0x4] sm:$0xf] %vm69, %v525
    %s530 = scalar_lea.vmem [#allocation3], 24
    %v531 = vld [vmem:[%s530] sm:$0xf]
    %v532 = vld [vmem:[%s530 + $0x4] sm:$0xf]
    %535 = vrot.lane.b32.xlu0 %v531, 64
    %v536 = vpop.permute.xlu0 %535
    %537 = vrot.lane.b32.xlu0 %v532, 64
    %v538 = vpop.permute.xlu0 %537
    %541 = vst.msk [vmem:[#allocation2] sm:$0xf] %vm82, %v536
    %542 = vst.msk [vmem:[#allocation2 + $0x4] sm:$0xf] %vm82, %v538
    %v543 = vld [vmem:[#allocation2] sm:$0xf]
    %v544 = vld [vmem:[#allocation2 + $0x4] sm:$0xf]
    %v547 = vunpack.c.l.b16 %v543
    %v548 = vunpack.c.l.b16 %v544
    %v549 = vpack.c.b16 %v548, %v547
    %551 = vmatprep.subr.bf16.mxu0 %v156
    %552 = vmatpush1.bf16.msra.mxu0 %v155
    %553 = vmatprep.subr.bf16.mxu0 %v154
    %554 = vmatpush1.bf16.msra.mxu0 %v153
    %555 = vmatprep.subr.bf16.mxu0 %v152
    %556 = vmatpush1.bf16.msra.mxu0 %v151
    %557 = vmatprep.subr.bf16.mxu0 %v150
    %558 = vmatpush1.bf16.msra.mxu0 %v149
    %559 = vmatprep.subr.bf16.mxu0 %v148
    %560 = vmatpush1.bf16.msra.mxu0 %v147
    %561 = vmatprep.subr.bf16.mxu0 %v146
    %562 = vmatpush1.bf16.msra.mxu0 %v145
    %563 = vmatprep.subr.bf16.mxu0 %v144
    %564 = vmatpush1.bf16.msra.mxu0 %v143
    %565 = vmatprep.subr.bf16.mxu0 %v142
    %566 = vmatpush1.bf16.msra.mxu0 %v141
    %567 = vmatprep.subr.bf16.mxu0 0
    %568 = vmatpush2.bf16.msra.mxu0 0
    %569 = vmatprep.subr.bf16.mxu0 0
    %570 = vmatpush2.bf16.msra.mxu0 0
    %571 = vmatprep.subr.bf16.mxu0 0
    %572 = vmatpush2.bf16.msra.mxu0 0
    %573 = vmatprep.subr.bf16.mxu0 0
    %574 = vmatpush2.bf16.msra.mxu0 0
    %575 = vmatprep.subr.bf16.mxu0 0
    %576 = vmatpush2.bf16.msra.mxu0 0
    %577 = vmatprep.subr.bf16.mxu0 0
    %578 = vmatpush2.bf16.msra.mxu0 0
    %579 = vmatprep.subr.bf16.mxu0 0
    %580 = vmatpush2.bf16.msra.mxu0 0
    %581 = vmatprep.subr.bf16.mxu0 0
    %582 = vmatpush2.bf16.msra.mxu0 0
    %583 = vmatprep.mubr.bf16.mxu0 0
    %584 = vmatmul.mubr.bf16.gmra.mxu0 %v549
    %v585 = vpop.f32.mrf.mxu0
    %v586 = vadd.f32 0.0, %v585
    %v587 = vpop.f32.mrf.mxu0
    %v588 = vadd.f32 0.0, %v587
    %v589 = vpop.f32.mrf.mxu0
    %v590 = vadd.f32 0.0, %v589
    %v591 = vpop.f32.mrf.mxu0
    %v592 = vadd.f32 0.0, %v591
    %593 = vdwg.mxu0
    %v594 = vmul.f32 %v586, 0.5
    %v595 = vmul.f32 %v588, 0.5
    %v596 = vmul.f32 %v590, 0.5
    %v597 = vmul.f32 %v592, 0.5
    %v598 = vtanh.pop %v594
    %v599 = vtanh.pop %v595
    %v600 = vtanh.pop %v596
    %v601 = vtanh.pop %v597
    %v602 = vmul.f32 %v598, 0.5
    %v603 = vmul.f32 %v599, 0.5
    %v604 = vmul.f32 %v600, 0.5
    %v605 = vmul.f32 %v601, 0.5
    %v606 = vadd.f32 %v602, 0.5
    %v607 = vadd.f32 %v603, 0.5
    %v608 = vadd.f32 %v604, 0.5
    %v609 = vadd.f32 %v605, 0.5
    %v610 = vtanh.pop %v588
    %v611 = vtanh.pop %v592
    %v612 = vmul.f32 %v606, %v506
    %v613 = vmul.f32 %v608, %v507
    %616 = vrot.lane.b32.xlu0 %v610, 64
    %v617 = vpop.permute.xlu0 %616
    %618 = vrot.lane.b32.xlu0 %v611, 64
    %v619 = vpop.permute.xlu0 %618
    %v622 = vmul.f32 %v606, %v617
    %v623 = vmul.f32 %v608, %v619
    %626 = vrot.lane.b32.xlu0 %v622, 64
    %v627 = vpop.permute.xlu0 %626
    %628 = vrot.lane.b32.xlu0 %v623, 64
    %v629 = vpop.permute.xlu0 %628
    %v632 = vadd.f32 %v612, %v627
    %v633 = vadd.f32 %v613, %v629
    %v634 = vtanh.pop %v632
    %v635 = vtanh.pop %v633
    %638 = vrot.lane.b32.xlu0 %v634, 64
    %v639 = vpop.permute.xlu0 %638
    %640 = vrot.lane.b32.xlu0 %v635, 64
    %v641 = vpop.permute.xlu0 %640
    %v644 = vmul.f32 %v607, %v639
    %v645 = vmul.f32 %v609, %v641
    %v646 = vpack.c.bf16 %v645, %v644
    %v648 = vunpack.c.l.b16 %v646
    %v649 = vunpack.c.h.b16 %v646
    %v650 = vpack.c.b16 %v648, %v648
    %v651 = vpack.c.b16 %v649, %v649
    %654 = vst.msk [vmem:[#allocation2] sm:$0xf] %vm69, %v650
    %655 = vst.msk [vmem:[#allocation2 + $0x4] sm:$0xf] %vm69, %v651
    %s656 = scalar_lea.vmem [#allocation3], 32
    %v657 = vld [vmem:[%s656] sm:$0xf]
    %v658 = vld [vmem:[%s656 + $0x4] sm:$0xf]
    %661 = vrot.lane.b32.xlu0 %v657, 64
    %v662 = vpop.permute.xlu0 %661
    %663 = vrot.lane.b32.xlu0 %v658, 64
    %v664 = vpop.permute.xlu0 %663
    %667 = vst.msk [vmem:[#allocation2] sm:$0xf] %vm82, %v662
    %668 = vst.msk [vmem:[#allocation2 + $0x4] sm:$0xf] %vm82, %v664
    %v669 = vld [vmem:[#allocation2] sm:$0xf]
    %v670 = vld [vmem:[#allocation2 + $0x4] sm:$0xf]
    %v673 = vunpack.c.l.b16 %v669
    %v674 = vunpack.c.l.b16 %v670
    %v675 = vpack.c.b16 %v674, %v673
    %677 = vmatprep.subr.bf16.mxu0 %v156
    %678 = vmatpush1.bf16.msra.mxu0 %v155
    %679 = vmatprep.subr.bf16.mxu0 %v154
    %680 = vmatpush1.bf16.msra.mxu0 %v153
    %681 = vmatprep.subr.bf16.mxu0 %v152
    %682 = vmatpush1.bf16.msra.mxu0 %v151
    %683 = vmatprep.subr.bf16.mxu0 %v150
    %684 = vmatpush1.bf16.msra.mxu0 %v149
    %685 = vmatprep.subr.bf16.mxu0 %v148
    %686 = vmatpush1.bf16.msra.mxu0 %v147
    %687 = vmatprep.subr.bf16.mxu0 %v146
    %688 = vmatpush1.bf16.msra.mxu0 %v145
    %689 = vmatprep.subr.bf16.mxu0 %v144
    %690 = vmatpush1.bf16.msra.mxu0 %v143
    %691 = vmatprep.subr.bf16.mxu0 %v142
    %692 = vmatpush1.bf16.msra.mxu0 %v141
    %693 = vmatprep.subr.bf16.mxu0 0
    %694 = vmatpush2.bf16.msra.mxu0 0
    %695 = vmatprep.subr.bf16.mxu0 0
    %696 = vmatpush2.bf16.msra.mxu0 0
    %697 = vmatprep.subr.bf16.mxu0 0
    %698 = vmatpush2.bf16.msra.mxu0 0
    %699 = vmatprep.subr.bf16.mxu0 0
    %700 = vmatpush2.bf16.msra.mxu0 0
    %701 = vmatprep.subr.bf16.mxu0 0
    %702 = vmatpush2.bf16.msra.mxu0 0
    %703 = vmatprep.subr.bf16.mxu0 0
    %704 = vmatpush2.bf16.msra.mxu0 0
    %705 = vmatprep.subr.bf16.mxu0 0
    %706 = vmatpush2.bf16.msra.mxu0 0
    %707 = vmatprep.subr.bf16.mxu0 0
    %708 = vmatpush2.bf16.msra.mxu0 0
    %709 = vmatprep.mubr.bf16.mxu0 0
    %710 = vmatmul.mubr.bf16.gmra.mxu0 %v675
    %v711 = vpop.f32.mrf.mxu0
    %v712 = vadd.f32 0.0, %v711
    %v713 = vpop.f32.mrf.mxu0
    %v714 = vadd.f32 0.0, %v713
    %v715 = vpop.f32.mrf.mxu0
    %v716 = vadd.f32 0.0, %v715
    %v717 = vpop.f32.mrf.mxu0
    %v718 = vadd.f32 0.0, %v717
    %719 = vdwg.mxu0
    %v720 = vmul.f32 %v712, 0.5
    %v721 = vmul.f32 %v714, 0.5
    %v722 = vmul.f32 %v716, 0.5
    %v723 = vmul.f32 %v718, 0.5
    %v724 = vtanh.pop %v720
    %v725 = vtanh.pop %v721
    %v726 = vtanh.pop %v722
    %v727 = vtanh.pop %v723
    %v728 = vmul.f32 %v724, 0.5
    %v729 = vmul.f32 %v725, 0.5
    %v730 = vmul.f32 %v726, 0.5
    %v731 = vmul.f32 %v727, 0.5
    %v732 = vadd.f32 %v728, 0.5
    %v733 = vadd.f32 %v729, 0.5
    %v734 = vadd.f32 %v730, 0.5
    %v735 = vadd.f32 %v731, 0.5
    %v736 = vtanh.pop %v714
    %v737 = vtanh.pop %v718
    %v738 = vmul.f32 %v732, %v632
    %v739 = vmul.f32 %v734, %v633
    %742 = vrot.lane.b32.xlu0 %v736, 64
    %v743 = vpop.permute.xlu0 %742
    %744 = vrot.lane.b32.xlu0 %v737, 64
    %v745 = vpop.permute.xlu0 %744
    %v748 = vmul.f32 %v732, %v743
    %v749 = vmul.f32 %v734, %v745
    %752 = vrot.lane.b32.xlu0 %v748, 64
    %v753 = vpop.permute.xlu0 %752
    %754 = vrot.lane.b32.xlu0 %v749, 64
    %v755 = vpop.permute.xlu0 %754
    %v758 = vadd.f32 %v738, %v753
    %v759 = vadd.f32 %v739, %v755
    %v760 = vtanh.pop %v758
    %v761 = vtanh.pop %v759
    %764 = vrot.lane.b32.xlu0 %v760, 64
    %v765 = vpop.permute.xlu0 %764
    %766 = vrot.lane.b32.xlu0 %v761, 64
    %v767 = vpop.permute.xlu0 %766
    %v770 = vmul.f32 %v733, %v765
    %v771 = vmul.f32 %v735, %v767
    %v772 = vpack.c.bf16 %v771, %v770
    %v774 = vunpack.c.l.b16 %v772
    %v775 = vunpack.c.h.b16 %v772
    %v776 = vpack.c.b16 %v774, %v774
    %v777 = vpack.c.b16 %v775, %v775
    %780 = vst.msk [vmem:[#allocation2] sm:$0xf] %vm69, %v776
    %781 = vst.msk [vmem:[#allocation2 + $0x4] sm:$0xf] %vm69, %v777
    %s782 = scalar_lea.vmem [#allocation3], 40
    %v783 = vld [vmem:[%s782] sm:$0xf]
    %v784 = vld [vmem:[%s782 + $0x4] sm:$0xf]
    %787 = vrot.lane.b32.xlu0 %v783, 64
    %v788 = vpop.permute.xlu0 %787
    %789 = vrot.lane.b32.xlu0 %v784, 64
    %v790 = vpop.permute.xlu0 %789
    %793 = vst.msk [vmem:[#allocation2] sm:$0xf] %vm82, %v788
    %794 = vst.msk [vmem:[#allocation2 + $0x4] sm:$0xf] %vm82, %v790
    %v795 = vld [vmem:[#allocation2] sm:$0xf]
    %v796 = vld [vmem:[#allocation2 + $0x4] sm:$0xf]
    %v799 = vunpack.c.l.b16 %v795
    %v800 = vunpack.c.l.b16 %v796
    %v801 = vpack.c.b16 %v800, %v799
    %803 = vmatprep.subr.bf16.mxu0 %v156
    %804 = vmatpush1.bf16.msra.mxu0 %v155
    %805 = vmatprep.subr.bf16.mxu0 %v154
    %806 = vmatpush1.bf16.msra.mxu0 %v153
    %807 = vmatprep.subr.bf16.mxu0 %v152
    %808 = vmatpush1.bf16.msra.mxu0 %v151
    %809 = vmatprep.subr.bf16.mxu0 %v150
    %810 = vmatpush1.bf16.msra.mxu0 %v149
    %811 = vmatprep.subr.bf16.mxu0 %v148
    %812 = vmatpush1.bf16.msra.mxu0 %v147
    %813 = vmatprep.subr.bf16.mxu0 %v146
    %814 = vmatpush1.bf16.msra.mxu0 %v145
    %815 = vmatprep.subr.bf16.mxu0 %v144
    %816 = vmatpush1.bf16.msra.mxu0 %v143
    %817 = vmatprep.subr.bf16.mxu0 %v142
    %818 = vmatpush1.bf16.msra.mxu0 %v141
    %819 = vmatprep.subr.bf16.mxu0 0
    %820 = vmatpush2.bf16.msra.mxu0 0
    %821 = vmatprep.subr.bf16.mxu0 0
    %822 = vmatpush2.bf16.msra.mxu0 0
    %823 = vmatprep.subr.bf16.mxu0 0
    %824 = vmatpush2.bf16.msra.mxu0 0
    %825 = vmatprep.subr.bf16.mxu0 0
    %826 = vmatpush2.bf16.msra.mxu0 0
    %827 = vmatprep.subr.bf16.mxu0 0
    %828 = vmatpush2.bf16.msra.mxu0 0
    %829 = vmatprep.subr.bf16.mxu0 0
    %830 = vmatpush2.bf16.msra.mxu0 0
    %831 = vmatprep.subr.bf16.mxu0 0
    %832 = vmatpush2.bf16.msra.mxu0 0
    %833 = vmatprep.subr.bf16.mxu0 0
    %834 = vmatpush2.bf16.msra.mxu0 0
    %835 = vmatprep.mubr.bf16.mxu0 0
    %836 = vmatmul.mubr.bf16.gmra.mxu0 %v801
    %v837 = vpop.f32.mrf.mxu0
    %v838 = vadd.f32 0.0, %v837
    %v839 = vpop.f32.mrf.mxu0
    %v840 = vadd.f32 0.0, %v839
    %v841 = vpop.f32.mrf.mxu0
    %v842 = vadd.f32 0.0, %v841
    %v843 = vpop.f32.mrf.mxu0
    %v844 = vadd.f32 0.0, %v843
    %845 = vdwg.mxu0
    %v846 = vmul.f32 %v838, 0.5
    %v847 = vmul.f32 %v840, 0.5
    %v848 = vmul.f32 %v842, 0.5
    %v849 = vmul.f32 %v844, 0.5
    %v850 = vtanh.pop %v846
    %v851 = vtanh.pop %v847
    %v852 = vtanh.pop %v848
    %v853 = vtanh.pop %v849
    %v854 = vmul.f32 %v850, 0.5
    %v855 = vmul.f32 %v851, 0.5
    %v856 = vmul.f32 %v852, 0.5
    %v857 = vmul.f32 %v853, 0.5
    %v858 = vadd.f32 %v854, 0.5
    %v859 = vadd.f32 %v855, 0.5
    %v860 = vadd.f32 %v856, 0.5
    %v861 = vadd.f32 %v857, 0.5
    %v862 = vtanh.pop %v840
    %v863 = vtanh.pop %v844
    %v864 = vmul.f32 %v858, %v758
    %v865 = vmul.f32 %v860, %v759
    %868 = vrot.lane.b32.xlu0 %v862, 64
    %v869 = vpop.permute.xlu0 %868
    %870 = vrot.lane.b32.xlu0 %v863, 64
    %v871 = vpop.permute.xlu0 %870
    %v874 = vmul.f32 %v858, %v869
    %v875 = vmul.f32 %v860, %v871
    %878 = vrot.lane.b32.xlu0 %v874, 64
    %v879 = vpop.permute.xlu0 %878
    %880 = vrot.lane.b32.xlu0 %v875, 64
    %v881 = vpop.permute.xlu0 %880
    %v884 = vadd.f32 %v864, %v879
    %v885 = vadd.f32 %v865, %v881
    %v886 = vtanh.pop %v884
    %v887 = vtanh.pop %v885
    %890 = vrot.lane.b32.xlu0 %v886, 64
    %v891 = vpop.permute.xlu0 %890
    %892 = vrot.lane.b32.xlu0 %v887, 64
    %v893 = vpop.permute.xlu0 %892
    %v896 = vmul.f32 %v859, %v891
    %v897 = vmul.f32 %v861, %v893
    %v898 = vpack.c.bf16 %v897, %v896
    %v900 = vunpack.c.l.b16 %v898
    %v901 = vunpack.c.h.b16 %v898
    %v902 = vpack.c.b16 %v900, %v900
    %v903 = vpack.c.b16 %v901, %v901
    %906 = vst.msk [vmem:[#allocation2] sm:$0xf] %vm69, %v902
    %907 = vst.msk [vmem:[#allocation2 + $0x4] sm:$0xf] %vm69, %v903
    %s908 = scalar_lea.vmem [#allocation3], 48
    %v909 = vld [vmem:[%s908] sm:$0xf]
    %v910 = vld [vmem:[%s908 + $0x4] sm:$0xf]
    %913 = vrot.lane.b32.xlu0 %v909, 64
    %v914 = vpop.permute.xlu0 %913
    %915 = vrot.lane.b32.xlu0 %v910, 64
    %v916 = vpop.permute.xlu0 %915
    %919 = vst.msk [vmem:[#allocation2] sm:$0xf] %vm82, %v914
    %920 = vst.msk [vmem:[#allocation2 + $0x4] sm:$0xf] %vm82, %v916
    %v921 = vld [vmem:[#allocation2] sm:$0xf]
    %v922 = vld [vmem:[#allocation2 + $0x4] sm:$0xf]
    %v925 = vunpack.c.l.b16 %v921
    %v926 = vunpack.c.l.b16 %v922
    %v927 = vpack.c.b16 %v926, %v925
    %929 = vmatprep.subr.bf16.mxu0 %v156
    %930 = vmatpush1.bf16.msra.mxu0 %v155
    %931 = vmatprep.subr.bf16.mxu0 %v154
    %932 = vmatpush1.bf16.msra.mxu0 %v153
    %933 = vmatprep.subr.bf16.mxu0 %v152
    %934 = vmatpush1.bf16.msra.mxu0 %v151
    %935 = vmatprep.subr.bf16.mxu0 %v150
    %936 = vmatpush1.bf16.msra.mxu0 %v149
    %937 = vmatprep.subr.bf16.mxu0 %v148
    %938 = vmatpush1.bf16.msra.mxu0 %v147
    %939 = vmatprep.subr.bf16.mxu0 %v146
    %940 = vmatpush1.bf16.msra.mxu0 %v145
    %941 = vmatprep.subr.bf16.mxu0 %v144
    %942 = vmatpush1.bf16.msra.mxu0 %v143
    %943 = vmatprep.subr.bf16.mxu0 %v142
    %944 = vmatpush1.bf16.msra.mxu0 %v141
    %945 = vmatprep.subr.bf16.mxu0 0
    %946 = vmatpush2.bf16.msra.mxu0 0
    %947 = vmatprep.subr.bf16.mxu0 0
    %948 = vmatpush2.bf16.msra.mxu0 0
    %949 = vmatprep.subr.bf16.mxu0 0
    %950 = vmatpush2.bf16.msra.mxu0 0
    %951 = vmatprep.subr.bf16.mxu0 0
    %952 = vmatpush2.bf16.msra.mxu0 0
    %953 = vmatprep.subr.bf16.mxu0 0
    %954 = vmatpush2.bf16.msra.mxu0 0
    %955 = vmatprep.subr.bf16.mxu0 0
    %956 = vmatpush2.bf16.msra.mxu0 0
    %957 = vmatprep.subr.bf16.mxu0 0
    %958 = vmatpush2.bf16.msra.mxu0 0
    %959 = vmatprep.subr.bf16.mxu0 0
    %960 = vmatpush2.bf16.msra.mxu0 0
    %961 = vmatprep.mubr.bf16.mxu0 0
    %962 = vmatmul.mubr.bf16.gmra.mxu0 %v927
    %v963 = vpop.f32.mrf.mxu0
    %v964 = vadd.f32 0.0, %v963
    %v965 = vpop.f32.mrf.mxu0
    %v966 = vadd.f32 0.0, %v965
    %v967 = vpop.f32.mrf.mxu0
    %v968 = vadd.f32 0.0, %v967
    %v969 = vpop.f32.mrf.mxu0
    %v970 = vadd.f32 0.0, %v969
    %971 = vdwg.mxu0
    %v972 = vmul.f32 %v964, 0.5
    %v973 = vmul.f32 %v966, 0.5
    %v974 = vmul.f32 %v968, 0.5
    %v975 = vmul.f32 %v970, 0.5
    %v976 = vtanh.pop %v972
    %v977 = vtanh.pop %v973
    %v978 = vtanh.pop %v974
    %v979 = vtanh.pop %v975
    %v980 = vmul.f32 %v976, 0.5
    %v981 = vmul.f32 %v977, 0.5
    %v982 = vmul.f32 %v978, 0.5
    %v983 = vmul.f32 %v979, 0.5
    %v984 = vadd.f32 %v980, 0.5
    %v985 = vadd.f32 %v981, 0.5
    %v986 = vadd.f32 %v982, 0.5
    %v987 = vadd.f32 %v983, 0.5
    %v988 = vtanh.pop %v966
    %v989 = vtanh.pop %v970
    %v990 = vmul.f32 %v984, %v884
    %v991 = vmul.f32 %v986, %v885
    %994 = vrot.lane.b32.xlu0 %v988, 64
    %v995 = vpop.permute.xlu0 %994
    %996 = vrot.lane.b32.xlu0 %v989, 64
    %v997 = vpop.permute.xlu0 %996
    %v1000 = vmul.f32 %v984, %v995
    %v1001 = vmul.f32 %v986, %v997
    %1004 = vrot.lane.b32.xlu0 %v1000, 64
    %v1005 = vpop.permute.xlu0 %1004
    %1006 = vrot.lane.b32.xlu0 %v1001, 64
    %v1007 = vpop.permute.xlu0 %1006
    %v1010 = vadd.f32 %v990, %v1005
    %v1011 = vadd.f32 %v991, %v1007
    %v1012 = vtanh.pop %v1010
    %v1013 = vtanh.pop %v1011
    %1016 = vrot.lane.b32.xlu0 %v1012, 64
    %v1017 = vpop.permute.xlu0 %1016
    %1018 = vrot.lane.b32.xlu0 %v1013, 64
    %v1019 = vpop.permute.xlu0 %1018
    %v1022 = vmul.f32 %v985, %v1017
    %v1023 = vmul.f32 %v987, %v1019
    %v1024 = vpack.c.bf16 %v1023, %v1022
    %v1026 = vunpack.c.l.b16 %v1024
    %v1027 = vunpack.c.h.b16 %v1024
    %v1028 = vpack.c.b16 %v1026, %v1026
    %v1029 = vpack.c.b16 %v1027, %v1027
    %1032 = vst.msk [vmem:[#allocation2] sm:$0xf] %vm69, %v1028
    %1033 = vst.msk [vmem:[#allocation2 + $0x4] sm:$0xf] %vm69, %v1029
    %s1034 = scalar_lea.vmem [#allocation3], 56
    %v1035 = vld [vmem:[%s1034] sm:$0xf]
    %v1036 = vld [vmem:[%s1034 + $0x4] sm:$0xf]
    %1039 = vrot.lane.b32.xlu0 %v1035, 64
    %v1040 = vpop.permute.xlu0 %1039
    %1041 = vrot.lane.b32.xlu0 %v1036, 64
    %v1042 = vpop.permute.xlu0 %1041
    %1045 = vst.msk [vmem:[#allocation2] sm:$0xf] %vm82, %v1040
    %1046 = vst.msk [vmem:[#allocation2 + $0x4] sm:$0xf] %vm82, %v1042
    %v1047 = vld [vmem:[#allocation2] sm:$0xf]
    %v1048 = vld [vmem:[#allocation2 + $0x4] sm:$0xf]
    %v1051 = vunpack.c.l.b16 %v1047
    %v1052 = vunpack.c.l.b16 %v1048
    %v1053 = vpack.c.b16 %v1052, %v1051
    %1055 = vmatprep.subr.bf16.mxu0 %v156
    %1056 = vmatpush1.bf16.msra.mxu0 %v155
    %1057 = vmatprep.subr.bf16.mxu0 %v154
    %1058 = vmatpush1.bf16.msra.mxu0 %v153
    %1059 = vmatprep.subr.bf16.mxu0 %v152
    %1060 = vmatpush1.bf16.msra.mxu0 %v151
    %1061 = vmatprep.subr.bf16.mxu0 %v150
    %1062 = vmatpush1.bf16.msra.mxu0 %v149
    %1063 = vmatprep.subr.bf16.mxu0 %v148
    %1064 = vmatpush1.bf16.msra.mxu0 %v147
    %1065 = vmatprep.subr.bf16.mxu0 %v146
    %1066 = vmatpush1.bf16.msra.mxu0 %v145
    %1067 = vmatprep.subr.bf16.mxu0 %v144
    %1068 = vmatpush1.bf16.msra.mxu0 %v143
    %1069 = vmatprep.subr.bf16.mxu0 %v142
    %1070 = vmatpush1.bf16.msra.mxu0 %v141
    %1071 = vmatprep.subr.bf16.mxu0 0
    %1072 = vmatpush2.bf16.msra.mxu0 0
    %1073 = vmatprep.subr.bf16.mxu0 0
    %1074 = vmatpush2.bf16.msra.mxu0 0
    %1075 = vmatprep.subr.bf16.mxu0 0
    %1076 = vmatpush2.bf16.msra.mxu0 0
    %1077 = vmatprep.subr.bf16.mxu0 0
    %1078 = vmatpush2.bf16.msra.mxu0 0
    %1079 = vmatprep.subr.bf16.mxu0 0
    %1080 = vmatpush2.bf16.msra.mxu0 0
    %1081 = vmatprep.subr.bf16.mxu0 0
    %1082 = vmatpush2.bf16.msra.mxu0 0
    %1083 = vmatprep.subr.bf16.mxu0 0
    %1084 = vmatpush2.bf16.msra.mxu0 0
    %1085 = vmatprep.subr.bf16.mxu0 0
    %1086 = vmatpush2.bf16.msra.mxu0 0
    %1087 = vmatprep.mubr.bf16.mxu0 0
    %1088 = vmatmul.mubr.bf16.gmra.mxu0 %v1053
    %v1089 = vpop.f32.mrf.mxu0
    %v1090 = vadd.f32 0.0, %v1089
    %v1091 = vpop.f32.mrf.mxu0
    %v1092 = vadd.f32 0.0, %v1091
    %v1093 = vpop.f32.mrf.mxu0
    %v1094 = vadd.f32 0.0, %v1093
    %v1095 = vpop.f32.mrf.mxu0
    %v1096 = vadd.f32 0.0, %v1095
    %1097 = vdwg.mxu0
    %v1098 = vmul.f32 %v1090, 0.5
    %v1099 = vmul.f32 %v1092, 0.5
    %v1100 = vmul.f32 %v1094, 0.5
    %v1101 = vmul.f32 %v1096, 0.5
    %v1102 = vtanh.pop %v1098
    %v1103 = vtanh.pop %v1099
    %v1104 = vtanh.pop %v1100
    %v1105 = vtanh.pop %v1101
    %v1106 = vmul.f32 %v1102, 0.5
    %v1107 = vmul.f32 %v1103, 0.5
    %v1108 = vmul.f32 %v1104, 0.5
    %v1109 = vmul.f32 %v1105, 0.5
    %v1110 = vadd.f32 %v1106, 0.5
    %v1111 = vadd.f32 %v1107, 0.5
    %v1112 = vadd.f32 %v1108, 0.5
    %v1113 = vadd.f32 %v1109, 0.5
    %v1114 = vtanh.pop %v1092
    %v1115 = vtanh.pop %v1096
    %v1116 = vmul.f32 %v1110, %v1010
    %v1117 = vmul.f32 %v1112, %v1011
    %1120 = vrot.lane.b32.xlu0 %v1114, 64
    %v1121 = vpop.permute.xlu0 %1120
    %1122 = vrot.lane.b32.xlu0 %v1115, 64
    %v1123 = vpop.permute.xlu0 %1122
    %v1126 = vmul.f32 %v1110, %v1121
    %v1127 = vmul.f32 %v1112, %v1123
    %1130 = vrot.lane.b32.xlu0 %v1126, 64
    %v1131 = vpop.permute.xlu0 %1130
    %1132 = vrot.lane.b32.xlu0 %v1127, 64
    %v1133 = vpop.permute.xlu0 %1132
    %v1136 = vadd.f32 %v1116, %v1131
    %v1137 = vadd.f32 %v1117, %v1133
    %v1138 = vtanh.pop %v1136
    %v1139 = vtanh.pop %v1137
    %1142 = vrot.lane.b32.xlu0 %v1138, 64
    %v1143 = vpop.permute.xlu0 %1142
    %1144 = vrot.lane.b32.xlu0 %v1139, 64
    %v1145 = vpop.permute.xlu0 %1144
    %v1148 = vmul.f32 %v1111, %v1143
    %v1149 = vmul.f32 %v1113, %v1145
    %v1150 = vpack.c.bf16 %v1149, %v1148
    %v1152 = vunpack.c.l.b16 %v1150
    %v1153 = vunpack.c.h.b16 %v1150
    %v1154 = vpack.c.b16 %v1152, %v1152
    %v1155 = vpack.c.b16 %v1153, %v1153
    %1158 = vst.msk [vmem:[#allocation2] sm:$0xf] %vm69, %v1154
    %1159 = vst.msk [vmem:[#allocation2 + $0x4] sm:$0xf] %vm69, %v1155
    %s1160 = scalar_lea.vmem [#allocation3], 64
    %v1161 = vld [vmem:[%s1160] sm:$0xf]
    %v1162 = vld [vmem:[%s1160 + $0x4] sm:$0xf]
    %1165 = vrot.lane.b32.xlu0 %v1161, 64
    %v1166 = vpop.permute.xlu0 %1165
    %1167 = vrot.lane.b32.xlu0 %v1162, 64
    %v1168 = vpop.permute.xlu0 %1167
    %1171 = vst.msk [vmem:[#allocation2] sm:$0xf] %vm82, %v1166
    %1172 = vst.msk [vmem:[#allocation2 + $0x4] sm:$0xf] %vm82, %v1168
    %v1173 = vld [vmem:[#allocation2] sm:$0xf]
    %v1174 = vld [vmem:[#allocation2 + $0x4] sm:$0xf]
    %v1177 = vunpack.c.l.b16 %v1173
    %v1178 = vunpack.c.l.b16 %v1174
    %v1179 = vpack.c.b16 %v1178, %v1177
    %1181 = vmatprep.subr.bf16.mxu0 %v156
    %1182 = vmatpush1.bf16.msra.mxu0 %v155
    %1183 = vmatprep.subr.bf16.mxu0 %v154
    %1184 = vmatpush1.bf16.msra.mxu0 %v153
    %1185 = vmatprep.subr.bf16.mxu0 %v152
    %1186 = vmatpush1.bf16.msra.mxu0 %v151
    %1187 = vmatprep.subr.bf16.mxu0 %v150
    %1188 = vmatpush1.bf16.msra.mxu0 %v149
    %1189 = vmatprep.subr.bf16.mxu0 %v148
    %1190 = vmatpush1.bf16.msra.mxu0 %v147
    %1191 = vmatprep.subr.bf16.mxu0 %v146
    %1192 = vmatpush1.bf16.msra.mxu0 %v145
    %1193 = vmatprep.subr.bf16.mxu0 %v144
    %1194 = vmatpush1.bf16.msra.mxu0 %v143
    %1195 = vmatprep.subr.bf16.mxu0 %v142
    %1196 = vmatpush1.bf16.msra.mxu0 %v141
    %1197 = vmatprep.subr.bf16.mxu0 0
    %1198 = vmatpush2.bf16.msra.mxu0 0
    %1199 = vmatprep.subr.bf16.mxu0 0
    %1200 = vmatpush2.bf16.msra.mxu0 0
    %1201 = vmatprep.subr.bf16.mxu0 0
    %1202 = vmatpush2.bf16.msra.mxu0 0
    %1203 = vmatprep.subr.bf16.mxu0 0
    %1204 = vmatpush2.bf16.msra.mxu0 0
    %1205 = vmatprep.subr.bf16.mxu0 0
    %1206 = vmatpush2.bf16.msra.mxu0 0
    %1207 = vmatprep.subr.bf16.mxu0 0
    %1208 = vmatpush2.bf16.msra.mxu0 0
    %1209 = vmatprep.subr.bf16.mxu0 0
    %1210 = vmatpush2.bf16.msra.mxu0 0
    %1211 = vmatprep.subr.bf16.mxu0 0
    %1212 = vmatpush2.bf16.msra.mxu0 0
    %1213 = vmatprep.mubr.bf16.mxu0 0
    %1214 = vmatmul.mubr.bf16.gmra.mxu0 %v1179
    %v1215 = vpop.f32.mrf.mxu0
    %v1216 = vadd.f32 0.0, %v1215
    %v1217 = vpop.f32.mrf.mxu0
    %v1218 = vadd.f32 0.0, %v1217
    %v1219 = vpop.f32.mrf.mxu0
    %v1220 = vadd.f32 0.0, %v1219
    %v1221 = vpop.f32.mrf.mxu0
    %v1222 = vadd.f32 0.0, %v1221
    %1223 = vdwg.mxu0
    %v1224 = vmul.f32 %v1216, 0.5
    %v1225 = vmul.f32 %v1218, 0.5
    %v1226 = vmul.f32 %v1220, 0.5
    %v1227 = vmul.f32 %v1222, 0.5
    %v1228 = vtanh.pop %v1224
    %v1229 = vtanh.pop %v1225
    %v1230 = vtanh.pop %v1226
    %v1231 = vtanh.pop %v1227
    %v1232 = vmul.f32 %v1228, 0.5
    %v1233 = vmul.f32 %v1229, 0.5
    %v1234 = vmul.f32 %v1230, 0.5
    %v1235 = vmul.f32 %v1231, 0.5
    %v1236 = vadd.f32 %v1232, 0.5
    %v1237 = vadd.f32 %v1233, 0.5
    %v1238 = vadd.f32 %v1234, 0.5
    %v1239 = vadd.f32 %v1235, 0.5
    %v1240 = vtanh.pop %v1218
    %v1241 = vtanh.pop %v1222
    %v1242 = vmul.f32 %v1236, %v1136
    %v1243 = vmul.f32 %v1238, %v1137
    %1246 = vrot.lane.b32.xlu0 %v1240, 64
    %v1247 = vpop.permute.xlu0 %1246
    %1248 = vrot.lane.b32.xlu0 %v1241, 64
    %v1249 = vpop.permute.xlu0 %1248
    %v1252 = vmul.f32 %v1236, %v1247
    %v1253 = vmul.f32 %v1238, %v1249
    %1256 = vrot.lane.b32.xlu0 %v1252, 64
    %v1257 = vpop.permute.xlu0 %1256
    %1258 = vrot.lane.b32.xlu0 %v1253, 64
    %v1259 = vpop.permute.xlu0 %1258
    %v1262 = vadd.f32 %v1242, %v1257
    %v1263 = vadd.f32 %v1243, %v1259
    %v1264 = vtanh.pop %v1262
    %v1265 = vtanh.pop %v1263
    %1268 = vrot.lane.b32.xlu0 %v1264, 64
    %v1269 = vpop.permute.xlu0 %1268
    %1270 = vrot.lane.b32.xlu0 %v1265, 64
    %v1271 = vpop.permute.xlu0 %1270
    %v1274 = vmul.f32 %v1237, %v1269
    %v1275 = vmul.f32 %v1239, %v1271
    %v1276 = vpack.c.bf16 %v1275, %v1274
    %v1278 = vunpack.c.l.b16 %v1276
    %v1279 = vunpack.c.h.b16 %v1276
    %v1280 = vpack.c.b16 %v1278, %v1278
    %v1281 = vpack.c.b16 %v1279, %v1279
    %1284 = vst.msk [vmem:[#allocation2] sm:$0xf] %vm69, %v1280
    %1285 = vst.msk [vmem:[#allocation2 + $0x4] sm:$0xf] %vm69, %v1281
    %s1286 = scalar_lea.vmem [#allocation3], 72
    %v1287 = vld [vmem:[%s1286] sm:$0xf]
    %v1288 = vld [vmem:[%s1286 + $0x4] sm:$0xf]
    %1291 = vrot.lane.b32.xlu0 %v1287, 64
    %v1292 = vpop.permute.xlu0 %1291
    %1293 = vrot.lane.b32.xlu0 %v1288, 64
    %v1294 = vpop.permute.xlu0 %1293
    %1297 = vst.msk [vmem:[#allocation2] sm:$0xf] %vm82, %v1292
    %1298 = vst.msk [vmem:[#allocation2 + $0x4] sm:$0xf] %vm82, %v1294
    %v1299 = vld [vmem:[#allocation2] sm:$0xf]
    %v1300 = vld [vmem:[#allocation2 + $0x4] sm:$0xf]
    %v1303 = vunpack.c.l.b16 %v1299
    %v1304 = vunpack.c.l.b16 %v1300
    %v1305 = vpack.c.b16 %v1304, %v1303
    %1307 = vmatprep.subr.bf16.mxu0 %v156
    %1308 = vmatpush1.bf16.msra.mxu0 %v155
    %1309 = vmatprep.subr.bf16.mxu0 %v154
    %1310 = vmatpush1.bf16.msra.mxu0 %v153
    %1311 = vmatprep.subr.bf16.mxu0 %v152
    %1312 = vmatpush1.bf16.msra.mxu0 %v151
    %1313 = vmatprep.subr.bf16.mxu0 %v150
    %1314 = vmatpush1.bf16.msra.mxu0 %v149
    %1315 = vmatprep.subr.bf16.mxu0 %v148
    %1316 = vmatpush1.bf16.msra.mxu0 %v147
    %1317 = vmatprep.subr.bf16.mxu0 %v146
    %1318 = vmatpush1.bf16.msra.mxu0 %v145
    %1319 = vmatprep.subr.bf16.mxu0 %v144
    %1320 = vmatpush1.bf16.msra.mxu0 %v143
    %1321 = vmatprep.subr.bf16.mxu0 %v142
    %1322 = vmatpush1.bf16.msra.mxu0 %v141
    %1323 = vmatprep.subr.bf16.mxu0 0
    %1324 = vmatpush2.bf16.msra.mxu0 0
    %1325 = vmatprep.subr.bf16.mxu0 0
    %1326 = vmatpush2.bf16.msra.mxu0 0
    %1327 = vmatprep.subr.bf16.mxu0 0
    %1328 = vmatpush2.bf16.msra.mxu0 0
    %1329 = vmatprep.subr.bf16.mxu0 0
    %1330 = vmatpush2.bf16.msra.mxu0 0
    %1331 = vmatprep.subr.bf16.mxu0 0
    %1332 = vmatpush2.bf16.msra.mxu0 0
    %1333 = vmatprep.subr.bf16.mxu0 0
    %1334 = vmatpush2.bf16.msra.mxu0 0
    %1335 = vmatprep.subr.bf16.mxu0 0
    %1336 = vmatpush2.bf16.msra.mxu0 0
    %1337 = vmatprep.subr.bf16.mxu0 0
    %1338 = vmatpush2.bf16.msra.mxu0 0
    %1339 = vmatprep.mubr.bf16.mxu0 0
    %1340 = vmatmul.mubr.bf16.gmra.mxu0 %v1305
    %v1341 = vpop.f32.mrf.mxu0
    %v1342 = vadd.f32 0.0, %v1341
    %v1343 = vpop.f32.mrf.mxu0
    %v1344 = vadd.f32 0.0, %v1343
    %v1345 = vpop.f32.mrf.mxu0
    %v1346 = vadd.f32 0.0, %v1345
    %v1347 = vpop.f32.mrf.mxu0
    %v1348 = vadd.f32 0.0, %v1347
    %1349 = vdwg.mxu0
    %v1350 = vmul.f32 %v1342, 0.5
    %v1351 = vmul.f32 %v1344, 0.5
    %v1352 = vmul.f32 %v1346, 0.5
    %v1353 = vmul.f32 %v1348, 0.5
    %v1354 = vtanh.pop %v1350
    %v1355 = vtanh.pop %v1351
    %v1356 = vtanh.pop %v1352
    %v1357 = vtanh.pop %v1353
    %v1358 = vmul.f32 %v1354, 0.5
    %v1359 = vmul.f32 %v1355, 0.5
    %v1360 = vmul.f32 %v1356, 0.5
    %v1361 = vmul.f32 %v1357, 0.5
    %v1362 = vadd.f32 %v1358, 0.5
    %v1363 = vadd.f32 %v1359, 0.5
    %v1364 = vadd.f32 %v1360, 0.5
    %v1365 = vadd.f32 %v1361, 0.5
    %v1366 = vtanh.pop %v1344
    %v1367 = vtanh.pop %v1348
    %v1368 = vmul.f32 %v1362, %v1262
    %v1369 = vmul.f32 %v1364, %v1263
    %1372 = vrot.lane.b32.xlu0 %v1366, 64
    %v1373 = vpop.permute.xlu0 %1372
    %1374 = vrot.lane.b32.xlu0 %v1367, 64
    %v1375 = vpop.permute.xlu0 %1374
    %v1378 = vmul.f32 %v1362, %v1373
    %v1379 = vmul.f32 %v1364, %v1375
    %1382 = vrot.lane.b32.xlu0 %v1378, 64
    %v1383 = vpop.permute.xlu0 %1382
    %1384 = vrot.lane.b32.xlu0 %v1379, 64
    %v1385 = vpop.permute.xlu0 %1384
    %v1388 = vadd.f32 %v1368, %v1383
    %v1389 = vadd.f32 %v1369, %v1385
    %v1390 = vtanh.pop %v1388
    %v1391 = vtanh.pop %v1389
    %1394 = vrot.lane.b32.xlu0 %v1390, 64
    %v1395 = vpop.permute.xlu0 %1394
    %1396 = vrot.lane.b32.xlu0 %v1391, 64
    %v1397 = vpop.permute.xlu0 %1396
    %v1400 = vmul.f32 %v1363, %v1395
    %v1401 = vmul.f32 %v1365, %v1397
    %v1402 = vpack.c.bf16 %v1401, %v1400
    %v1404 = vunpack.c.l.b16 %v1402
    %v1405 = vunpack.c.h.b16 %v1402
    %v1406 = vpack.c.b16 %v1404, %v1404
    %v1407 = vpack.c.b16 %v1405, %v1405
    %1410 = vst.msk [vmem:[#allocation2] sm:$0xf] %vm69, %v1406
    %1411 = vst.msk [vmem:[#allocation2 + $0x4] sm:$0xf] %vm69, %v1407
    %s1412 = scalar_lea.vmem [#allocation3], 80
    %v1413 = vld [vmem:[%s1412] sm:$0xf]
    %v1414 = vld [vmem:[%s1412 + $0x4] sm:$0xf]
    %1417 = vrot.lane.b32.xlu0 %v1413, 64
    %v1418 = vpop.permute.xlu0 %1417
    %1419 = vrot.lane.b32.xlu0 %v1414, 64
    %v1420 = vpop.permute.xlu0 %1419
    %1423 = vst.msk [vmem:[#allocation2] sm:$0xf] %vm82, %v1418
    %1424 = vst.msk [vmem:[#allocation2 + $0x4] sm:$0xf] %vm82, %v1420
    %v1425 = vld [vmem:[#allocation2] sm:$0xf]
    %v1426 = vld [vmem:[#allocation2 + $0x4] sm:$0xf]
    %v1429 = vunpack.c.l.b16 %v1425
    %v1430 = vunpack.c.l.b16 %v1426
    %v1431 = vpack.c.b16 %v1430, %v1429
    %1433 = vmatprep.subr.bf16.mxu0 %v156
    %1434 = vmatpush1.bf16.msra.mxu0 %v155
    %1435 = vmatprep.subr.bf16.mxu0 %v154
    %1436 = vmatpush1.bf16.msra.mxu0 %v153
    %1437 = vmatprep.subr.bf16.mxu0 %v152
    %1438 = vmatpush1.bf16.msra.mxu0 %v151
    %1439 = vmatprep.subr.bf16.mxu0 %v150
    %1440 = vmatpush1.bf16.msra.mxu0 %v149
    %1441 = vmatprep.subr.bf16.mxu0 %v148
    %1442 = vmatpush1.bf16.msra.mxu0 %v147
    %1443 = vmatprep.subr.bf16.mxu0 %v146
    %1444 = vmatpush1.bf16.msra.mxu0 %v145
    %1445 = vmatprep.subr.bf16.mxu0 %v144
    %1446 = vmatpush1.bf16.msra.mxu0 %v143
    %1447 = vmatprep.subr.bf16.mxu0 %v142
    %1448 = vmatpush1.bf16.msra.mxu0 %v141
    %1449 = vmatprep.subr.bf16.mxu0 0
    %1450 = vmatpush2.bf16.msra.mxu0 0
    %1451 = vmatprep.subr.bf16.mxu0 0
    %1452 = vmatpush2.bf16.msra.mxu0 0
    %1453 = vmatprep.subr.bf16.mxu0 0
    %1454 = vmatpush2.bf16.msra.mxu0 0
    %1455 = vmatprep.subr.bf16.mxu0 0
    %1456 = vmatpush2.bf16.msra.mxu0 0
    %1457 = vmatprep.subr.bf16.mxu0 0
    %1458 = vmatpush2.bf16.msra.mxu0 0
    %1459 = vmatprep.subr.bf16.mxu0 0
    %1460 = vmatpush2.bf16.msra.mxu0 0
    %1461 = vmatprep.subr.bf16.mxu0 0
    %1462 = vmatpush2.bf16.msra.mxu0 0
    %1463 = vmatprep.subr.bf16.mxu0 0
    %1464 = vmatpush2.bf16.msra.mxu0 0
    %1465 = vmatprep.mubr.bf16.mxu0 0
    %1466 = vmatmul.mubr.bf16.gmra.mxu0 %v1431
    %v1467 = vpop.f32.mrf.mxu0
    %v1468 = vadd.f32 0.0, %v1467
    %v1469 = vpop.f32.mrf.mxu0
    %v1470 = vadd.f32 0.0, %v1469
    %v1471 = vpop.f32.mrf.mxu0
    %v1472 = vadd.f32 0.0, %v1471
    %v1473 = vpop.f32.mrf.mxu0
    %v1474 = vadd.f32 0.0, %v1473
    %1475 = vdwg.mxu0
    %v1476 = vmul.f32 %v1468, 0.5
    %v1477 = vmul.f32 %v1470, 0.5
    %v1478 = vmul.f32 %v1472, 0.5
    %v1479 = vmul.f32 %v1474, 0.5
    %v1480 = vtanh.pop %v1476
    %v1481 = vtanh.pop %v1477
    %v1482 = vtanh.pop %v1478
    %v1483 = vtanh.pop %v1479
    %v1484 = vmul.f32 %v1480, 0.5
    %v1485 = vmul.f32 %v1481, 0.5
    %v1486 = vmul.f32 %v1482, 0.5
    %v1487 = vmul.f32 %v1483, 0.5
    %v1488 = vadd.f32 %v1484, 0.5
    %v1489 = vadd.f32 %v1485, 0.5
    %v1490 = vadd.f32 %v1486, 0.5
    %v1491 = vadd.f32 %v1487, 0.5
    %v1492 = vtanh.pop %v1470
    %v1493 = vtanh.pop %v1474
    %v1494 = vmul.f32 %v1488, %v1388
    %v1495 = vmul.f32 %v1490, %v1389
    %1498 = vrot.lane.b32.xlu0 %v1492, 64
    %v1499 = vpop.permute.xlu0 %1498
    %1500 = vrot.lane.b32.xlu0 %v1493, 64
    %v1501 = vpop.permute.xlu0 %1500
    %v1504 = vmul.f32 %v1488, %v1499
    %v1505 = vmul.f32 %v1490, %v1501
    %1508 = vrot.lane.b32.xlu0 %v1504, 64
    %v1509 = vpop.permute.xlu0 %1508
    %1510 = vrot.lane.b32.xlu0 %v1505, 64
    %v1511 = vpop.permute.xlu0 %1510
    %v1514 = vadd.f32 %v1494, %v1509
    %v1515 = vadd.f32 %v1495, %v1511
    %v1516 = vtanh.pop %v1514
    %v1517 = vtanh.pop %v1515
    %1520 = vrot.lane.b32.xlu0 %v1516, 64
    %v1521 = vpop.permute.xlu0 %1520
    %1522 = vrot.lane.b32.xlu0 %v1517, 64
    %v1523 = vpop.permute.xlu0 %1522
    %v1526 = vmul.f32 %v1489, %v1521
    %v1527 = vmul.f32 %v1491, %v1523
    %v1528 = vpack.c.bf16 %v1527, %v1526
    %v1530 = vunpack.c.l.b16 %v1528
    %v1531 = vunpack.c.h.b16 %v1528
    %v1532 = vpack.c.b16 %v1530, %v1530
    %v1533 = vpack.c.b16 %v1531, %v1531
    %1536 = vst.msk [vmem:[#allocation2] sm:$0xf] %vm69, %v1532
    %1537 = vst.msk [vmem:[#allocation2 + $0x4] sm:$0xf] %vm69, %v1533
    %s1538 = scalar_lea.vmem [#allocation3], 88
    %v1539 = vld [vmem:[%s1538] sm:$0xf]
    %v1540 = vld [vmem:[%s1538 + $0x4] sm:$0xf]
    %1543 = vrot.lane.b32.xlu0 %v1539, 64
    %v1544 = vpop.permute.xlu0 %1543
    %1545 = vrot.lane.b32.xlu0 %v1540, 64
    %v1546 = vpop.permute.xlu0 %1545
    %1549 = vst.msk [vmem:[#allocation2] sm:$0xf] %vm82, %v1544
    %1550 = vst.msk [vmem:[#allocation2 + $0x4] sm:$0xf] %vm82, %v1546
    %v1551 = vld [vmem:[#allocation2] sm:$0xf]
    %v1552 = vld [vmem:[#allocation2 + $0x4] sm:$0xf]
    %v1555 = vunpack.c.l.b16 %v1551
    %v1556 = vunpack.c.l.b16 %v1552
    %v1557 = vpack.c.b16 %v1556, %v1555
    %1559 = vmatprep.subr.bf16.mxu0 %v156
    %1560 = vmatpush1.bf16.msra.mxu0 %v155
    %1561 = vmatprep.subr.bf16.mxu0 %v154
    %1562 = vmatpush1.bf16.msra.mxu0 %v153
    %1563 = vmatprep.subr.bf16.mxu0 %v152
    %1564 = vmatpush1.bf16.msra.mxu0 %v151
    %1565 = vmatprep.subr.bf16.mxu0 %v150
    %1566 = vmatpush1.bf16.msra.mxu0 %v149
    %1567 = vmatprep.subr.bf16.mxu0 %v148
    %1568 = vmatpush1.bf16.msra.mxu0 %v147
    %1569 = vmatprep.subr.bf16.mxu0 %v146
    %1570 = vmatpush1.bf16.msra.mxu0 %v145
    %1571 = vmatprep.subr.bf16.mxu0 %v144
    %1572 = vmatpush1.bf16.msra.mxu0 %v143
    %1573 = vmatprep.subr.bf16.mxu0 %v142
    %1574 = vmatpush1.bf16.msra.mxu0 %v141
    %1575 = vmatprep.subr.bf16.mxu0 0
    %1576 = vmatpush2.bf16.msra.mxu0 0
    %1577 = vmatprep.subr.bf16.mxu0 0
    %1578 = vmatpush2.bf16.msra.mxu0 0
    %1579 = vmatprep.subr.bf16.mxu0 0
    %1580 = vmatpush2.bf16.msra.mxu0 0
    %1581 = vmatprep.subr.bf16.mxu0 0
    %1582 = vmatpush2.bf16.msra.mxu0 0
    %1583 = vmatprep.subr.bf16.mxu0 0
    %1584 = vmatpush2.bf16.msra.mxu0 0
    %1585 = vmatprep.subr.bf16.mxu0 0
    %1586 = vmatpush2.bf16.msra.mxu0 0
    %1587 = vmatprep.subr.bf16.mxu0 0
    %1588 = vmatpush2.bf16.msra.mxu0 0
    %1589 = vmatprep.subr.bf16.mxu0 0
    %1590 = vmatpush2.bf16.msra.mxu0 0
    %1591 = vmatprep.mubr.bf16.mxu0 0
    %1592 = vmatmul.mubr.bf16.gmra.mxu0 %v1557
    %v1593 = vpop.f32.mrf.mxu0
    %v1594 = vadd.f32 0.0, %v1593
    %v1595 = vpop.f32.mrf.mxu0
    %v1596 = vadd.f32 0.0, %v1595
    %v1597 = vpop.f32.mrf.mxu0
    %v1598 = vadd.f32 0.0, %v1597
    %v1599 = vpop.f32.mrf.mxu0
    %v1600 = vadd.f32 0.0, %v1599
    %1601 = vdwg.mxu0
    %v1602 = vmul.f32 %v1594, 0.5
    %v1603 = vmul.f32 %v1596, 0.5
    %v1604 = vmul.f32 %v1598, 0.5
    %v1605 = vmul.f32 %v1600, 0.5
    %v1606 = vtanh.pop %v1602
    %v1607 = vtanh.pop %v1603
    %v1608 = vtanh.pop %v1604
    %v1609 = vtanh.pop %v1605
    %v1610 = vmul.f32 %v1606, 0.5
    %v1611 = vmul.f32 %v1607, 0.5
    %v1612 = vmul.f32 %v1608, 0.5
    %v1613 = vmul.f32 %v1609, 0.5
    %v1614 = vadd.f32 %v1610, 0.5
    %v1615 = vadd.f32 %v1611, 0.5
    %v1616 = vadd.f32 %v1612, 0.5
    %v1617 = vadd.f32 %v1613, 0.5
    %v1618 = vtanh.pop %v1596
    %v1619 = vtanh.pop %v1600
    %v1620 = vmul.f32 %v1614, %v1514
    %v1621 = vmul.f32 %v1616, %v1515
    %1624 = vrot.lane.b32.xlu0 %v1618, 64
    %v1625 = vpop.permute.xlu0 %1624
    %1626 = vrot.lane.b32.xlu0 %v1619, 64
    %v1627 = vpop.permute.xlu0 %1626
    %v1630 = vmul.f32 %v1614, %v1625
    %v1631 = vmul.f32 %v1616, %v1627
    %1634 = vrot.lane.b32.xlu0 %v1630, 64
    %v1635 = vpop.permute.xlu0 %1634
    %1636 = vrot.lane.b32.xlu0 %v1631, 64
    %v1637 = vpop.permute.xlu0 %1636
    %v1640 = vadd.f32 %v1620, %v1635
    %v1641 = vadd.f32 %v1621, %v1637
    %v1642 = vtanh.pop %v1640
    %v1643 = vtanh.pop %v1641
    %1646 = vrot.lane.b32.xlu0 %v1642, 64
    %v1647 = vpop.permute.xlu0 %1646
    %1648 = vrot.lane.b32.xlu0 %v1643, 64
    %v1649 = vpop.permute.xlu0 %1648
    %v1652 = vmul.f32 %v1615, %v1647
    %v1653 = vmul.f32 %v1617, %v1649
    %v1654 = vpack.c.bf16 %v1653, %v1652
    %v1656 = vunpack.c.l.b16 %v1654
    %v1657 = vunpack.c.h.b16 %v1654
    %v1658 = vpack.c.b16 %v1656, %v1656
    %v1659 = vpack.c.b16 %v1657, %v1657
    %1662 = vst.msk [vmem:[#allocation2] sm:$0xf] %vm69, %v1658
    %1663 = vst.msk [vmem:[#allocation2 + $0x4] sm:$0xf] %vm69, %v1659
    %s1664 = scalar_lea.vmem [#allocation3], 96
    %v1665 = vld [vmem:[%s1664] sm:$0xf]
    %v1666 = vld [vmem:[%s1664 + $0x4] sm:$0xf]
    %1669 = vrot.lane.b32.xlu0 %v1665, 64
    %v1670 = vpop.permute.xlu0 %1669
    %1671 = vrot.lane.b32.xlu0 %v1666, 64
    %v1672 = vpop.permute.xlu0 %1671
    %1675 = vst.msk [vmem:[#allocation2] sm:$0xf] %vm82, %v1670
    %1676 = vst.msk [vmem:[#allocation2 + $0x4] sm:$0xf] %vm82, %v1672
    %v1677 = vld [vmem:[#allocation2] sm:$0xf]
    %v1678 = vld [vmem:[#allocation2 + $0x4] sm:$0xf]
    %v1681 = vunpack.c.l.b16 %v1677
    %v1682 = vunpack.c.l.b16 %v1678
    %v1683 = vpack.c.b16 %v1682, %v1681
    %1685 = vmatprep.subr.bf16.mxu0 %v156
    %1686 = vmatpush1.bf16.msra.mxu0 %v155
    %1687 = vmatprep.subr.bf16.mxu0 %v154
    %1688 = vmatpush1.bf16.msra.mxu0 %v153
    %1689 = vmatprep.subr.bf16.mxu0 %v152
    %1690 = vmatpush1.bf16.msra.mxu0 %v151
    %1691 = vmatprep.subr.bf16.mxu0 %v150
    %1692 = vmatpush1.bf16.msra.mxu0 %v149
    %1693 = vmatprep.subr.bf16.mxu0 %v148
    %1694 = vmatpush1.bf16.msra.mxu0 %v147
    %1695 = vmatprep.subr.bf16.mxu0 %v146
    %1696 = vmatpush1.bf16.msra.mxu0 %v145
    %1697 = vmatprep.subr.bf16.mxu0 %v144
    %1698 = vmatpush1.bf16.msra.mxu0 %v143
    %1699 = vmatprep.subr.bf16.mxu0 %v142
    %1700 = vmatpush1.bf16.msra.mxu0 %v141
    %1701 = vmatprep.subr.bf16.mxu0 0
    %1702 = vmatpush2.bf16.msra.mxu0 0
    %1703 = vmatprep.subr.bf16.mxu0 0
    %1704 = vmatpush2.bf16.msra.mxu0 0
    %1705 = vmatprep.subr.bf16.mxu0 0
    %1706 = vmatpush2.bf16.msra.mxu0 0
    %1707 = vmatprep.subr.bf16.mxu0 0
    %1708 = vmatpush2.bf16.msra.mxu0 0
    %1709 = vmatprep.subr.bf16.mxu0 0
    %1710 = vmatpush2.bf16.msra.mxu0 0
    %1711 = vmatprep.subr.bf16.mxu0 0
    %1712 = vmatpush2.bf16.msra.mxu0 0
    %1713 = vmatprep.subr.bf16.mxu0 0
    %1714 = vmatpush2.bf16.msra.mxu0 0
    %1715 = vmatprep.subr.bf16.mxu0 0
    %1716 = vmatpush2.bf16.msra.mxu0 0
    %1717 = vmatprep.mubr.bf16.mxu0 0
    %1718 = vmatmul.mubr.bf16.gmra.mxu0 %v1683
    %v1719 = vpop.f32.mrf.mxu0
    %v1720 = vadd.f32 0.0, %v1719
    %v1721 = vpop.f32.mrf.mxu0
    %v1722 = vadd.f32 0.0, %v1721
    %v1723 = vpop.f32.mrf.mxu0
    %v1724 = vadd.f32 0.0, %v1723
    %v1725 = vpop.f32.mrf.mxu0
    %v1726 = vadd.f32 0.0, %v1725
    %1727 = vdwg.mxu0
    %v1728 = vmul.f32 %v1720, 0.5
    %v1729 = vmul.f32 %v1722, 0.5
    %v1730 = vmul.f32 %v1724, 0.5
    %v1731 = vmul.f32 %v1726, 0.5
    %v1732 = vtanh.pop %v1728
    %v1733 = vtanh.pop %v1729
    %v1734 = vtanh.pop %v1730
    %v1735 = vtanh.pop %v1731
    %v1736 = vmul.f32 %v1732, 0.5
    %v1737 = vmul.f32 %v1733, 0.5
    %v1738 = vmul.f32 %v1734, 0.5
    %v1739 = vmul.f32 %v1735, 0.5
    %v1740 = vadd.f32 %v1736, 0.5
    %v1741 = vadd.f32 %v1737, 0.5
    %v1742 = vadd.f32 %v1738, 0.5
    %v1743 = vadd.f32 %v1739, 0.5
    %v1744 = vtanh.pop %v1722
    %v1745 = vtanh.pop %v1726
    %v1746 = vmul.f32 %v1740, %v1640
    %v1747 = vmul.f32 %v1742, %v1641
    %1750 = vrot.lane.b32.xlu0 %v1744, 64
    %v1751 = vpop.permute.xlu0 %1750
    %1752 = vrot.lane.b32.xlu0 %v1745, 64
    %v1753 = vpop.permute.xlu0 %1752
    %v1756 = vmul.f32 %v1740, %v1751
    %v1757 = vmul.f32 %v1742, %v1753
    %1760 = vrot.lane.b32.xlu0 %v1756, 64
    %v1761 = vpop.permute.xlu0 %1760
    %1762 = vrot.lane.b32.xlu0 %v1757, 64
    %v1763 = vpop.permute.xlu0 %1762
    %v1766 = vadd.f32 %v1746, %v1761
    %v1767 = vadd.f32 %v1747, %v1763
    %v1768 = vtanh.pop %v1766
    %v1769 = vtanh.pop %v1767
    %1772 = vrot.lane.b32.xlu0 %v1768, 64
    %v1773 = vpop.permute.xlu0 %1772
    %1774 = vrot.lane.b32.xlu0 %v1769, 64
    %v1775 = vpop.permute.xlu0 %1774
    %v1778 = vmul.f32 %v1741, %v1773
    %v1779 = vmul.f32 %v1743, %v1775
    %v1780 = vpack.c.bf16 %v1779, %v1778
    %v1782 = vunpack.c.l.b16 %v1780
    %v1783 = vunpack.c.h.b16 %v1780
    %v1784 = vpack.c.b16 %v1782, %v1782
    %v1785 = vpack.c.b16 %v1783, %v1783
    %1788 = vst.msk [vmem:[#allocation2] sm:$0xf] %vm69, %v1784
    %1789 = vst.msk [vmem:[#allocation2 + $0x4] sm:$0xf] %vm69, %v1785
    %s1790 = scalar_lea.vmem [#allocation3], 104
    %v1791 = vld [vmem:[%s1790] sm:$0xf]
    %v1792 = vld [vmem:[%s1790 + $0x4] sm:$0xf]
    %1795 = vrot.lane.b32.xlu0 %v1791, 64
    %v1796 = vpop.permute.xlu0 %1795
    %1797 = vrot.lane.b32.xlu0 %v1792, 64
    %v1798 = vpop.permute.xlu0 %1797
    %1801 = vst.msk [vmem:[#allocation2] sm:$0xf] %vm82, %v1796
    %1802 = vst.msk [vmem:[#allocation2 + $0x4] sm:$0xf] %vm82, %v1798
    %v1803 = vld [vmem:[#allocation2] sm:$0xf]
    %v1804 = vld [vmem:[#allocation2 + $0x4] sm:$0xf]
    %v1807 = vunpack.c.l.b16 %v1803
    %v1808 = vunpack.c.l.b16 %v1804
    %v1809 = vpack.c.b16 %v1808, %v1807
    %1811 = vmatprep.subr.bf16.mxu0 %v156
    %1812 = vmatpush1.bf16.msra.mxu0 %v155
    %1813 = vmatprep.subr.bf16.mxu0 %v154
    %1814 = vmatpush1.bf16.msra.mxu0 %v153
    %1815 = vmatprep.subr.bf16.mxu0 %v152
    %1816 = vmatpush1.bf16.msra.mxu0 %v151
    %1817 = vmatprep.subr.bf16.mxu0 %v150
    %1818 = vmatpush1.bf16.msra.mxu0 %v149
    %1819 = vmatprep.subr.bf16.mxu0 %v148
    %1820 = vmatpush1.bf16.msra.mxu0 %v147
    %1821 = vmatprep.subr.bf16.mxu0 %v146
    %1822 = vmatpush1.bf16.msra.mxu0 %v145
    %1823 = vmatprep.subr.bf16.mxu0 %v144
    %1824 = vmatpush1.bf16.msra.mxu0 %v143
    %1825 = vmatprep.subr.bf16.mxu0 %v142
    %1826 = vmatpush1.bf16.msra.mxu0 %v141
    %1827 = vmatprep.subr.bf16.mxu0 0
    %1828 = vmatpush2.bf16.msra.mxu0 0
    %1829 = vmatprep.subr.bf16.mxu0 0
    %1830 = vmatpush2.bf16.msra.mxu0 0
    %1831 = vmatprep.subr.bf16.mxu0 0
    %1832 = vmatpush2.bf16.msra.mxu0 0
    %1833 = vmatprep.subr.bf16.mxu0 0
    %1834 = vmatpush2.bf16.msra.mxu0 0
    %1835 = vmatprep.subr.bf16.mxu0 0
    %1836 = vmatpush2.bf16.msra.mxu0 0
    %1837 = vmatprep.subr.bf16.mxu0 0
    %1838 = vmatpush2.bf16.msra.mxu0 0
    %1839 = vmatprep.subr.bf16.mxu0 0
    %1840 = vmatpush2.bf16.msra.mxu0 0
    %1841 = vmatprep.subr.bf16.mxu0 0
    %1842 = vmatpush2.bf16.msra.mxu0 0
    %1843 = vmatprep.mubr.bf16.mxu0 0
    %1844 = vmatmul.mubr.bf16.gmra.mxu0 %v1809
    %v1845 = vpop.f32.mrf.mxu0
    %v1846 = vadd.f32 0.0, %v1845
    %v1847 = vpop.f32.mrf.mxu0
    %v1848 = vadd.f32 0.0, %v1847
    %v1849 = vpop.f32.mrf.mxu0
    %v1850 = vadd.f32 0.0, %v1849
    %v1851 = vpop.f32.mrf.mxu0
    %v1852 = vadd.f32 0.0, %v1851
    %1853 = vdwg.mxu0
    %v1854 = vmul.f32 %v1846, 0.5
    %v1855 = vmul.f32 %v1848, 0.5
    %v1856 = vmul.f32 %v1850, 0.5
    %v1857 = vmul.f32 %v1852, 0.5
    %v1858 = vtanh.pop %v1854
    %v1859 = vtanh.pop %v1855
    %v1860 = vtanh.pop %v1856
    %v1861 = vtanh.pop %v1857
    %v1862 = vmul.f32 %v1858, 0.5
    %v1863 = vmul.f32 %v1859, 0.5
    %v1864 = vmul.f32 %v1860, 0.5
    %v1865 = vmul.f32 %v1861, 0.5
    %v1866 = vadd.f32 %v1862, 0.5
    %v1867 = vadd.f32 %v1863, 0.5
    %v1868 = vadd.f32 %v1864, 0.5
    %v1869 = vadd.f32 %v1865, 0.5
    %v1870 = vtanh.pop %v1848
    %v1871 = vtanh.pop %v1852
    %v1872 = vmul.f32 %v1866, %v1766
    %v1873 = vmul.f32 %v1868, %v1767
    %1876 = vrot.lane.b32.xlu0 %v1870, 64
    %v1877 = vpop.permute.xlu0 %1876
    %1878 = vrot.lane.b32.xlu0 %v1871, 64
    %v1879 = vpop.permute.xlu0 %1878
    %v1882 = vmul.f32 %v1866, %v1877
    %v1883 = vmul.f32 %v1868, %v1879
    %1886 = vrot.lane.b32.xlu0 %v1882, 64
    %v1887 = vpop.permute.xlu0 %1886
    %1888 = vrot.lane.b32.xlu0 %v1883, 64
    %v1889 = vpop.permute.xlu0 %1888
    %v1892 = vadd.f32 %v1872, %v1887
    %v1893 = vadd.f32 %v1873, %v1889
    %v1894 = vtanh.pop %v1892
    %v1895 = vtanh.pop %v1893
    %1898 = vrot.lane.b32.xlu0 %v1894, 64
    %v1899 = vpop.permute.xlu0 %1898
    %1900 = vrot.lane.b32.xlu0 %v1895, 64
    %v1901 = vpop.permute.xlu0 %1900
    %v1904 = vmul.f32 %v1867, %v1899
    %v1905 = vmul.f32 %v1869, %v1901
    %v1906 = vpack.c.bf16 %v1905, %v1904
    %v1908 = vunpack.c.l.b16 %v1906
    %v1909 = vunpack.c.h.b16 %v1906
    %v1910 = vpack.c.b16 %v1908, %v1908
    %v1911 = vpack.c.b16 %v1909, %v1909
    %1914 = vst.msk [vmem:[#allocation2] sm:$0xf] %vm69, %v1910
    %1915 = vst.msk [vmem:[#allocation2 + $0x4] sm:$0xf] %vm69, %v1911
    %s1916 = scalar_lea.vmem [#allocation3], 112
    %v1917 = vld [vmem:[%s1916] sm:$0xf]
    %v1918 = vld [vmem:[%s1916 + $0x4] sm:$0xf]
    %1921 = vrot.lane.b32.xlu0 %v1917, 64
    %v1922 = vpop.permute.xlu0 %1921
    %1923 = vrot.lane.b32.xlu0 %v1918, 64
    %v1924 = vpop.permute.xlu0 %1923
    %1927 = vst.msk [vmem:[#allocation2] sm:$0xf] %vm82, %v1922
    %1928 = vst.msk [vmem:[#allocation2 + $0x4] sm:$0xf] %vm82, %v1924
    %v1929 = vld [vmem:[#allocation2] sm:$0xf]
    %v1930 = vld [vmem:[#allocation2 + $0x4] sm:$0xf]
    %v1933 = vunpack.c.l.b16 %v1929
    %v1934 = vunpack.c.l.b16 %v1930
    %v1935 = vpack.c.b16 %v1934, %v1933
    %1937 = vmatprep.subr.bf16.mxu0 %v156
    %1938 = vmatpush1.bf16.msra.mxu0 %v155
    %1939 = vmatprep.subr.bf16.mxu0 %v154
    %1940 = vmatpush1.bf16.msra.mxu0 %v153
    %1941 = vmatprep.subr.bf16.mxu0 %v152
    %1942 = vmatpush1.bf16.msra.mxu0 %v151
    %1943 = vmatprep.subr.bf16.mxu0 %v150
    %1944 = vmatpush1.bf16.msra.mxu0 %v149
    %1945 = vmatprep.subr.bf16.mxu0 %v148
    %1946 = vmatpush1.bf16.msra.mxu0 %v147
    %1947 = vmatprep.subr.bf16.mxu0 %v146
    %1948 = vmatpush1.bf16.msra.mxu0 %v145
    %1949 = vmatprep.subr.bf16.mxu0 %v144
    %1950 = vmatpush1.bf16.msra.mxu0 %v143
    %1951 = vmatprep.subr.bf16.mxu0 %v142
    %1952 = vmatpush1.bf16.msra.mxu0 %v141
    %1953 = vmatprep.subr.bf16.mxu0 0
    %1954 = vmatpush2.bf16.msra.mxu0 0
    %1955 = vmatprep.subr.bf16.mxu0 0
    %1956 = vmatpush2.bf16.msra.mxu0 0
    %1957 = vmatprep.subr.bf16.mxu0 0
    %1958 = vmatpush2.bf16.msra.mxu0 0
    %1959 = vmatprep.subr.bf16.mxu0 0
    %1960 = vmatpush2.bf16.msra.mxu0 0
    %1961 = vmatprep.subr.bf16.mxu0 0
    %1962 = vmatpush2.bf16.msra.mxu0 0
    %1963 = vmatprep.subr.bf16.mxu0 0
    %1964 = vmatpush2.bf16.msra.mxu0 0
    %1965 = vmatprep.subr.bf16.mxu0 0
    %1966 = vmatpush2.bf16.msra.mxu0 0
    %1967 = vmatprep.subr.bf16.mxu0 0
    %1968 = vmatpush2.bf16.msra.mxu0 0
    %1969 = vmatprep.mubr.bf16.mxu0 0
    %1970 = vmatmul.mubr.bf16.gmra.mxu0 %v1935
    %v1971 = vpop.f32.mrf.mxu0
    %v1972 = vadd.f32 0.0, %v1971
    %v1973 = vpop.f32.mrf.mxu0
    %v1974 = vadd.f32 0.0, %v1973
    %v1975 = vpop.f32.mrf.mxu0
    %v1976 = vadd.f32 0.0, %v1975
    %v1977 = vpop.f32.mrf.mxu0
    %v1978 = vadd.f32 0.0, %v1977
    %1979 = vdwg.mxu0
    %v1980 = vmul.f32 %v1972, 0.5
    %v1981 = vmul.f32 %v1974, 0.5
    %v1982 = vmul.f32 %v1976, 0.5
    %v1983 = vmul.f32 %v1978, 0.5
    %v1984 = vtanh.pop %v1980
    %v1985 = vtanh.pop %v1981
    %v1986 = vtanh.pop %v1982
    %v1987 = vtanh.pop %v1983
    %v1988 = vmul.f32 %v1984, 0.5
    %v1989 = vmul.f32 %v1985, 0.5
    %v1990 = vmul.f32 %v1986, 0.5
    %v1991 = vmul.f32 %v1987, 0.5
    %v1992 = vadd.f32 %v1988, 0.5
    %v1993 = vadd.f32 %v1989, 0.5
    %v1994 = vadd.f32 %v1990, 0.5
    %v1995 = vadd.f32 %v1991, 0.5
    %v1996 = vtanh.pop %v1974
    %v1997 = vtanh.pop %v1978
    %v1998 = vmul.f32 %v1992, %v1892
    %v1999 = vmul.f32 %v1994, %v1893
    %2002 = vrot.lane.b32.xlu0 %v1996, 64
    %v2003 = vpop.permute.xlu0 %2002
    %2004 = vrot.lane.b32.xlu0 %v1997, 64
    %v2005 = vpop.permute.xlu0 %2004
    %v2008 = vmul.f32 %v1992, %v2003
    %v2009 = vmul.f32 %v1994, %v2005
    %2012 = vrot.lane.b32.xlu0 %v2008, 64
    %v2013 = vpop.permute.xlu0 %2012
    %2014 = vrot.lane.b32.xlu0 %v2009, 64
    %v2015 = vpop.permute.xlu0 %2014
    %v2018 = vadd.f32 %v1998, %v2013
    %v2019 = vadd.f32 %v1999, %v2015
    %v2020 = vtanh.pop %v2018
    %v2021 = vtanh.pop %v2019
    %2024 = vrot.lane.b32.xlu0 %v2020, 64
    %v2025 = vpop.permute.xlu0 %2024
    %2026 = vrot.lane.b32.xlu0 %v2021, 64
    %v2027 = vpop.permute.xlu0 %2026
    %v2030 = vmul.f32 %v1993, %v2025
    %v2031 = vmul.f32 %v1995, %v2027
    %v2032 = vpack.c.bf16 %v2031, %v2030
    %v2034 = vunpack.c.l.b16 %v2032
    %v2035 = vunpack.c.h.b16 %v2032
    %v2036 = vpack.c.b16 %v2034, %v2034
    %v2037 = vpack.c.b16 %v2035, %v2035
    %2040 = vst.msk [vmem:[#allocation2] sm:$0xf] %vm69, %v2036
    %2041 = vst.msk [vmem:[#allocation2 + $0x4] sm:$0xf] %vm69, %v2037
    %s2042 = scalar_lea.vmem [#allocation3], 120
    %v2043 = vld [vmem:[%s2042] sm:$0xf]
    %v2044 = vld [vmem:[%s2042 + $0x4] sm:$0xf]
    %2047 = vrot.lane.b32.xlu0 %v2043, 64
    %v2048 = vpop.permute.xlu0 %2047
    %2049 = vrot.lane.b32.xlu0 %v2044, 64
    %v2050 = vpop.permute.xlu0 %2049
    %2053 = vst.msk [vmem:[#allocation2] sm:$0xf] %vm82, %v2048
    %2054 = vst.msk [vmem:[#allocation2 + $0x4] sm:$0xf] %vm82, %v2050
    %v2055 = vld [vmem:[#allocation2] sm:$0xf]
    %v2056 = vld [vmem:[#allocation2 + $0x4] sm:$0xf]
    %v2059 = vunpack.c.l.b16 %v2055
    %v2060 = vunpack.c.l.b16 %v2056
    %v2061 = vpack.c.b16 %v2060, %v2059
    %2063 = vmatprep.subr.bf16.mxu0 %v156
    %2064 = vmatpush1.bf16.msra.mxu0 %v155
    %2065 = vmatprep.subr.bf16.mxu0 %v154
    %2066 = vmatpush1.bf16.msra.mxu0 %v153
    %2067 = vmatprep.subr.bf16.mxu0 %v152
    %2068 = vmatpush1.bf16.msra.mxu0 %v151
    %2069 = vmatprep.subr.bf16.mxu0 %v150
    %2070 = vmatpush1.bf16.msra.mxu0 %v149
    %2071 = vmatprep.subr.bf16.mxu0 %v148
    %2072 = vmatpush1.bf16.msra.mxu0 %v147
    %2073 = vmatprep.subr.bf16.mxu0 %v146
    %2074 = vmatpush1.bf16.msra.mxu0 %v145
    %2075 = vmatprep.subr.bf16.mxu0 %v144
    %2076 = vmatpush1.bf16.msra.mxu0 %v143
    %2077 = vmatprep.subr.bf16.mxu0 %v142
    %2078 = vmatpush1.bf16.msra.mxu0 %v141
    %2079 = vmatprep.subr.bf16.mxu0 0
    %2080 = vmatpush2.bf16.msra.mxu0 0
    %2081 = vmatprep.subr.bf16.mxu0 0
    %2082 = vmatpush2.bf16.msra.mxu0 0
    %2083 = vmatprep.subr.bf16.mxu0 0
    %2084 = vmatpush2.bf16.msra.mxu0 0
    %2085 = vmatprep.subr.bf16.mxu0 0
    %2086 = vmatpush2.bf16.msra.mxu0 0
    %2087 = vmatprep.subr.bf16.mxu0 0
    %2088 = vmatpush2.bf16.msra.mxu0 0
    %2089 = vmatprep.subr.bf16.mxu0 0
    %2090 = vmatpush2.bf16.msra.mxu0 0
    %2091 = vmatprep.subr.bf16.mxu0 0
    %2092 = vmatpush2.bf16.msra.mxu0 0
    %2093 = vmatprep.subr.bf16.mxu0 0
    %2094 = vmatpush2.bf16.msra.mxu0 0
    %2095 = vmatprep.mubr.bf16.mxu0 0
    %2096 = vmatmul.mubr.bf16.gmra.mxu0 %v2061
    %v2097 = vpop.f32.mrf.mxu0
    %v2098 = vadd.f32 0.0, %v2097
    %v2099 = vpop.f32.mrf.mxu0
    %v2100 = vadd.f32 0.0, %v2099
    %v2101 = vpop.f32.mrf.mxu0
    %v2102 = vadd.f32 0.0, %v2101
    %v2103 = vpop.f32.mrf.mxu0
    %v2104 = vadd.f32 0.0, %v2103
    %2105 = vdwg.mxu0
    %v2106 = vmul.f32 %v2098, 0.5
    %v2107 = vmul.f32 %v2100, 0.5
    %v2108 = vmul.f32 %v2102, 0.5
    %v2109 = vmul.f32 %v2104, 0.5
    %v2110 = vtanh.pop %v2106
    %v2111 = vtanh.pop %v2107
    %v2112 = vtanh.pop %v2108
    %v2113 = vtanh.pop %v2109
    %v2114 = vmul.f32 %v2110, 0.5
    %v2115 = vmul.f32 %v2111, 0.5
    %v2116 = vmul.f32 %v2112, 0.5
    %v2117 = vmul.f32 %v2113, 0.5
    %v2118 = vadd.f32 %v2114, 0.5
    %v2119 = vadd.f32 %v2115, 0.5
    %v2120 = vadd.f32 %v2116, 0.5
    %v2121 = vadd.f32 %v2117, 0.5
    %v2122 = vtanh.pop %v2100
    %v2123 = vtanh.pop %v2104
    %v2124 = vmul.f32 %v2118, %v2018
    %v2125 = vmul.f32 %v2120, %v2019
    %2128 = vrot.lane.b32.xlu0 %v2122, 64
    %v2129 = vpop.permute.xlu0 %2128
    %2130 = vrot.lane.b32.xlu0 %v2123, 64
    %v2131 = vpop.permute.xlu0 %2130
    %v2134 = vmul.f32 %v2118, %v2129
    %v2135 = vmul.f32 %v2120, %v2131
    %2138 = vrot.lane.b32.xlu0 %v2134, 64
    %v2139 = vpop.permute.xlu0 %2138
    %2140 = vrot.lane.b32.xlu0 %v2135, 64
    %v2141 = vpop.permute.xlu0 %2140
    %v2144 = vadd.f32 %v2124, %v2139
    %v2145 = vadd.f32 %v2125, %v2141
    %v2146 = vtanh.pop %v2144
    %v2147 = vtanh.pop %v2145
    %2150 = vrot.lane.b32.xlu0 %v2146, 64
    %v2151 = vpop.permute.xlu0 %2150
    %2152 = vrot.lane.b32.xlu0 %v2147, 64
    %v2153 = vpop.permute.xlu0 %2152
    %v2156 = vmul.f32 %v2119, %v2151
    %v2157 = vmul.f32 %v2121, %v2153
    %v2158 = vpack.c.bf16 %v2157, %v2156
    %v2160 = vunpack.c.l.b16 %v2158
    %v2161 = vunpack.c.h.b16 %v2158
    %v2162 = vpack.c.b16 %v2160, %v2160
    %v2163 = vpack.c.b16 %v2161, %v2161
    %2166 = vst.msk [vmem:[#allocation2] sm:$0xf] %vm69, %v2162
    %2167 = vst.msk [vmem:[#allocation2 + $0x4] sm:$0xf] %vm69, %v2163
    %s2168 = scalar_lea.vmem [#allocation3], 128
    %v2169 = vld [vmem:[%s2168] sm:$0xf]
    %v2170 = vld [vmem:[%s2168 + $0x4] sm:$0xf]
    %2173 = vrot.lane.b32.xlu0 %v2169, 64
    %v2174 = vpop.permute.xlu0 %2173
    %2175 = vrot.lane.b32.xlu0 %v2170, 64
    %v2176 = vpop.permute.xlu0 %2175
    %2179 = vst.msk [vmem:[#allocation2] sm:$0xf] %vm82, %v2174
    %2180 = vst.msk [vmem:[#allocation2 + $0x4] sm:$0xf] %vm82, %v2176
    %v2181 = vld [vmem:[#allocation2] sm:$0xf]
    %v2182 = vld [vmem:[#allocation2 + $0x4] sm:$0xf]
    %v2185 = vunpack.c.l.b16 %v2181
    %v2186 = vunpack.c.l.b16 %v2182
    %v2187 = vpack.c.b16 %v2186, %v2185
    %2189 = vmatprep.subr.bf16.mxu0 %v156
    %2190 = vmatpush1.bf16.msra.mxu0 %v155
    %2191 = vmatprep.subr.bf16.mxu0 %v154
    %2192 = vmatpush1.bf16.msra.mxu0 %v153
    %2193 = vmatprep.subr.bf16.mxu0 %v152
    %2194 = vmatpush1.bf16.msra.mxu0 %v151
    %2195 = vmatprep.subr.bf16.mxu0 %v150
    %2196 = vmatpush1.bf16.msra.mxu0 %v149
    %2197 = vmatprep.subr.bf16.mxu0 %v148
    %2198 = vmatpush1.bf16.msra.mxu0 %v147
    %2199 = vmatprep.subr.bf16.mxu0 %v146
    %2200 = vmatpush1.bf16.msra.mxu0 %v145
    %2201 = vmatprep.subr.bf16.mxu0 %v144
    %2202 = vmatpush1.bf16.msra.mxu0 %v143
    %2203 = vmatprep.subr.bf16.mxu0 %v142
    %2204 = vmatpush1.bf16.msra.mxu0 %v141
    %2205 = vmatprep.subr.bf16.mxu0 0
    %2206 = vmatpush2.bf16.msra.mxu0 0
    %2207 = vmatprep.subr.bf16.mxu0 0
    %2208 = vmatpush2.bf16.msra.mxu0 0
    %2209 = vmatprep.subr.bf16.mxu0 0
    %2210 = vmatpush2.bf16.msra.mxu0 0
    %2211 = vmatprep.subr.bf16.mxu0 0
    %2212 = vmatpush2.bf16.msra.mxu0 0
    %2213 = vmatprep.subr.bf16.mxu0 0
    %2214 = vmatpush2.bf16.msra.mxu0 0
    %2215 = vmatprep.subr.bf16.mxu0 0
    %2216 = vmatpush2.bf16.msra.mxu0 0
    %2217 = vmatprep.subr.bf16.mxu0 0
    %2218 = vmatpush2.bf16.msra.mxu0 0
    %2219 = vmatprep.subr.bf16.mxu0 0
    %2220 = vmatpush2.bf16.msra.mxu0 0
    %2221 = vmatprep.mubr.bf16.mxu0 0
    %2222 = vmatmul.mubr.bf16.gmra.mxu0 %v2187
    %v2223 = vpop.f32.mrf.mxu0
    %v2224 = vadd.f32 0.0, %v2223
    %v2225 = vpop.f32.mrf.mxu0
    %v2226 = vadd.f32 0.0, %v2225
    %v2227 = vpop.f32.mrf.mxu0
    %v2228 = vadd.f32 0.0, %v2227
    %v2229 = vpop.f32.mrf.mxu0
    %v2230 = vadd.f32 0.0, %v2229
    %2231 = vdwg.mxu0
    %v2232 = vmul.f32 %v2224, 0.5
    %v2233 = vmul.f32 %v2226, 0.5
    %v2234 = vmul.f32 %v2228, 0.5
    %v2235 = vmul.f32 %v2230, 0.5
    %v2236 = vtanh.pop %v2232
    %v2237 = vtanh.pop %v2233
    %v2238 = vtanh.pop %v2234
    %v2239 = vtanh.pop %v2235
    %v2240 = vmul.f32 %v2236, 0.5
    %v2241 = vmul.f32 %v2237, 0.5
    %v2242 = vmul.f32 %v2238, 0.5
    %v2243 = vmul.f32 %v2239, 0.5
    %v2244 = vadd.f32 %v2240, 0.5
    %v2245 = vadd.f32 %v2241, 0.5
    %v2246 = vadd.f32 %v2242, 0.5
    %v2247 = vadd.f32 %v2243, 0.5
    %v2248 = vtanh.pop %v2226
    %v2249 = vtanh.pop %v2230
    %v2250 = vmul.f32 %v2244, %v2144
    %v2251 = vmul.f32 %v2246, %v2145
    %2254 = vrot.lane.b32.xlu0 %v2248, 64
    %v2255 = vpop.permute.xlu0 %2254
    %2256 = vrot.lane.b32.xlu0 %v2249, 64
    %v2257 = vpop.permute.xlu0 %2256
    %v2260 = vmul.f32 %v2244, %v2255
    %v2261 = vmul.f32 %v2246, %v2257
    %2264 = vrot.lane.b32.xlu0 %v2260, 64
    %v2265 = vpop.permute.xlu0 %2264
    %2266 = vrot.lane.b32.xlu0 %v2261, 64
    %v2267 = vpop.permute.xlu0 %2266
    %v2270 = vadd.f32 %v2250, %v2265
    %v2271 = vadd.f32 %v2251, %v2267
    %v2272 = vtanh.pop %v2270
    %v2273 = vtanh.pop %v2271
    %2276 = vrot.lane.b32.xlu0 %v2272, 64
    %v2277 = vpop.permute.xlu0 %2276
    %2278 = vrot.lane.b32.xlu0 %v2273, 64
    %v2279 = vpop.permute.xlu0 %2278
    %v2282 = vmul.f32 %v2245, %v2277
    %v2283 = vmul.f32 %v2247, %v2279
    %v2284 = vpack.c.bf16 %v2283, %v2282
    %v2286 = vunpack.c.l.b16 %v2284
    %v2287 = vunpack.c.h.b16 %v2284
    %v2288 = vpack.c.b16 %v2286, %v2286
    %v2289 = vpack.c.b16 %v2287, %v2287
    %2292 = vst.msk [vmem:[#allocation2] sm:$0xf] %vm69, %v2288
    %2293 = vst.msk [vmem:[#allocation2 + $0x4] sm:$0xf] %vm69, %v2289
    %s2294 = scalar_lea.vmem [#allocation3], 136
    %v2295 = vld [vmem:[%s2294] sm:$0xf]
    %v2296 = vld [vmem:[%s2294 + $0x4] sm:$0xf]
    %2299 = vrot.lane.b32.xlu0 %v2295, 64
    %v2300 = vpop.permute.xlu0 %2299
    %2301 = vrot.lane.b32.xlu0 %v2296, 64
    %v2302 = vpop.permute.xlu0 %2301
    %2305 = vst.msk [vmem:[#allocation2] sm:$0xf] %vm82, %v2300
    %2306 = vst.msk [vmem:[#allocation2 + $0x4] sm:$0xf] %vm82, %v2302
    %v2307 = vld [vmem:[#allocation2] sm:$0xf]
    %v2308 = vld [vmem:[#allocation2 + $0x4] sm:$0xf]
    %v2311 = vunpack.c.l.b16 %v2307
    %v2312 = vunpack.c.l.b16 %v2308
    %v2313 = vpack.c.b16 %v2312, %v2311
    %2315 = vmatprep.subr.bf16.mxu0 %v156
    %2316 = vmatpush1.bf16.msra.mxu0 %v155
    %2317 = vmatprep.subr.bf16.mxu0 %v154
    %2318 = vmatpush1.bf16.msra.mxu0 %v153
    %2319 = vmatprep.subr.bf16.mxu0 %v152
    %2320 = vmatpush1.bf16.msra.mxu0 %v151
    %2321 = vmatprep.subr.bf16.mxu0 %v150
    %2322 = vmatpush1.bf16.msra.mxu0 %v149
    %2323 = vmatprep.subr.bf16.mxu0 %v148
    %2324 = vmatpush1.bf16.msra.mxu0 %v147
    %2325 = vmatprep.subr.bf16.mxu0 %v146
    %2326 = vmatpush1.bf16.msra.mxu0 %v145
    %2327 = vmatprep.subr.bf16.mxu0 %v144
    %2328 = vmatpush1.bf16.msra.mxu0 %v143
    %2329 = vmatprep.subr.bf16.mxu0 %v142
    %2330 = vmatpush1.bf16.msra.mxu0 %v141
    %2331 = vmatprep.subr.bf16.mxu0 0
    %2332 = vmatpush2.bf16.msra.mxu0 0
    %2333 = vmatprep.subr.bf16.mxu0 0
    %2334 = vmatpush2.bf16.msra.mxu0 0
    %2335 = vmatprep.subr.bf16.mxu0 0
    %2336 = vmatpush2.bf16.msra.mxu0 0
    %2337 = vmatprep.subr.bf16.mxu0 0
    %2338 = vmatpush2.bf16.msra.mxu0 0
    %2339 = vmatprep.subr.bf16.mxu0 0
    %2340 = vmatpush2.bf16.msra.mxu0 0
    %2341 = vmatprep.subr.bf16.mxu0 0
    %2342 = vmatpush2.bf16.msra.mxu0 0
    %2343 = vmatprep.subr.bf16.mxu0 0
    %2344 = vmatpush2.bf16.msra.mxu0 0
    %2345 = vmatprep.subr.bf16.mxu0 0
    %2346 = vmatpush2.bf16.msra.mxu0 0
    %2347 = vmatprep.mubr.bf16.mxu0 0
    %2348 = vmatmul.mubr.bf16.gmra.mxu0 %v2313
    %v2349 = vpop.f32.mrf.mxu0
    %v2350 = vadd.f32 0.0, %v2349
    %v2351 = vpop.f32.mrf.mxu0
    %v2352 = vadd.f32 0.0, %v2351
    %v2353 = vpop.f32.mrf.mxu0
    %v2354 = vadd.f32 0.0, %v2353
    %v2355 = vpop.f32.mrf.mxu0
    %v2356 = vadd.f32 0.0, %v2355
    %2357 = vdwg.mxu0
    %v2358 = vmul.f32 %v2350, 0.5
    %v2359 = vmul.f32 %v2352, 0.5
    %v2360 = vmul.f32 %v2354, 0.5
    %v2361 = vmul.f32 %v2356, 0.5
    %v2362 = vtanh.pop %v2358
    %v2363 = vtanh.pop %v2359
    %v2364 = vtanh.pop %v2360
    %v2365 = vtanh.pop %v2361
    %v2366 = vmul.f32 %v2362, 0.5
    %v2367 = vmul.f32 %v2363, 0.5
    %v2368 = vmul.f32 %v2364, 0.5
    %v2369 = vmul.f32 %v2365, 0.5
    %v2370 = vadd.f32 %v2366, 0.5
    %v2371 = vadd.f32 %v2367, 0.5
    %v2372 = vadd.f32 %v2368, 0.5
    %v2373 = vadd.f32 %v2369, 0.5
    %v2374 = vtanh.pop %v2352
    %v2375 = vtanh.pop %v2356
    %v2376 = vmul.f32 %v2370, %v2270
    %v2377 = vmul.f32 %v2372, %v2271
    %2380 = vrot.lane.b32.xlu0 %v2374, 64
    %v2381 = vpop.permute.xlu0 %2380
    %2382 = vrot.lane.b32.xlu0 %v2375, 64
    %v2383 = vpop.permute.xlu0 %2382
    %v2386 = vmul.f32 %v2370, %v2381
    %v2387 = vmul.f32 %v2372, %v2383
    %2390 = vrot.lane.b32.xlu0 %v2386, 64
    %v2391 = vpop.permute.xlu0 %2390
    %2392 = vrot.lane.b32.xlu0 %v2387, 64
    %v2393 = vpop.permute.xlu0 %2392
    %v2396 = vadd.f32 %v2376, %v2391
    %v2397 = vadd.f32 %v2377, %v2393
    %v2398 = vtanh.pop %v2396
    %v2399 = vtanh.pop %v2397
    %2402 = vrot.lane.b32.xlu0 %v2398, 64
    %v2403 = vpop.permute.xlu0 %2402
    %2404 = vrot.lane.b32.xlu0 %v2399, 64
    %v2405 = vpop.permute.xlu0 %2404
    %v2408 = vmul.f32 %v2371, %v2403
    %v2409 = vmul.f32 %v2373, %v2405
    %v2410 = vpack.c.bf16 %v2409, %v2408
    %v2412 = vunpack.c.l.b16 %v2410
    %v2413 = vunpack.c.h.b16 %v2410
    %v2414 = vpack.c.b16 %v2412, %v2412
    %v2415 = vpack.c.b16 %v2413, %v2413
    %2418 = vst.msk [vmem:[#allocation2] sm:$0xf] %vm69, %v2414
    %2419 = vst.msk [vmem:[#allocation2 + $0x4] sm:$0xf] %vm69, %v2415
    %s2420 = scalar_lea.vmem [#allocation3], 144
    %v2421 = vld [vmem:[%s2420] sm:$0xf]
    %v2422 = vld [vmem:[%s2420 + $0x4] sm:$0xf]
    %2425 = vrot.lane.b32.xlu0 %v2421, 64
    %v2426 = vpop.permute.xlu0 %2425
    %2427 = vrot.lane.b32.xlu0 %v2422, 64
    %v2428 = vpop.permute.xlu0 %2427
    %2431 = vst.msk [vmem:[#allocation2] sm:$0xf] %vm82, %v2426
    %2432 = vst.msk [vmem:[#allocation2 + $0x4] sm:$0xf] %vm82, %v2428
    %v2433 = vld [vmem:[#allocation2] sm:$0xf]
    %v2434 = vld [vmem:[#allocation2 + $0x4] sm:$0xf]
    %v2437 = vunpack.c.l.b16 %v2433
    %v2438 = vunpack.c.l.b16 %v2434
    %v2439 = vpack.c.b16 %v2438, %v2437
    %2441 = vmatprep.subr.bf16.mxu0 %v156
    %2442 = vmatpush1.bf16.msra.mxu0 %v155
    %2443 = vmatprep.subr.bf16.mxu0 %v154
    %2444 = vmatpush1.bf16.msra.mxu0 %v153
    %2445 = vmatprep.subr.bf16.mxu0 %v152
    %2446 = vmatpush1.bf16.msra.mxu0 %v151
    %2447 = vmatprep.subr.bf16.mxu0 %v150
    %2448 = vmatpush1.bf16.msra.mxu0 %v149
    %2449 = vmatprep.subr.bf16.mxu0 %v148
    %2450 = vmatpush1.bf16.msra.mxu0 %v147
    %2451 = vmatprep.subr.bf16.mxu0 %v146
    %2452 = vmatpush1.bf16.msra.mxu0 %v145
    %2453 = vmatprep.subr.bf16.mxu0 %v144
    %2454 = vmatpush1.bf16.msra.mxu0 %v143
    %2455 = vmatprep.subr.bf16.mxu0 %v142
    %2456 = vmatpush1.bf16.msra.mxu0 %v141
    %2457 = vmatprep.subr.bf16.mxu0 0
    %2458 = vmatpush2.bf16.msra.mxu0 0
    %2459 = vmatprep.subr.bf16.mxu0 0
    %2460 = vmatpush2.bf16.msra.mxu0 0
    %2461 = vmatprep.subr.bf16.mxu0 0
    %2462 = vmatpush2.bf16.msra.mxu0 0
    %2463 = vmatprep.subr.bf16.mxu0 0
    %2464 = vmatpush2.bf16.msra.mxu0 0
    %2465 = vmatprep.subr.bf16.mxu0 0
    %2466 = vmatpush2.bf16.msra.mxu0 0
    %2467 = vmatprep.subr.bf16.mxu0 0
    %2468 = vmatpush2.bf16.msra.mxu0 0
    %2469 = vmatprep.subr.bf16.mxu0 0
    %2470 = vmatpush2.bf16.msra.mxu0 0
    %2471 = vmatprep.subr.bf16.mxu0 0
    %2472 = vmatpush2.bf16.msra.mxu0 0
    %2473 = vmatprep.mubr.bf16.mxu0 0
    %2474 = vmatmul.mubr.bf16.gmra.mxu0 %v2439
    %v2475 = vpop.f32.mrf.mxu0
    %v2476 = vadd.f32 0.0, %v2475
    %v2477 = vpop.f32.mrf.mxu0
    %v2478 = vadd.f32 0.0, %v2477
    %v2479 = vpop.f32.mrf.mxu0
    %v2480 = vadd.f32 0.0, %v2479
    %v2481 = vpop.f32.mrf.mxu0
    %v2482 = vadd.f32 0.0, %v2481
    %2483 = vdwg.mxu0
    %v2484 = vmul.f32 %v2476, 0.5
    %v2485 = vmul.f32 %v2478, 0.5
    %v2486 = vmul.f32 %v2480, 0.5
    %v2487 = vmul.f32 %v2482, 0.5
    %v2488 = vtanh.pop %v2484
    %v2489 = vtanh.pop %v2485
    %v2490 = vtanh.pop %v2486
    %v2491 = vtanh.pop %v2487
    %v2492 = vmul.f32 %v2488, 0.5
    %v2493 = vmul.f32 %v2489, 0.5
    %v2494 = vmul.f32 %v2490, 0.5
    %v2495 = vmul.f32 %v2491, 0.5
    %v2496 = vadd.f32 %v2492, 0.5
    %v2497 = vadd.f32 %v2493, 0.5
    %v2498 = vadd.f32 %v2494, 0.5
    %v2499 = vadd.f32 %v2495, 0.5
    %v2500 = vtanh.pop %v2478
    %v2501 = vtanh.pop %v2482
    %v2502 = vmul.f32 %v2496, %v2396
    %v2503 = vmul.f32 %v2498, %v2397
    %2506 = vrot.lane.b32.xlu0 %v2500, 64
    %v2507 = vpop.permute.xlu0 %2506
    %2508 = vrot.lane.b32.xlu0 %v2501, 64
    %v2509 = vpop.permute.xlu0 %2508
    %v2512 = vmul.f32 %v2496, %v2507
    %v2513 = vmul.f32 %v2498, %v2509
    %2516 = vrot.lane.b32.xlu0 %v2512, 64
    %v2517 = vpop.permute.xlu0 %2516
    %2518 = vrot.lane.b32.xlu0 %v2513, 64
    %v2519 = vpop.permute.xlu0 %2518
    %v2522 = vadd.f32 %v2502, %v2517
    %v2523 = vadd.f32 %v2503, %v2519
    %v2524 = vtanh.pop %v2522
    %v2525 = vtanh.pop %v2523
    %2528 = vrot.lane.b32.xlu0 %v2524, 64
    %v2529 = vpop.permute.xlu0 %2528
    %2530 = vrot.lane.b32.xlu0 %v2525, 64
    %v2531 = vpop.permute.xlu0 %2530
    %v2534 = vmul.f32 %v2497, %v2529
    %v2535 = vmul.f32 %v2499, %v2531
    %v2536 = vpack.c.bf16 %v2535, %v2534
    %v2538 = vunpack.c.l.b16 %v2536
    %v2539 = vunpack.c.h.b16 %v2536
    %v2540 = vpack.c.b16 %v2538, %v2538
    %v2541 = vpack.c.b16 %v2539, %v2539
    %2544 = vst.msk [vmem:[#allocation2] sm:$0xf] %vm69, %v2540
    %2545 = vst.msk [vmem:[#allocation2 + $0x4] sm:$0xf] %vm69, %v2541
    %s2546 = scalar_lea.vmem [#allocation3], 152
    %v2547 = vld [vmem:[%s2546] sm:$0xf]
    %v2548 = vld [vmem:[%s2546 + $0x4] sm:$0xf]
    %2551 = vrot.lane.b32.xlu0 %v2547, 64
    %v2552 = vpop.permute.xlu0 %2551
    %2553 = vrot.lane.b32.xlu0 %v2548, 64
    %v2554 = vpop.permute.xlu0 %2553
    %2557 = vst.msk [vmem:[#allocation2] sm:$0xf] %vm82, %v2552
    %2558 = vst.msk [vmem:[#allocation2 + $0x4] sm:$0xf] %vm82, %v2554
    %v2559 = vld [vmem:[#allocation2] sm:$0xf]
    %v2560 = vld [vmem:[#allocation2 + $0x4] sm:$0xf]
    %v2563 = vunpack.c.l.b16 %v2559
    %v2564 = vunpack.c.l.b16 %v2560
    %v2565 = vpack.c.b16 %v2564, %v2563
    %2567 = vmatprep.subr.bf16.mxu0 %v156
    %2568 = vmatpush1.bf16.msra.mxu0 %v155
    %2569 = vmatprep.subr.bf16.mxu0 %v154
    %2570 = vmatpush1.bf16.msra.mxu0 %v153
    %2571 = vmatprep.subr.bf16.mxu0 %v152
    %2572 = vmatpush1.bf16.msra.mxu0 %v151
    %2573 = vmatprep.subr.bf16.mxu0 %v150
    %2574 = vmatpush1.bf16.msra.mxu0 %v149
    %2575 = vmatprep.subr.bf16.mxu0 %v148
    %2576 = vmatpush1.bf16.msra.mxu0 %v147
    %2577 = vmatprep.subr.bf16.mxu0 %v146
    %2578 = vmatpush1.bf16.msra.mxu0 %v145
    %2579 = vmatprep.subr.bf16.mxu0 %v144
    %2580 = vmatpush1.bf16.msra.mxu0 %v143
    %2581 = vmatprep.subr.bf16.mxu0 %v142
    %2582 = vmatpush1.bf16.msra.mxu0 %v141
    %2583 = vmatprep.subr.bf16.mxu0 0
    %2584 = vmatpush2.bf16.msra.mxu0 0
    %2585 = vmatprep.subr.bf16.mxu0 0
    %2586 = vmatpush2.bf16.msra.mxu0 0
    %2587 = vmatprep.subr.bf16.mxu0 0
    %2588 = vmatpush2.bf16.msra.mxu0 0
    %2589 = vmatprep.subr.bf16.mxu0 0
    %2590 = vmatpush2.bf16.msra.mxu0 0
    %2591 = vmatprep.subr.bf16.mxu0 0
    %2592 = vmatpush2.bf16.msra.mxu0 0
    %2593 = vmatprep.subr.bf16.mxu0 0
    %2594 = vmatpush2.bf16.msra.mxu0 0
    %2595 = vmatprep.subr.bf16.mxu0 0
    %2596 = vmatpush2.bf16.msra.mxu0 0
    %2597 = vmatprep.subr.bf16.mxu0 0
    %2598 = vmatpush2.bf16.msra.mxu0 0
    %2599 = vmatprep.mubr.bf16.mxu0 0
    %2600 = vmatmul.mubr.bf16.gmra.mxu0 %v2565
    %v2601 = vpop.f32.mrf.mxu0
    %v2602 = vadd.f32 0.0, %v2601
    %v2603 = vpop.f32.mrf.mxu0
    %v2604 = vadd.f32 0.0, %v2603
    %v2605 = vpop.f32.mrf.mxu0
    %v2606 = vadd.f32 0.0, %v2605
    %v2607 = vpop.f32.mrf.mxu0
    %v2608 = vadd.f32 0.0, %v2607
    %2609 = vdwg.mxu0
    %v2610 = vmul.f32 %v2602, 0.5
    %v2611 = vmul.f32 %v2604, 0.5
    %v2612 = vmul.f32 %v2606, 0.5
    %v2613 = vmul.f32 %v2608, 0.5
    %v2614 = vtanh.pop %v2610
    %v2615 = vtanh.pop %v2611
    %v2616 = vtanh.pop %v2612
    %v2617 = vtanh.pop %v2613
    %v2618 = vmul.f32 %v2614, 0.5
    %v2619 = vmul.f32 %v2615, 0.5
    %v2620 = vmul.f32 %v2616, 0.5
    %v2621 = vmul.f32 %v2617, 0.5
    %v2622 = vadd.f32 %v2618, 0.5
    %v2623 = vadd.f32 %v2619, 0.5
    %v2624 = vadd.f32 %v2620, 0.5
    %v2625 = vadd.f32 %v2621, 0.5
    %v2626 = vtanh.pop %v2604
    %v2627 = vtanh.pop %v2608
    %v2628 = vmul.f32 %v2622, %v2522
    %v2629 = vmul.f32 %v2624, %v2523
    %2632 = vrot.lane.b32.xlu0 %v2626, 64
    %v2633 = vpop.permute.xlu0 %2632
    %2634 = vrot.lane.b32.xlu0 %v2627, 64
    %v2635 = vpop.permute.xlu0 %2634
    %v2638 = vmul.f32 %v2622, %v2633
    %v2639 = vmul.f32 %v2624, %v2635
    %2642 = vrot.lane.b32.xlu0 %v2638, 64
    %v2643 = vpop.permute.xlu0 %2642
    %2644 = vrot.lane.b32.xlu0 %v2639, 64
    %v2645 = vpop.permute.xlu0 %2644
    %v2648 = vadd.f32 %v2628, %v2643
    %v2649 = vadd.f32 %v2629, %v2645
    %v2650 = vtanh.pop %v2648
    %v2651 = vtanh.pop %v2649
    %2654 = vrot.lane.b32.xlu0 %v2650, 64
    %v2655 = vpop.permute.xlu0 %2654
    %2656 = vrot.lane.b32.xlu0 %v2651, 64
    %v2657 = vpop.permute.xlu0 %2656
    %v2660 = vmul.f32 %v2623, %v2655
    %v2661 = vmul.f32 %v2625, %v2657
    %v2662 = vpack.c.bf16 %v2661, %v2660
    %v2664 = vunpack.c.l.b16 %v2662
    %v2665 = vunpack.c.h.b16 %v2662
    %v2666 = vpack.c.b16 %v2664, %v2664
    %v2667 = vpack.c.b16 %v2665, %v2665
    %2670 = vst.msk [vmem:[#allocation2] sm:$0xf] %vm69, %v2666
    %2671 = vst.msk [vmem:[#allocation2 + $0x4] sm:$0xf] %vm69, %v2667
    %s2672 = scalar_lea.vmem [#allocation3], 160
    %v2673 = vld [vmem:[%s2672] sm:$0xf]
    %v2674 = vld [vmem:[%s2672 + $0x4] sm:$0xf]
    %2677 = vrot.lane.b32.xlu0 %v2673, 64
    %v2678 = vpop.permute.xlu0 %2677
    %2679 = vrot.lane.b32.xlu0 %v2674, 64
    %v2680 = vpop.permute.xlu0 %2679
    %2683 = vst.msk [vmem:[#allocation2] sm:$0xf] %vm82, %v2678
    %2684 = vst.msk [vmem:[#allocation2 + $0x4] sm:$0xf] %vm82, %v2680
    %v2685 = vld [vmem:[#allocation2] sm:$0xf]
    %v2686 = vld [vmem:[#allocation2 + $0x4] sm:$0xf]
    %v2689 = vunpack.c.l.b16 %v2685
    %v2690 = vunpack.c.l.b16 %v2686
    %v2691 = vpack.c.b16 %v2690, %v2689
    %2693 = vmatprep.subr.bf16.mxu0 %v156
    %2694 = vmatpush1.bf16.msra.mxu0 %v155
    %2695 = vmatprep.subr.bf16.mxu0 %v154
    %2696 = vmatpush1.bf16.msra.mxu0 %v153
    %2697 = vmatprep.subr.bf16.mxu0 %v152
    %2698 = vmatpush1.bf16.msra.mxu0 %v151
    %2699 = vmatprep.subr.bf16.mxu0 %v150
    %2700 = vmatpush1.bf16.msra.mxu0 %v149
    %2701 = vmatprep.subr.bf16.mxu0 %v148
    %2702 = vmatpush1.bf16.msra.mxu0 %v147
    %2703 = vmatprep.subr.bf16.mxu0 %v146
    %2704 = vmatpush1.bf16.msra.mxu0 %v145
    %2705 = vmatprep.subr.bf16.mxu0 %v144
    %2706 = vmatpush1.bf16.msra.mxu0 %v143
    %2707 = vmatprep.subr.bf16.mxu0 %v142
    %2708 = vmatpush1.bf16.msra.mxu0 %v141
    %2709 = vmatprep.subr.bf16.mxu0 0
    %2710 = vmatpush2.bf16.msra.mxu0 0
    %2711 = vmatprep.subr.bf16.mxu0 0
    %2712 = vmatpush2.bf16.msra.mxu0 0
    %2713 = vmatprep.subr.bf16.mxu0 0
    %2714 = vmatpush2.bf16.msra.mxu0 0
    %2715 = vmatprep.subr.bf16.mxu0 0
    %2716 = vmatpush2.bf16.msra.mxu0 0
    %2717 = vmatprep.subr.bf16.mxu0 0
    %2718 = vmatpush2.bf16.msra.mxu0 0
    %2719 = vmatprep.subr.bf16.mxu0 0
    %2720 = vmatpush2.bf16.msra.mxu0 0
    %2721 = vmatprep.subr.bf16.mxu0 0
    %2722 = vmatpush2.bf16.msra.mxu0 0
    %2723 = vmatprep.subr.bf16.mxu0 0
    %2724 = vmatpush2.bf16.msra.mxu0 0
    %2725 = vmatprep.mubr.bf16.mxu0 0
    %2726 = vmatmul.mubr.bf16.gmra.mxu0 %v2691
    %v2727 = vpop.f32.mrf.mxu0
    %v2728 = vadd.f32 0.0, %v2727
    %v2729 = vpop.f32.mrf.mxu0
    %v2730 = vadd.f32 0.0, %v2729
    %v2731 = vpop.f32.mrf.mxu0
    %v2732 = vadd.f32 0.0, %v2731
    %v2733 = vpop.f32.mrf.mxu0
    %v2734 = vadd.f32 0.0, %v2733
    %2735 = vdwg.mxu0
    %v2736 = vmul.f32 %v2728, 0.5
    %v2737 = vmul.f32 %v2730, 0.5
    %v2738 = vmul.f32 %v2732, 0.5
    %v2739 = vmul.f32 %v2734, 0.5
    %v2740 = vtanh.pop %v2736
    %v2741 = vtanh.pop %v2737
    %v2742 = vtanh.pop %v2738
    %v2743 = vtanh.pop %v2739
    %v2744 = vmul.f32 %v2740, 0.5
    %v2745 = vmul.f32 %v2741, 0.5
    %v2746 = vmul.f32 %v2742, 0.5
    %v2747 = vmul.f32 %v2743, 0.5
    %v2748 = vadd.f32 %v2744, 0.5
    %v2749 = vadd.f32 %v2745, 0.5
    %v2750 = vadd.f32 %v2746, 0.5
    %v2751 = vadd.f32 %v2747, 0.5
    %v2752 = vtanh.pop %v2730
    %v2753 = vtanh.pop %v2734
    %v2754 = vmul.f32 %v2748, %v2648
    %v2755 = vmul.f32 %v2750, %v2649
    %2758 = vrot.lane.b32.xlu0 %v2752, 64
    %v2759 = vpop.permute.xlu0 %2758
    %2760 = vrot.lane.b32.xlu0 %v2753, 64
    %v2761 = vpop.permute.xlu0 %2760
    %v2764 = vmul.f32 %v2748, %v2759
    %v2765 = vmul.f32 %v2750, %v2761
    %2768 = vrot.lane.b32.xlu0 %v2764, 64
    %v2769 = vpop.permute.xlu0 %2768
    %2770 = vrot.lane.b32.xlu0 %v2765, 64
    %v2771 = vpop.permute.xlu0 %2770
    %v2774 = vadd.f32 %v2754, %v2769
    %v2775 = vadd.f32 %v2755, %v2771
    %v2776 = vtanh.pop %v2774
    %v2777 = vtanh.pop %v2775
    %2780 = vrot.lane.b32.xlu0 %v2776, 64
    %v2781 = vpop.permute.xlu0 %2780
    %2782 = vrot.lane.b32.xlu0 %v2777, 64
    %v2783 = vpop.permute.xlu0 %2782
    %v2786 = vmul.f32 %v2749, %v2781
    %v2787 = vmul.f32 %v2751, %v2783
    %v2788 = vpack.c.bf16 %v2787, %v2786
    %v2790 = vunpack.c.l.b16 %v2788
    %v2791 = vunpack.c.h.b16 %v2788
    %v2792 = vpack.c.b16 %v2790, %v2790
    %v2793 = vpack.c.b16 %v2791, %v2791
    %2796 = vst.msk [vmem:[#allocation2] sm:$0xf] %vm69, %v2792
    %2797 = vst.msk [vmem:[#allocation2 + $0x4] sm:$0xf] %vm69, %v2793
    %s2798 = scalar_lea.vmem [#allocation3], 168
    %v2799 = vld [vmem:[%s2798] sm:$0xf]
    %v2800 = vld [vmem:[%s2798 + $0x4] sm:$0xf]
    %2803 = vrot.lane.b32.xlu0 %v2799, 64
    %v2804 = vpop.permute.xlu0 %2803
    %2805 = vrot.lane.b32.xlu0 %v2800, 64
    %v2806 = vpop.permute.xlu0 %2805
    %2809 = vst.msk [vmem:[#allocation2] sm:$0xf] %vm82, %v2804
    %2810 = vst.msk [vmem:[#allocation2 + $0x4] sm:$0xf] %vm82, %v2806
    %v2811 = vld [vmem:[#allocation2] sm:$0xf]
    %v2812 = vld [vmem:[#allocation2 + $0x4] sm:$0xf]
    %v2815 = vunpack.c.l.b16 %v2811
    %v2816 = vunpack.c.l.b16 %v2812
    %v2817 = vpack.c.b16 %v2816, %v2815
    %2819 = vmatprep.subr.bf16.mxu0 %v156
    %2820 = vmatpush1.bf16.msra.mxu0 %v155
    %2821 = vmatprep.subr.bf16.mxu0 %v154
    %2822 = vmatpush1.bf16.msra.mxu0 %v153
    %2823 = vmatprep.subr.bf16.mxu0 %v152
    %2824 = vmatpush1.bf16.msra.mxu0 %v151
    %2825 = vmatprep.subr.bf16.mxu0 %v150
    %2826 = vmatpush1.bf16.msra.mxu0 %v149
    %2827 = vmatprep.subr.bf16.mxu0 %v148
    %2828 = vmatpush1.bf16.msra.mxu0 %v147
    %2829 = vmatprep.subr.bf16.mxu0 %v146
    %2830 = vmatpush1.bf16.msra.mxu0 %v145
    %2831 = vmatprep.subr.bf16.mxu0 %v144
    %2832 = vmatpush1.bf16.msra.mxu0 %v143
    %2833 = vmatprep.subr.bf16.mxu0 %v142
    %2834 = vmatpush1.bf16.msra.mxu0 %v141
    %2835 = vmatprep.subr.bf16.mxu0 0
    %2836 = vmatpush2.bf16.msra.mxu0 0
    %2837 = vmatprep.subr.bf16.mxu0 0
    %2838 = vmatpush2.bf16.msra.mxu0 0
    %2839 = vmatprep.subr.bf16.mxu0 0
    %2840 = vmatpush2.bf16.msra.mxu0 0
    %2841 = vmatprep.subr.bf16.mxu0 0
    %2842 = vmatpush2.bf16.msra.mxu0 0
    %2843 = vmatprep.subr.bf16.mxu0 0
    %2844 = vmatpush2.bf16.msra.mxu0 0
    %2845 = vmatprep.subr.bf16.mxu0 0
    %2846 = vmatpush2.bf16.msra.mxu0 0
    %2847 = vmatprep.subr.bf16.mxu0 0
    %2848 = vmatpush2.bf16.msra.mxu0 0
    %2849 = vmatprep.subr.bf16.mxu0 0
    %2850 = vmatpush2.bf16.msra.mxu0 0
    %2851 = vmatprep.mubr.bf16.mxu0 0
    %2852 = vmatmul.mubr.bf16.gmra.mxu0 %v2817
    %v2853 = vpop.f32.mrf.mxu0
    %v2854 = vadd.f32 0.0, %v2853
    %v2855 = vpop.f32.mrf.mxu0
    %v2856 = vadd.f32 0.0, %v2855
    %v2857 = vpop.f32.mrf.mxu0
    %v2858 = vadd.f32 0.0, %v2857
    %v2859 = vpop.f32.mrf.mxu0
    %v2860 = vadd.f32 0.0, %v2859
    %2861 = vdwg.mxu0
    %v2862 = vmul.f32 %v2854, 0.5
    %v2863 = vmul.f32 %v2856, 0.5
    %v2864 = vmul.f32 %v2858, 0.5
    %v2865 = vmul.f32 %v2860, 0.5
    %v2866 = vtanh.pop %v2862
    %v2867 = vtanh.pop %v2863
    %v2868 = vtanh.pop %v2864
    %v2869 = vtanh.pop %v2865
    %v2870 = vmul.f32 %v2866, 0.5
    %v2871 = vmul.f32 %v2867, 0.5
    %v2872 = vmul.f32 %v2868, 0.5
    %v2873 = vmul.f32 %v2869, 0.5
    %v2874 = vadd.f32 %v2870, 0.5
    %v2875 = vadd.f32 %v2871, 0.5
    %v2876 = vadd.f32 %v2872, 0.5
    %v2877 = vadd.f32 %v2873, 0.5
    %v2878 = vtanh.pop %v2856
    %v2879 = vtanh.pop %v2860
    %v2880 = vmul.f32 %v2874, %v2774
    %v2881 = vmul.f32 %v2876, %v2775
    %2884 = vrot.lane.b32.xlu0 %v2878, 64
    %v2885 = vpop.permute.xlu0 %2884
    %2886 = vrot.lane.b32.xlu0 %v2879, 64
    %v2887 = vpop.permute.xlu0 %2886
    %v2890 = vmul.f32 %v2874, %v2885
    %v2891 = vmul.f32 %v2876, %v2887
    %2894 = vrot.lane.b32.xlu0 %v2890, 64
    %v2895 = vpop.permute.xlu0 %2894
    %2896 = vrot.lane.b32.xlu0 %v2891, 64
    %v2897 = vpop.permute.xlu0 %2896
    %v2900 = vadd.f32 %v2880, %v2895
    %v2901 = vadd.f32 %v2881, %v2897
    %v2902 = vtanh.pop %v2900
    %v2903 = vtanh.pop %v2901
    %2906 = vrot.lane.b32.xlu0 %v2902, 64
    %v2907 = vpop.permute.xlu0 %2906
    %2908 = vrot.lane.b32.xlu0 %v2903, 64
    %v2909 = vpop.permute.xlu0 %2908
    %v2912 = vmul.f32 %v2875, %v2907
    %v2913 = vmul.f32 %v2877, %v2909
    %v2914 = vpack.c.bf16 %v2913, %v2912
    %v2916 = vunpack.c.l.b16 %v2914
    %v2917 = vunpack.c.h.b16 %v2914
    %v2918 = vpack.c.b16 %v2916, %v2916
    %v2919 = vpack.c.b16 %v2917, %v2917
    %2922 = vst.msk [vmem:[#allocation2] sm:$0xf] %vm69, %v2918
    %2923 = vst.msk [vmem:[#allocation2 + $0x4] sm:$0xf] %vm69, %v2919
    %s2924 = scalar_lea.vmem [#allocation3], 176
    %v2925 = vld [vmem:[%s2924] sm:$0xf]
    %v2926 = vld [vmem:[%s2924 + $0x4] sm:$0xf]
    %2929 = vrot.lane.b32.xlu0 %v2925, 64
    %v2930 = vpop.permute.xlu0 %2929
    %2931 = vrot.lane.b32.xlu0 %v2926, 64
    %v2932 = vpop.permute.xlu0 %2931
    %2935 = vst.msk [vmem:[#allocation2] sm:$0xf] %vm82, %v2930
    %2936 = vst.msk [vmem:[#allocation2 + $0x4] sm:$0xf] %vm82, %v2932
    %v2937 = vld [vmem:[#allocation2] sm:$0xf]
    %v2938 = vld [vmem:[#allocation2 + $0x4] sm:$0xf]
    %v2941 = vunpack.c.l.b16 %v2937
    %v2942 = vunpack.c.l.b16 %v2938
    %v2943 = vpack.c.b16 %v2942, %v2941
    %2945 = vmatprep.subr.bf16.mxu0 %v156
    %2946 = vmatpush1.bf16.msra.mxu0 %v155
    %2947 = vmatprep.subr.bf16.mxu0 %v154
    %2948 = vmatpush1.bf16.msra.mxu0 %v153
    %2949 = vmatprep.subr.bf16.mxu0 %v152
    %2950 = vmatpush1.bf16.msra.mxu0 %v151
    %2951 = vmatprep.subr.bf16.mxu0 %v150
    %2952 = vmatpush1.bf16.msra.mxu0 %v149
    %2953 = vmatprep.subr.bf16.mxu0 %v148
    %2954 = vmatpush1.bf16.msra.mxu0 %v147
    %2955 = vmatprep.subr.bf16.mxu0 %v146
    %2956 = vmatpush1.bf16.msra.mxu0 %v145
    %2957 = vmatprep.subr.bf16.mxu0 %v144
    %2958 = vmatpush1.bf16.msra.mxu0 %v143
    %2959 = vmatprep.subr.bf16.mxu0 %v142
    %2960 = vmatpush1.bf16.msra.mxu0 %v141
    %2961 = vmatprep.subr.bf16.mxu0 0
    %2962 = vmatpush2.bf16.msra.mxu0 0
    %2963 = vmatprep.subr.bf16.mxu0 0
    %2964 = vmatpush2.bf16.msra.mxu0 0
    %2965 = vmatprep.subr.bf16.mxu0 0
    %2966 = vmatpush2.bf16.msra.mxu0 0
    %2967 = vmatprep.subr.bf16.mxu0 0
    %2968 = vmatpush2.bf16.msra.mxu0 0
    %2969 = vmatprep.subr.bf16.mxu0 0
    %2970 = vmatpush2.bf16.msra.mxu0 0
    %2971 = vmatprep.subr.bf16.mxu0 0
    %2972 = vmatpush2.bf16.msra.mxu0 0
    %2973 = vmatprep.subr.bf16.mxu0 0
    %2974 = vmatpush2.bf16.msra.mxu0 0
    %2975 = vmatprep.subr.bf16.mxu0 0
    %2976 = vmatpush2.bf16.msra.mxu0 0
    %2977 = vmatprep.mubr.bf16.mxu0 0
    %2978 = vmatmul.mubr.bf16.gmra.mxu0 %v2943
    %v2979 = vpop.f32.mrf.mxu0
    %v2980 = vadd.f32 0.0, %v2979
    %v2981 = vpop.f32.mrf.mxu0
    %v2982 = vadd.f32 0.0, %v2981
    %v2983 = vpop.f32.mrf.mxu0
    %v2984 = vadd.f32 0.0, %v2983
    %v2985 = vpop.f32.mrf.mxu0
    %v2986 = vadd.f32 0.0, %v2985
    %2987 = vdwg.mxu0
    %v2988 = vmul.f32 %v2980, 0.5
    %v2989 = vmul.f32 %v2982, 0.5
    %v2990 = vmul.f32 %v2984, 0.5
    %v2991 = vmul.f32 %v2986, 0.5
    %v2992 = vtanh.pop %v2988
    %v2993 = vtanh.pop %v2989
    %v2994 = vtanh.pop %v2990
    %v2995 = vtanh.pop %v2991
    %v2996 = vmul.f32 %v2992, 0.5
    %v2997 = vmul.f32 %v2993, 0.5
    %v2998 = vmul.f32 %v2994, 0.5
    %v2999 = vmul.f32 %v2995, 0.5
    %v3000 = vadd.f32 %v2996, 0.5
    %v3001 = vadd.f32 %v2997, 0.5
    %v3002 = vadd.f32 %v2998, 0.5
    %v3003 = vadd.f32 %v2999, 0.5
    %v3004 = vtanh.pop %v2982
    %v3005 = vtanh.pop %v2986
    %v3006 = vmul.f32 %v3000, %v2900
    %v3007 = vmul.f32 %v3002, %v2901
    %3010 = vrot.lane.b32.xlu0 %v3004, 64
    %v3011 = vpop.permute.xlu0 %3010
    %3012 = vrot.lane.b32.xlu0 %v3005, 64
    %v3013 = vpop.permute.xlu0 %3012
    %v3016 = vmul.f32 %v3000, %v3011
    %v3017 = vmul.f32 %v3002, %v3013
    %3020 = vrot.lane.b32.xlu0 %v3016, 64
    %v3021 = vpop.permute.xlu0 %3020
    %3022 = vrot.lane.b32.xlu0 %v3017, 64
    %v3023 = vpop.permute.xlu0 %3022
    %v3026 = vadd.f32 %v3006, %v3021
    %v3027 = vadd.f32 %v3007, %v3023
    %v3028 = vtanh.pop %v3026
    %v3029 = vtanh.pop %v3027
    %3032 = vrot.lane.b32.xlu0 %v3028, 64
    %v3033 = vpop.permute.xlu0 %3032
    %3034 = vrot.lane.b32.xlu0 %v3029, 64
    %v3035 = vpop.permute.xlu0 %3034
    %v3038 = vmul.f32 %v3001, %v3033
    %v3039 = vmul.f32 %v3003, %v3035
    %v3040 = vpack.c.bf16 %v3039, %v3038
    %v3042 = vunpack.c.l.b16 %v3040
    %v3043 = vunpack.c.h.b16 %v3040
    %v3044 = vpack.c.b16 %v3042, %v3042
    %v3045 = vpack.c.b16 %v3043, %v3043
    %3048 = vst.msk [vmem:[#allocation2] sm:$0xf] %vm69, %v3044
    %3049 = vst.msk [vmem:[#allocation2 + $0x4] sm:$0xf] %vm69, %v3045
    %s3050 = scalar_lea.vmem [#allocation3], 184
    %v3051 = vld [vmem:[%s3050] sm:$0xf]
    %v3052 = vld [vmem:[%s3050 + $0x4] sm:$0xf]
    %3055 = vrot.lane.b32.xlu0 %v3051, 64
    %v3056 = vpop.permute.xlu0 %3055
    %3057 = vrot.lane.b32.xlu0 %v3052, 64
    %v3058 = vpop.permute.xlu0 %3057
    %3061 = vst.msk [vmem:[#allocation2] sm:$0xf] %vm82, %v3056
    %3062 = vst.msk [vmem:[#allocation2 + $0x4] sm:$0xf] %vm82, %v3058
    %v3063 = vld [vmem:[#allocation2] sm:$0xf]
    %v3064 = vld [vmem:[#allocation2 + $0x4] sm:$0xf]
    %v3067 = vunpack.c.l.b16 %v3063
    %v3068 = vunpack.c.l.b16 %v3064
    %v3069 = vpack.c.b16 %v3068, %v3067
    %3071 = vmatprep.subr.bf16.mxu0 %v156
    %3072 = vmatpush1.bf16.msra.mxu0 %v155
    %3073 = vmatprep.subr.bf16.mxu0 %v154
    %3074 = vmatpush1.bf16.msra.mxu0 %v153
    %3075 = vmatprep.subr.bf16.mxu0 %v152
    %3076 = vmatpush1.bf16.msra.mxu0 %v151
    %3077 = vmatprep.subr.bf16.mxu0 %v150
    %3078 = vmatpush1.bf16.msra.mxu0 %v149
    %3079 = vmatprep.subr.bf16.mxu0 %v148
    %3080 = vmatpush1.bf16.msra.mxu0 %v147
    %3081 = vmatprep.subr.bf16.mxu0 %v146
    %3082 = vmatpush1.bf16.msra.mxu0 %v145
    %3083 = vmatprep.subr.bf16.mxu0 %v144
    %3084 = vmatpush1.bf16.msra.mxu0 %v143
    %3085 = vmatprep.subr.bf16.mxu0 %v142
    %3086 = vmatpush1.bf16.msra.mxu0 %v141
    %3087 = vmatprep.subr.bf16.mxu0 0
    %3088 = vmatpush2.bf16.msra.mxu0 0
    %3089 = vmatprep.subr.bf16.mxu0 0
    %3090 = vmatpush2.bf16.msra.mxu0 0
    %3091 = vmatprep.subr.bf16.mxu0 0
    %3092 = vmatpush2.bf16.msra.mxu0 0
    %3093 = vmatprep.subr.bf16.mxu0 0
    %3094 = vmatpush2.bf16.msra.mxu0 0
    %3095 = vmatprep.subr.bf16.mxu0 0
    %3096 = vmatpush2.bf16.msra.mxu0 0
    %3097 = vmatprep.subr.bf16.mxu0 0
    %3098 = vmatpush2.bf16.msra.mxu0 0
    %3099 = vmatprep.subr.bf16.mxu0 0
    %3100 = vmatpush2.bf16.msra.mxu0 0
    %3101 = vmatprep.subr.bf16.mxu0 0
    %3102 = vmatpush2.bf16.msra.mxu0 0
    %3103 = vmatprep.mubr.bf16.mxu0 0
    %3104 = vmatmul.mubr.bf16.gmra.mxu0 %v3069
    %v3105 = vpop.f32.mrf.mxu0
    %v3106 = vadd.f32 0.0, %v3105
    %v3107 = vpop.f32.mrf.mxu0
    %v3108 = vadd.f32 0.0, %v3107
    %v3109 = vpop.f32.mrf.mxu0
    %v3110 = vadd.f32 0.0, %v3109
    %v3111 = vpop.f32.mrf.mxu0
    %v3112 = vadd.f32 0.0, %v3111
    %3113 = vdwg.mxu0
    %v3114 = vmul.f32 %v3106, 0.5
    %v3115 = vmul.f32 %v3108, 0.5
    %v3116 = vmul.f32 %v3110, 0.5
    %v3117 = vmul.f32 %v3112, 0.5
    %v3118 = vtanh.pop %v3114
    %v3119 = vtanh.pop %v3115
    %v3120 = vtanh.pop %v3116
    %v3121 = vtanh.pop %v3117
    %v3122 = vmul.f32 %v3118, 0.5
    %v3123 = vmul.f32 %v3119, 0.5
    %v3124 = vmul.f32 %v3120, 0.5
    %v3125 = vmul.f32 %v3121, 0.5
    %v3126 = vadd.f32 %v3122, 0.5
    %v3127 = vadd.f32 %v3123, 0.5
    %v3128 = vadd.f32 %v3124, 0.5
    %v3129 = vadd.f32 %v3125, 0.5
    %v3130 = vtanh.pop %v3108
    %v3131 = vtanh.pop %v3112
    %v3132 = vmul.f32 %v3126, %v3026
    %v3133 = vmul.f32 %v3128, %v3027
    %3136 = vrot.lane.b32.xlu0 %v3130, 64
    %v3137 = vpop.permute.xlu0 %3136
    %3138 = vrot.lane.b32.xlu0 %v3131, 64
    %v3139 = vpop.permute.xlu0 %3138
    %v3142 = vmul.f32 %v3126, %v3137
    %v3143 = vmul.f32 %v3128, %v3139
    %3146 = vrot.lane.b32.xlu0 %v3142, 64
    %v3147 = vpop.permute.xlu0 %3146
    %3148 = vrot.lane.b32.xlu0 %v3143, 64
    %v3149 = vpop.permute.xlu0 %3148
    %v3152 = vadd.f32 %v3132, %v3147
    %v3153 = vadd.f32 %v3133, %v3149
    %v3154 = vtanh.pop %v3152
    %v3155 = vtanh.pop %v3153
    %3158 = vrot.lane.b32.xlu0 %v3154, 64
    %v3159 = vpop.permute.xlu0 %3158
    %3160 = vrot.lane.b32.xlu0 %v3155, 64
    %v3161 = vpop.permute.xlu0 %3160
    %v3164 = vmul.f32 %v3127, %v3159
    %v3165 = vmul.f32 %v3129, %v3161
    %v3166 = vpack.c.bf16 %v3165, %v3164
    %v3168 = vunpack.c.l.b16 %v3166
    %v3169 = vunpack.c.h.b16 %v3166
    %v3170 = vpack.c.b16 %v3168, %v3168
    %v3171 = vpack.c.b16 %v3169, %v3169
    %3174 = vst.msk [vmem:[#allocation2] sm:$0xf] %vm69, %v3170
    %3175 = vst.msk [vmem:[#allocation2 + $0x4] sm:$0xf] %vm69, %v3171
    %s3176 = scalar_lea.vmem [#allocation3], 192
    %v3177 = vld [vmem:[%s3176] sm:$0xf]
    %v3178 = vld [vmem:[%s3176 + $0x4] sm:$0xf]
    %3181 = vrot.lane.b32.xlu0 %v3177, 64
    %v3182 = vpop.permute.xlu0 %3181
    %3183 = vrot.lane.b32.xlu0 %v3178, 64
    %v3184 = vpop.permute.xlu0 %3183
    %3187 = vst.msk [vmem:[#allocation2] sm:$0xf] %vm82, %v3182
    %3188 = vst.msk [vmem:[#allocation2 + $0x4] sm:$0xf] %vm82, %v3184
    %v3189 = vld [vmem:[#allocation2] sm:$0xf]
    %v3190 = vld [vmem:[#allocation2 + $0x4] sm:$0xf]
    %v3193 = vunpack.c.l.b16 %v3189
    %v3194 = vunpack.c.l.b16 %v3190
    %v3195 = vpack.c.b16 %v3194, %v3193
    %3197 = vmatprep.subr.bf16.mxu0 %v156
    %3198 = vmatpush1.bf16.msra.mxu0 %v155
    %3199 = vmatprep.subr.bf16.mxu0 %v154
    %3200 = vmatpush1.bf16.msra.mxu0 %v153
    %3201 = vmatprep.subr.bf16.mxu0 %v152
    %3202 = vmatpush1.bf16.msra.mxu0 %v151
    %3203 = vmatprep.subr.bf16.mxu0 %v150
    %3204 = vmatpush1.bf16.msra.mxu0 %v149
    %3205 = vmatprep.subr.bf16.mxu0 %v148
    %3206 = vmatpush1.bf16.msra.mxu0 %v147
    %3207 = vmatprep.subr.bf16.mxu0 %v146
    %3208 = vmatpush1.bf16.msra.mxu0 %v145
    %3209 = vmatprep.subr.bf16.mxu0 %v144
    %3210 = vmatpush1.bf16.msra.mxu0 %v143
    %3211 = vmatprep.subr.bf16.mxu0 %v142
    %3212 = vmatpush1.bf16.msra.mxu0 %v141
    %3213 = vmatprep.subr.bf16.mxu0 0
    %3214 = vmatpush2.bf16.msra.mxu0 0
    %3215 = vmatprep.subr.bf16.mxu0 0
    %3216 = vmatpush2.bf16.msra.mxu0 0
    %3217 = vmatprep.subr.bf16.mxu0 0
    %3218 = vmatpush2.bf16.msra.mxu0 0
    %3219 = vmatprep.subr.bf16.mxu0 0
    %3220 = vmatpush2.bf16.msra.mxu0 0
    %3221 = vmatprep.subr.bf16.mxu0 0
    %3222 = vmatpush2.bf16.msra.mxu0 0
    %3223 = vmatprep.subr.bf16.mxu0 0
    %3224 = vmatpush2.bf16.msra.mxu0 0
    %3225 = vmatprep.subr.bf16.mxu0 0
    %3226 = vmatpush2.bf16.msra.mxu0 0
    %3227 = vmatprep.subr.bf16.mxu0 0
    %3228 = vmatpush2.bf16.msra.mxu0 0
    %3229 = vmatprep.mubr.bf16.mxu0 0
    %3230 = vmatmul.mubr.bf16.gmra.mxu0 %v3195
    %v3231 = vpop.f32.mrf.mxu0
    %v3232 = vadd.f32 0.0, %v3231
    %v3233 = vpop.f32.mrf.mxu0
    %v3234 = vadd.f32 0.0, %v3233
    %v3235 = vpop.f32.mrf.mxu0
    %v3236 = vadd.f32 0.0, %v3235
    %v3237 = vpop.f32.mrf.mxu0
    %v3238 = vadd.f32 0.0, %v3237
    %3239 = vdwg.mxu0
    %v3240 = vmul.f32 %v3232, 0.5
    %v3241 = vmul.f32 %v3234, 0.5
    %v3242 = vmul.f32 %v3236, 0.5
    %v3243 = vmul.f32 %v3238, 0.5
    %v3244 = vtanh.pop %v3240
    %v3245 = vtanh.pop %v3241
    %v3246 = vtanh.pop %v3242
    %v3247 = vtanh.pop %v3243
    %v3248 = vmul.f32 %v3244, 0.5
    %v3249 = vmul.f32 %v3245, 0.5
    %v3250 = vmul.f32 %v3246, 0.5
    %v3251 = vmul.f32 %v3247, 0.5
    %v3252 = vadd.f32 %v3248, 0.5
    %v3253 = vadd.f32 %v3249, 0.5
    %v3254 = vadd.f32 %v3250, 0.5
    %v3255 = vadd.f32 %v3251, 0.5
    %v3256 = vtanh.pop %v3234
    %v3257 = vtanh.pop %v3238
    %v3258 = vmul.f32 %v3252, %v3152
    %v3259 = vmul.f32 %v3254, %v3153
    %3262 = vrot.lane.b32.xlu0 %v3256, 64
    %v3263 = vpop.permute.xlu0 %3262
    %3264 = vrot.lane.b32.xlu0 %v3257, 64
    %v3265 = vpop.permute.xlu0 %3264
    %v3268 = vmul.f32 %v3252, %v3263
    %v3269 = vmul.f32 %v3254, %v3265
    %3272 = vrot.lane.b32.xlu0 %v3268, 64
    %v3273 = vpop.permute.xlu0 %3272
    %3274 = vrot.lane.b32.xlu0 %v3269, 64
    %v3275 = vpop.permute.xlu0 %3274
    %v3278 = vadd.f32 %v3258, %v3273
    %v3279 = vadd.f32 %v3259, %v3275
    %v3280 = vtanh.pop %v3278
    %v3281 = vtanh.pop %v3279
    %3284 = vrot.lane.b32.xlu0 %v3280, 64
    %v3285 = vpop.permute.xlu0 %3284
    %3286 = vrot.lane.b32.xlu0 %v3281, 64
    %v3287 = vpop.permute.xlu0 %3286
    %v3290 = vmul.f32 %v3253, %v3285
    %v3291 = vmul.f32 %v3255, %v3287
    %v3292 = vpack.c.bf16 %v3291, %v3290
    %v3294 = vunpack.c.l.b16 %v3292
    %v3295 = vunpack.c.h.b16 %v3292
    %v3296 = vpack.c.b16 %v3294, %v3294
    %v3297 = vpack.c.b16 %v3295, %v3295
    %3300 = vst.msk [vmem:[#allocation2] sm:$0xf] %vm69, %v3296
    %3301 = vst.msk [vmem:[#allocation2 + $0x4] sm:$0xf] %vm69, %v3297
    %s3302 = scalar_lea.vmem [#allocation3], 200
    %v3303 = vld [vmem:[%s3302] sm:$0xf]
    %v3304 = vld [vmem:[%s3302 + $0x4] sm:$0xf]
    %3307 = vrot.lane.b32.xlu0 %v3303, 64
    %v3308 = vpop.permute.xlu0 %3307
    %3309 = vrot.lane.b32.xlu0 %v3304, 64
    %v3310 = vpop.permute.xlu0 %3309
    %3313 = vst.msk [vmem:[#allocation2] sm:$0xf] %vm82, %v3308
    %3314 = vst.msk [vmem:[#allocation2 + $0x4] sm:$0xf] %vm82, %v3310
    %v3315 = vld [vmem:[#allocation2] sm:$0xf]
    %v3316 = vld [vmem:[#allocation2 + $0x4] sm:$0xf]
    %v3319 = vunpack.c.l.b16 %v3315
    %v3320 = vunpack.c.l.b16 %v3316
    %v3321 = vpack.c.b16 %v3320, %v3319
    %3323 = vmatprep.subr.bf16.mxu0 %v156
    %3324 = vmatpush1.bf16.msra.mxu0 %v155
    %3325 = vmatprep.subr.bf16.mxu0 %v154
    %3326 = vmatpush1.bf16.msra.mxu0 %v153
    %3327 = vmatprep.subr.bf16.mxu0 %v152
    %3328 = vmatpush1.bf16.msra.mxu0 %v151
    %3329 = vmatprep.subr.bf16.mxu0 %v150
    %3330 = vmatpush1.bf16.msra.mxu0 %v149
    %3331 = vmatprep.subr.bf16.mxu0 %v148
    %3332 = vmatpush1.bf16.msra.mxu0 %v147
    %3333 = vmatprep.subr.bf16.mxu0 %v146
    %3334 = vmatpush1.bf16.msra.mxu0 %v145
    %3335 = vmatprep.subr.bf16.mxu0 %v144
    %3336 = vmatpush1.bf16.msra.mxu0 %v143
    %3337 = vmatprep.subr.bf16.mxu0 %v142
    %3338 = vmatpush1.bf16.msra.mxu0 %v141
    %3339 = vmatprep.subr.bf16.mxu0 0
    %3340 = vmatpush2.bf16.msra.mxu0 0
    %3341 = vmatprep.subr.bf16.mxu0 0
    %3342 = vmatpush2.bf16.msra.mxu0 0
    %3343 = vmatprep.subr.bf16.mxu0 0
    %3344 = vmatpush2.bf16.msra.mxu0 0
    %3345 = vmatprep.subr.bf16.mxu0 0
    %3346 = vmatpush2.bf16.msra.mxu0 0
    %3347 = vmatprep.subr.bf16.mxu0 0
    %3348 = vmatpush2.bf16.msra.mxu0 0
    %3349 = vmatprep.subr.bf16.mxu0 0
    %3350 = vmatpush2.bf16.msra.mxu0 0
    %3351 = vmatprep.subr.bf16.mxu0 0
    %3352 = vmatpush2.bf16.msra.mxu0 0
    %3353 = vmatprep.subr.bf16.mxu0 0
    %3354 = vmatpush2.bf16.msra.mxu0 0
    %3355 = vmatprep.mubr.bf16.mxu0 0
    %3356 = vmatmul.mubr.bf16.gmra.mxu0 %v3321
    %v3357 = vpop.f32.mrf.mxu0
    %v3358 = vadd.f32 0.0, %v3357
    %v3359 = vpop.f32.mrf.mxu0
    %v3360 = vadd.f32 0.0, %v3359
    %v3361 = vpop.f32.mrf.mxu0
    %v3362 = vadd.f32 0.0, %v3361
    %v3363 = vpop.f32.mrf.mxu0
    %v3364 = vadd.f32 0.0, %v3363
    %3365 = vdwg.mxu0
    %v3366 = vmul.f32 %v3358, 0.5
    %v3367 = vmul.f32 %v3360, 0.5
    %v3368 = vmul.f32 %v3362, 0.5
    %v3369 = vmul.f32 %v3364, 0.5
    %v3370 = vtanh.pop %v3366
    %v3371 = vtanh.pop %v3367
    %v3372 = vtanh.pop %v3368
    %v3373 = vtanh.pop %v3369
    %v3374 = vmul.f32 %v3370, 0.5
    %v3375 = vmul.f32 %v3371, 0.5
    %v3376 = vmul.f32 %v3372, 0.5
    %v3377 = vmul.f32 %v3373, 0.5
    %v3378 = vadd.f32 %v3374, 0.5
    %v3379 = vadd.f32 %v3375, 0.5
    %v3380 = vadd.f32 %v3376, 0.5
    %v3381 = vadd.f32 %v3377, 0.5
    %v3382 = vtanh.pop %v3360
    %v3383 = vtanh.pop %v3364
    %v3384 = vmul.f32 %v3378, %v3278
    %v3385 = vmul.f32 %v3380, %v3279
    %3388 = vrot.lane.b32.xlu0 %v3382, 64
    %v3389 = vpop.permute.xlu0 %3388
    %3390 = vrot.lane.b32.xlu0 %v3383, 64
    %v3391 = vpop.permute.xlu0 %3390
    %v3394 = vmul.f32 %v3378, %v3389
    %v3395 = vmul.f32 %v3380, %v3391
    %3398 = vrot.lane.b32.xlu0 %v3394, 64
    %v3399 = vpop.permute.xlu0 %3398
    %3400 = vrot.lane.b32.xlu0 %v3395, 64
    %v3401 = vpop.permute.xlu0 %3400
    %v3404 = vadd.f32 %v3384, %v3399
    %v3405 = vadd.f32 %v3385, %v3401
    %v3406 = vtanh.pop %v3404
    %v3407 = vtanh.pop %v3405
    %3410 = vrot.lane.b32.xlu0 %v3406, 64
    %v3411 = vpop.permute.xlu0 %3410
    %3412 = vrot.lane.b32.xlu0 %v3407, 64
    %v3413 = vpop.permute.xlu0 %3412
    %v3416 = vmul.f32 %v3379, %v3411
    %v3417 = vmul.f32 %v3381, %v3413
    %v3418 = vpack.c.bf16 %v3417, %v3416
    %v3420 = vunpack.c.l.b16 %v3418
    %v3421 = vunpack.c.h.b16 %v3418
    %v3422 = vpack.c.b16 %v3420, %v3420
    %v3423 = vpack.c.b16 %v3421, %v3421
    %3426 = vst.msk [vmem:[#allocation2] sm:$0xf] %vm69, %v3422
    %3427 = vst.msk [vmem:[#allocation2 + $0x4] sm:$0xf] %vm69, %v3423
    %s3428 = scalar_lea.vmem [#allocation3], 208
    %v3429 = vld [vmem:[%s3428] sm:$0xf]
    %v3430 = vld [vmem:[%s3428 + $0x4] sm:$0xf]
    %3433 = vrot.lane.b32.xlu0 %v3429, 64
    %v3434 = vpop.permute.xlu0 %3433
    %3435 = vrot.lane.b32.xlu0 %v3430, 64
    %v3436 = vpop.permute.xlu0 %3435
    %3439 = vst.msk [vmem:[#allocation2] sm:$0xf] %vm82, %v3434
    %3440 = vst.msk [vmem:[#allocation2 + $0x4] sm:$0xf] %vm82, %v3436
    %v3441 = vld [vmem:[#allocation2] sm:$0xf]
    %v3442 = vld [vmem:[#allocation2 + $0x4] sm:$0xf]
    %v3445 = vunpack.c.l.b16 %v3441
    %v3446 = vunpack.c.l.b16 %v3442
    %v3447 = vpack.c.b16 %v3446, %v3445
    %3449 = vmatprep.subr.bf16.mxu0 %v156
    %3450 = vmatpush1.bf16.msra.mxu0 %v155
    %3451 = vmatprep.subr.bf16.mxu0 %v154
    %3452 = vmatpush1.bf16.msra.mxu0 %v153
    %3453 = vmatprep.subr.bf16.mxu0 %v152
    %3454 = vmatpush1.bf16.msra.mxu0 %v151
    %3455 = vmatprep.subr.bf16.mxu0 %v150
    %3456 = vmatpush1.bf16.msra.mxu0 %v149
    %3457 = vmatprep.subr.bf16.mxu0 %v148
    %3458 = vmatpush1.bf16.msra.mxu0 %v147
    %3459 = vmatprep.subr.bf16.mxu0 %v146
    %3460 = vmatpush1.bf16.msra.mxu0 %v145
    %3461 = vmatprep.subr.bf16.mxu0 %v144
    %3462 = vmatpush1.bf16.msra.mxu0 %v143
    %3463 = vmatprep.subr.bf16.mxu0 %v142
    %3464 = vmatpush1.bf16.msra.mxu0 %v141
    %3465 = vmatprep.subr.bf16.mxu0 0
    %3466 = vmatpush2.bf16.msra.mxu0 0
    %3467 = vmatprep.subr.bf16.mxu0 0
    %3468 = vmatpush2.bf16.msra.mxu0 0
    %3469 = vmatprep.subr.bf16.mxu0 0
    %3470 = vmatpush2.bf16.msra.mxu0 0
    %3471 = vmatprep.subr.bf16.mxu0 0
    %3472 = vmatpush2.bf16.msra.mxu0 0
    %3473 = vmatprep.subr.bf16.mxu0 0
    %3474 = vmatpush2.bf16.msra.mxu0 0
    %3475 = vmatprep.subr.bf16.mxu0 0
    %3476 = vmatpush2.bf16.msra.mxu0 0
    %3477 = vmatprep.subr.bf16.mxu0 0
    %3478 = vmatpush2.bf16.msra.mxu0 0
    %3479 = vmatprep.subr.bf16.mxu0 0
    %3480 = vmatpush2.bf16.msra.mxu0 0
    %3481 = vmatprep.mubr.bf16.mxu0 0
    %3482 = vmatmul.mubr.bf16.gmra.mxu0 %v3447
    %v3483 = vpop.f32.mrf.mxu0
    %v3484 = vadd.f32 0.0, %v3483
    %v3485 = vpop.f32.mrf.mxu0
    %v3486 = vadd.f32 0.0, %v3485
    %v3487 = vpop.f32.mrf.mxu0
    %v3488 = vadd.f32 0.0, %v3487
    %v3489 = vpop.f32.mrf.mxu0
    %v3490 = vadd.f32 0.0, %v3489
    %3491 = vdwg.mxu0
    %v3492 = vmul.f32 %v3484, 0.5
    %v3493 = vmul.f32 %v3486, 0.5
    %v3494 = vmul.f32 %v3488, 0.5
    %v3495 = vmul.f32 %v3490, 0.5
    %v3496 = vtanh.pop %v3492
    %v3497 = vtanh.pop %v3493
    %v3498 = vtanh.pop %v3494
    %v3499 = vtanh.pop %v3495
    %v3500 = vmul.f32 %v3496, 0.5
    %v3501 = vmul.f32 %v3497, 0.5
    %v3502 = vmul.f32 %v3498, 0.5
    %v3503 = vmul.f32 %v3499, 0.5
    %v3504 = vadd.f32 %v3500, 0.5
    %v3505 = vadd.f32 %v3501, 0.5
    %v3506 = vadd.f32 %v3502, 0.5
    %v3507 = vadd.f32 %v3503, 0.5
    %v3508 = vtanh.pop %v3486
    %v3509 = vtanh.pop %v3490
    %v3510 = vmul.f32 %v3504, %v3404
    %v3511 = vmul.f32 %v3506, %v3405
    %3514 = vrot.lane.b32.xlu0 %v3508, 64
    %v3515 = vpop.permute.xlu0 %3514
    %3516 = vrot.lane.b32.xlu0 %v3509, 64
    %v3517 = vpop.permute.xlu0 %3516
    %v3520 = vmul.f32 %v3504, %v3515
    %v3521 = vmul.f32 %v3506, %v3517
    %3524 = vrot.lane.b32.xlu0 %v3520, 64
    %v3525 = vpop.permute.xlu0 %3524
    %3526 = vrot.lane.b32.xlu0 %v3521, 64
    %v3527 = vpop.permute.xlu0 %3526
    %v3530 = vadd.f32 %v3510, %v3525
    %v3531 = vadd.f32 %v3511, %v3527
    %v3532 = vtanh.pop %v3530
    %v3533 = vtanh.pop %v3531
    %3536 = vrot.lane.b32.xlu0 %v3532, 64
    %v3537 = vpop.permute.xlu0 %3536
    %3538 = vrot.lane.b32.xlu0 %v3533, 64
    %v3539 = vpop.permute.xlu0 %3538
    %v3542 = vmul.f32 %v3505, %v3537
    %v3543 = vmul.f32 %v3507, %v3539
    %v3544 = vpack.c.bf16 %v3543, %v3542
    %v3546 = vunpack.c.l.b16 %v3544
    %v3547 = vunpack.c.h.b16 %v3544
    %v3548 = vpack.c.b16 %v3546, %v3546
    %v3549 = vpack.c.b16 %v3547, %v3547
    %3552 = vst.msk [vmem:[#allocation2] sm:$0xf] %vm69, %v3548
    %3553 = vst.msk [vmem:[#allocation2 + $0x4] sm:$0xf] %vm69, %v3549
    %s3554 = scalar_lea.vmem [#allocation3], 216
    %v3555 = vld [vmem:[%s3554] sm:$0xf]
    %v3556 = vld [vmem:[%s3554 + $0x4] sm:$0xf]
    %3559 = vrot.lane.b32.xlu0 %v3555, 64
    %v3560 = vpop.permute.xlu0 %3559
    %3561 = vrot.lane.b32.xlu0 %v3556, 64
    %v3562 = vpop.permute.xlu0 %3561
    %3565 = vst.msk [vmem:[#allocation2] sm:$0xf] %vm82, %v3560
    %3566 = vst.msk [vmem:[#allocation2 + $0x4] sm:$0xf] %vm82, %v3562
    %v3567 = vld [vmem:[#allocation2] sm:$0xf]
    %v3568 = vld [vmem:[#allocation2 + $0x4] sm:$0xf]
    %v3571 = vunpack.c.l.b16 %v3567
    %v3572 = vunpack.c.l.b16 %v3568
    %v3573 = vpack.c.b16 %v3572, %v3571
    %3575 = vmatprep.subr.bf16.mxu0 %v156
    %3576 = vmatpush1.bf16.msra.mxu0 %v155
    %3577 = vmatprep.subr.bf16.mxu0 %v154
    %3578 = vmatpush1.bf16.msra.mxu0 %v153
    %3579 = vmatprep.subr.bf16.mxu0 %v152
    %3580 = vmatpush1.bf16.msra.mxu0 %v151
    %3581 = vmatprep.subr.bf16.mxu0 %v150
    %3582 = vmatpush1.bf16.msra.mxu0 %v149
    %3583 = vmatprep.subr.bf16.mxu0 %v148
    %3584 = vmatpush1.bf16.msra.mxu0 %v147
    %3585 = vmatprep.subr.bf16.mxu0 %v146
    %3586 = vmatpush1.bf16.msra.mxu0 %v145
    %3587 = vmatprep.subr.bf16.mxu0 %v144
    %3588 = vmatpush1.bf16.msra.mxu0 %v143
    %3589 = vmatprep.subr.bf16.mxu0 %v142
    %3590 = vmatpush1.bf16.msra.mxu0 %v141
    %3591 = vmatprep.subr.bf16.mxu0 0
    %3592 = vmatpush2.bf16.msra.mxu0 0
    %3593 = vmatprep.subr.bf16.mxu0 0
    %3594 = vmatpush2.bf16.msra.mxu0 0
    %3595 = vmatprep.subr.bf16.mxu0 0
    %3596 = vmatpush2.bf16.msra.mxu0 0
    %3597 = vmatprep.subr.bf16.mxu0 0
    %3598 = vmatpush2.bf16.msra.mxu0 0
    %3599 = vmatprep.subr.bf16.mxu0 0
    %3600 = vmatpush2.bf16.msra.mxu0 0
    %3601 = vmatprep.subr.bf16.mxu0 0
    %3602 = vmatpush2.bf16.msra.mxu0 0
    %3603 = vmatprep.subr.bf16.mxu0 0
    %3604 = vmatpush2.bf16.msra.mxu0 0
    %3605 = vmatprep.subr.bf16.mxu0 0
    %3606 = vmatpush2.bf16.msra.mxu0 0
    %3607 = vmatprep.mubr.bf16.mxu0 0
    %3608 = vmatmul.mubr.bf16.gmra.mxu0 %v3573
    %v3609 = vpop.f32.mrf.mxu0
    %v3610 = vadd.f32 0.0, %v3609
    %v3611 = vpop.f32.mrf.mxu0
    %v3612 = vadd.f32 0.0, %v3611
    %v3613 = vpop.f32.mrf.mxu0
    %v3614 = vadd.f32 0.0, %v3613
    %v3615 = vpop.f32.mrf.mxu0
    %v3616 = vadd.f32 0.0, %v3615
    %3617 = vdwg.mxu0
    %v3618 = vmul.f32 %v3610, 0.5
    %v3619 = vmul.f32 %v3612, 0.5
    %v3620 = vmul.f32 %v3614, 0.5
    %v3621 = vmul.f32 %v3616, 0.5
    %v3622 = vtanh.pop %v3618
    %v3623 = vtanh.pop %v3619
    %v3624 = vtanh.pop %v3620
    %v3625 = vtanh.pop %v3621
    %v3626 = vmul.f32 %v3622, 0.5
    %v3627 = vmul.f32 %v3623, 0.5
    %v3628 = vmul.f32 %v3624, 0.5
    %v3629 = vmul.f32 %v3625, 0.5
    %v3630 = vadd.f32 %v3626, 0.5
    %v3631 = vadd.f32 %v3627, 0.5
    %v3632 = vadd.f32 %v3628, 0.5
    %v3633 = vadd.f32 %v3629, 0.5
    %v3634 = vtanh.pop %v3612
    %v3635 = vtanh.pop %v3616
    %v3636 = vmul.f32 %v3630, %v3530
    %v3637 = vmul.f32 %v3632, %v3531
    %3640 = vrot.lane.b32.xlu0 %v3634, 64
    %v3641 = vpop.permute.xlu0 %3640
    %3642 = vrot.lane.b32.xlu0 %v3635, 64
    %v3643 = vpop.permute.xlu0 %3642
    %v3646 = vmul.f32 %v3630, %v3641
    %v3647 = vmul.f32 %v3632, %v3643
    %3650 = vrot.lane.b32.xlu0 %v3646, 64
    %v3651 = vpop.permute.xlu0 %3650
    %3652 = vrot.lane.b32.xlu0 %v3647, 64
    %v3653 = vpop.permute.xlu0 %3652
    %v3656 = vadd.f32 %v3636, %v3651
    %v3657 = vadd.f32 %v3637, %v3653
    %v3658 = vtanh.pop %v3656
    %v3659 = vtanh.pop %v3657
    %3662 = vrot.lane.b32.xlu0 %v3658, 64
    %v3663 = vpop.permute.xlu0 %3662
    %3664 = vrot.lane.b32.xlu0 %v3659, 64
    %v3665 = vpop.permute.xlu0 %3664
    %v3668 = vmul.f32 %v3631, %v3663
    %v3669 = vmul.f32 %v3633, %v3665
    %v3670 = vpack.c.bf16 %v3669, %v3668
    %v3672 = vunpack.c.l.b16 %v3670
    %v3673 = vunpack.c.h.b16 %v3670
    %v3674 = vpack.c.b16 %v3672, %v3672
    %v3675 = vpack.c.b16 %v3673, %v3673
    %3678 = vst.msk [vmem:[#allocation2] sm:$0xf] %vm69, %v3674
    %3679 = vst.msk [vmem:[#allocation2 + $0x4] sm:$0xf] %vm69, %v3675
    %v3680 = vld [vmem:[#allocation2] sm:$0xf]
    %v3681 = vld [vmem:[#allocation2 + $0x4] sm:$0xf]
    %v3682 = vld [vmem:[%s2] sm:$0xf]
    %v3683 = vld [vmem:[%s2 + $0x4] sm:$0xf]
    %v3684 = vld [vmem:[%s2 + $0x8] sm:$0xf]
    %v3685 = vld [vmem:[%s2 + $0xc] sm:$0xf]
    %v3686 = vld [vmem:[%s2 + $0x10] sm:$0xf]
    %v3687 = vld [vmem:[%s2 + $0x14] sm:$0xf]
    %v3688 = vld [vmem:[%s2 + $0x18] sm:$0xf]
    %v3689 = vld [vmem:[%s2 + $0x1c] sm:$0xf]
    %v3690 = vld [vmem:[%s3] sm:$0x1]
    %v3692 = vlaneseq
    %v3693 = vshrl.u32 %v3692, 7
    %v3694 = vsub.s32 0, %v3693
    %v3695 = vrot.slane %v3690, %v3694
    %v3699 = vunpack.c.l.b16 %v3680
    %v3700 = vunpack.c.l.b16 %v3681
    %v3701 = vpack.c.b16 %v3700, %v3699
    %v3710 = vunpack.c.l.b16 %v3682
    %v3711 = vunpack.c.l.b16 %v3683
    %v3712 = vunpack.c.l.b16 %v3684
    %v3713 = vunpack.c.l.b16 %v3685
    %v3714 = vunpack.c.l.b16 %v3686
    %v3715 = vunpack.c.l.b16 %v3687
    %v3716 = vunpack.c.l.b16 %v3688
    %v3717 = vunpack.c.l.b16 %v3689
    %v3718 = vpack.c.b16 %v3711, %v3710
    %v3719 = vpack.c.b16 %v3713, %v3712
    %v3720 = vpack.c.b16 %v3715, %v3714
    %v3721 = vpack.c.b16 %v3717, %v3716
    %vm3726 = vcmask 523264
    %v3728 = vsel %vm3726, %v3701, 0
    %3730 = vmatprep.subr.bf16.mxu0 0
    %3731 = vmatpush1.bf16.msra.mxu0 0
    %3732 = vmatprep.subr.bf16.mxu0 0
    %3733 = vmatpush1.bf16.msra.mxu0 0
    %3734 = vmatprep.subr.bf16.mxu0 0
    %3735 = vmatpush1.bf16.msra.mxu0 0
    %3736 = vmatprep.subr.bf16.mxu0 0
    %3737 = vmatpush1.bf16.msra.mxu0 0
    %3738 = vmatprep.subr.bf16.mxu0 0
    %3739 = vmatpush1.bf16.msra.mxu0 %v3721
    %3740 = vmatprep.subr.bf16.mxu0 0
    %3741 = vmatpush1.bf16.msra.mxu0 %v3720
    %3742 = vmatprep.subr.bf16.mxu0 0
    %3743 = vmatpush1.bf16.msra.mxu0 %v3719
    %3744 = vmatprep.subr.bf16.mxu0 0
    %3745 = vmatpush1.bf16.msra.mxu0 %v3718
    %3746 = vmatprep.subr.bf16.mxu0 0
    %3747 = vmatpush2.bf16.msra.mxu0 0
    %3748 = vmatprep.subr.bf16.mxu0 0
    %3749 = vmatpush2.bf16.msra.mxu0 0
    %3750 = vmatprep.subr.bf16.mxu0 0
    %3751 = vmatpush2.bf16.msra.mxu0 0
    %3752 = vmatprep.subr.bf16.mxu0 0
    %3753 = vmatpush2.bf16.msra.mxu0 0
    %3754 = vmatprep.subr.bf16.mxu0 0
    %3755 = vmatpush2.bf16.msra.mxu0 0
    %3756 = vmatprep.subr.bf16.mxu0 0
    %3757 = vmatpush2.bf16.msra.mxu0 0
    %3758 = vmatprep.subr.bf16.mxu0 0
    %3759 = vmatpush2.bf16.msra.mxu0 0
    %3760 = vmatprep.subr.bf16.mxu0 0
    %3761 = vmatpush2.bf16.msra.mxu0 0
    %3762 = vmatprep.mubr.bf16.mxu0 0
    %3763 = vmatmul.mubr.bf16.gmra.mxu0 %v3728
    %v3764 = vpop.f32.mrf.mxu0
    %v3765 = vadd.f32 %v3695, %v3764
    %v3766 = vpop.f32.mrf.mxu0
    %v3767 = vpop.f32.mrf.mxu0
    %v3768 = vadd.f32 %v3695, %v3767
    %v3769 = vpop.f32.mrf.mxu0
    %3770 = vdwg.mxu0
    %v3771 = vmax.f32 %v3765, 0.0
    %v3772 = vmax.f32 %v3768, 0.0
    %v3773 = vpack.c.bf16 %v3772, %v3771
    %v3774 = vld [vmem:[%s4] sm:$0xf]
    %v3775 = vld [vmem:[%s4 + $0x4] sm:$0xf]
    %v3776 = vld [vmem:[%s4 + $0x8] sm:$0xf]
    %v3777 = vld [vmem:[%s4 + $0xc] sm:$0xf]
    %v3778 = vld [vmem:[%s5] sm:$0x1]
    %v3780 = vlaneseq
    %v3781 = vshrl.u32 %v3780, 7
    %v3782 = vsub.s32 0, %v3781
    %v3783 = vrot.slane %v3778, %v3782
    %v3789 = vunpack.c.l.b16 %v3774
    %v3790 = vunpack.c.l.b16 %v3775
    %v3791 = vunpack.c.l.b16 %v3776
    %v3792 = vunpack.c.l.b16 %v3777
    %v3793 = vpack.c.b16 %v3790, %v3789
    %v3794 = vpack.c.b16 %v3792, %v3791
    %vm3797 = vcmask 261120
    %v3799 = vsel %vm3797, %v3773, 0
    %3801 = vmatprep.subr.bf16.mxu0 0
    %3802 = vmatpush1.bf16.msra.mxu0 0
    %3803 = vmatprep.subr.bf16.mxu0 0
    %3804 = vmatpush1.bf16.msra.mxu0 0
    %3805 = vmatprep.subr.bf16.mxu0 0
    %3806 = vmatpush1.bf16.msra.mxu0 0
    %3807 = vmatprep.subr.bf16.mxu0 0
    %3808 = vmatpush1.bf16.msra.mxu0 0
    %3809 = vmatprep.subr.bf16.mxu0 0
    %3810 = vmatpush1.bf16.msra.mxu0 0
    %3811 = vmatprep.subr.bf16.mxu0 0
    %3812 = vmatpush1.bf16.msra.mxu0 0
    %3813 = vmatprep.subr.bf16.mxu0 0
    %3814 = vmatpush1.bf16.msra.mxu0 %v3794
    %3815 = vmatprep.subr.bf16.mxu0 0
    %3816 = vmatpush1.bf16.msra.mxu0 %v3793
    %3817 = vmatprep.subr.bf16.mxu0 0
    %3818 = vmatpush2.bf16.msra.mxu0 0
    %3819 = vmatprep.subr.bf16.mxu0 0
    %3820 = vmatpush2.bf16.msra.mxu0 0
    %3821 = vmatprep.subr.bf16.mxu0 0
    %3822 = vmatpush2.bf16.msra.mxu0 0
    %3823 = vmatprep.subr.bf16.mxu0 0
    %3824 = vmatpush2.bf16.msra.mxu0 0
    %3825 = vmatprep.subr.bf16.mxu0 0
    %3826 = vmatpush2.bf16.msra.mxu0 0
    %3827 = vmatprep.subr.bf16.mxu0 0
    %3828 = vmatpush2.bf16.msra.mxu0 0
    %3829 = vmatprep.subr.bf16.mxu0 0
    %3830 = vmatpush2.bf16.msra.mxu0 0
    %3831 = vmatprep.subr.bf16.mxu0 0
    %3832 = vmatpush2.bf16.msra.mxu0 0
    %3833 = vmatprep.mubr.bf16.mxu0 0
    %3834 = vmatmul.mubr.bf16.gmra.mxu0 %v3799
    %v3835 = vpop.f32.mrf.mxu0
    %v3836 = vadd.f32 %v3783, %v3835
    %v3837 = vpop.f32.mrf.mxu0
    %v3838 = vpop.f32.mrf.mxu0
    %v3839 = vadd.f32 %v3783, %v3838
    %v3840 = vpop.f32.mrf.mxu0
    %3841 = vdwg.mxu0
    %3842 = vmax.xlane.f32.xlu0 %v3836
    %v3843 = vpop.xlane.xlu0 %3842
    %3844 = vmax.xlane.f32.xlu0 %v3839
    %v3845 = vpop.xlane.xlu0 %3844
    %v3846 = vsub.f32 %v3836, %v3843
    %v3847 = vsub.f32 %v3839, %v3845
    %v3848 = vmul.f32 %v3846, 1.442695
    %v3849 = vpow.pop %v3848
    %v3850 = vmul.f32 %v3847, 1.442695
    %v3851 = vpow.pop %v3850
    %3852 = vadd.xlane.f32.xlu0 %v3849
    %v3853 = vpop.xlane.xlu0 %3852
    %3854 = vadd.xlane.f32.xlu0 %v3851
    %v3855 = vpop.xlane.xlu0 %3854
    %v3856 = vlog2.pop %v3853
    %v3857 = vmul.f32 %v3856, 0.6931472
    %v3858 = vlog2.pop %v3855
    %v3859 = vmul.f32 %v3858, 0.6931472
    %v3860 = vsub.f32 %v3846, %v3857
    %v3861 = vsub.f32 %v3847, %v3859
    %3862 = vst [vmem:[#allocation8] sm:$0xff] %v3860
    %3863 = vst [vmem:[#allocation8 + $0x8] sm:$0xff] %v3861
    // Predicated region
    $region34: #{tpu_custom_call.1} parent=1 // pred_check
      _
    $region35: #{tpu_custom_call.1} parent=1 // pred_check_branch
      %3865 = sbr.rel (0) target = $region37
    $region36: #{tpu_custom_call.1} parent=1 // pred_region
      %s3867 = ssub.s32 256, 256
      %3868 = vsyncadd [#allocation5], %s3867
      %s3869 = sshll.u32 [#allocation8], 4
      %s3870 = int_to_ptr.vmem [resolvable:$true] %s3869
      %3875 = dma.vmem_to_hbm [thread:$0]  %s3870, 256, %s6, [#allocation5], 128, 128, 8
    $region37: #{tpu_custom_call.1} parent=1 // pred_fallthru
      _
    // Predicated region
    $region38: #{tpu_custom_call.1} parent=1 // pred_check
      _
    $region39: #{tpu_custom_call.1} parent=1 // pred_check_branch
      %3877 = sbr.rel (0) target = $region41
    $region40: #{tpu_custom_call.1} parent=1 // pred_region
      %3878 = dma.done [#allocation5], 256
    $region41: #{tpu_custom_call.1} parent=1 // pred_fallthru
      _
    %3879 = vsyncpa [#allocation4], 1
    %3880 = vsyncpa [#allocation7], 1
    %3881 = vsyncpa [#allocation5], 1

</llo_original>
